<compile_context>
chip_gen: v7x
topology: tpu7x:2x2x1
jax: 0.10.0
libtpu: 0.0.40
codegen_flags: <defaults>
</compile_context>

<pallas_src>
import functools

import jax
import jax.numpy as jnp
from jax import lax
from jax.experimental import pallas as pl
from jax.experimental.pallas import tpu as pltpu

# ---------------- config (mirrors GazLSTM.__init__ hyper-parameters) ---------
WORD_EMB_DIM = 32
BIWORD_EMB_DIM = 32
GAZ_EMB_DIM = 32
HIDDEN_DIM = 32                     # HP_hidden_dim -> lstm_hidden
LABEL_ALPHABET_SIZE = 18
TAG_SIZE = LABEL_ALPHABET_SIZE + 2  # hidden2tag out dim / CRF tag space (= 20)
TAG_PAD = 128                       # lane-dense padding for tag scores ('to')
TAG_FROM_PAD = 32                   # sublane padding for the DP 'from' axis
START_TAG = TAG_SIZE - 2
STOP_TAG = TAG_SIZE - 1
USE_BIWORD = True
BILSTM = True
CHAR_FEATURE_DIM = WORD_EMB_DIM + (BIWORD_EMB_DIM if USE_BIWORD else 0)  # 64
LSTM_OUT_DIM = 2 * HIDDEN_DIM if BILSTM else HIDDEN_DIM                   # 64
NEG_INF = -1.0e9

WORD_VOCAB = 50
BIWORD_VOCAB = 60
GAZ_VOCAB = 40


# ============================ Pallas kernels =================================

def _bilstm_crf_kernel(x2_ref, wih_ref, whh_ref, b_ref, w2t_ref, b2t_ref,
                       trans_ref, part_ref, bp_ref, *, seq_len, batch, hidden):
    """Fused BiLSTM + hidden2tag + CRF Viterbi forward DP.

    x2_ref:    (S*B, 2D)       rows ordered (t, b); lanes [x_t | x_{S-1-t}]
    wih_ref:   (2D, 8H)        combined input weights (gate-interleaved fw/bw)
    whh_ref:   (2H, 8H)        block-diagonal recurrent weights
    b_ref:     (1, 8H)         combined biases (b_ih + b_hh per direction)
    w2t_ref:   (2H, 128)       hidden2tag weight (transposed), zero-padded
    b2t_ref:   (1, 128)        hidden2tag bias, zero-padded
    trans_ref: (32, 128)       CRF transitions, padded rows/cols set to -1e9
    part_ref:  (S*B, 128) f32  Viterbi partition history (time-major rows)
    bp_ref:    (S*B, 128) i32  Viterbi back-pointers (row block 0 is unused)
    """
    S, B, H = seq_len, batch, hidden
    TP, TF = TAG_PAD, TAG_FROM_PAD

    # ---- prologue: hoisted, batched input projection (one MXU pass) --------
    gx = jnp.dot(x2_ref[...], wih_ref[...],
                 preferred_element_type=jnp.float32) + b_ref[...]   # (S*B, 8H)
    whh = whh_ref[...]

    # ---- fused fw/bw recurrence: one block-diagonal matmul per step --------
    h = jnp.zeros((B, 2 * H), jnp.float32)   # [h_f | h_b]
    c = jnp.zeros((B, 2 * H), jnp.float32)   # [c_f | c_b]
    h_steps = []
    for t in range(S):
        gates = gx[t * B:(t + 1) * B, :] + jnp.dot(
            h, whh, preferred_element_type=jnp.float32)             # (B, 8H)
        sg = jax.nn.sigmoid(gates)       # whole-vreg EUP passes
        th = jnp.tanh(gates)
        c = sg[:, 2 * H:4 * H] * c + sg[:, 0:2 * H] * th[:, 4 * H:6 * H]
        h = sg[:, 6 * H:8 * H] * jnp.tanh(c)
        h_steps.append(h)                # fw half = time t, bw half = time S-1-t

    # ---- hidden2tag: fw/bw time alignment via lane-select (no concat) ------
    lane = lax.broadcasted_iota(jnp.int32, (B, 2 * H), 1)
    feat = jnp.concatenate(
        [jnp.where(lane < H, h_steps[t], h_steps[S - 1 - t]) for t in range(S)],
        axis=0)                                                       # (S*B, 2H)
    feats = jnp.dot(feat, w2t_ref[...],
                    preferred_element_type=jnp.float32) + b2t_ref[...]  # (S*B,128)

    # ---- CRF Viterbi forward DP (max / argmax over 'from') -----------------
    trans = trans_ref[...]                                            # (TF, TP)
    sub_i = lax.broadcasted_iota(jnp.int32, (TF, TP), 0)
    lane_i = lax.broadcasted_iota(jnp.int32, (TF, TP), 1)
    eye = (sub_i == lane_i).astype(jnp.float32)        # row -> column extractor
    from_f = sub_i.astype(jnp.float32)

    part = feats[0:B, :] + trans[START_TAG:START_TAG + 1, :]          # (B, TP)
    part_ref[0:B, :] = part
    bp_ref[0:B, :] = jnp.zeros((B, TP), jnp.int32)

    for t in range(1, S):
        new_rows, bp_rows = [], []
        for b in range(B):
            # "transpose" the partition row into a column with select+reduce
            col = jnp.sum(eye * part[b:b + 1, :], axis=1, keepdims=True)  # (TF,1)
            cur = col + trans                                             # (TF,TP)
            mx = jnp.max(cur, axis=0, keepdims=True)                      # (1,TP)
            bpb = jnp.min(jnp.where(cur == mx, from_f, 1e9),
                          axis=0, keepdims=True).astype(jnp.int32)        # (1,TP)
            new_rows.append(mx + feats[t * B + b:t * B + b + 1, :])
            bp_rows.append(bpb)
        part = jnp.concatenate(new_rows, axis=0)                          # (B,TP)
        part_ref[t * B:(t + 1) * B, :] = part
        bp_ref[t * B:(t + 1) * B, :] = jnp.concatenate(bp_rows, axis=0)


def bilstm_crf_scores(x2, prep, *, seq_len, batch):
    """x2: (S*B, 2D) time-major -> (partition_hist, back_pointers), each (S*B,128)."""
    SB = seq_len * batch
    H = HIDDEN_DIM
    D2 = 2 * CHAR_FEATURE_DIM

    kernel = functools.partial(_bilstm_crf_kernel,
                               seq_len=seq_len, batch=batch, hidden=H)
    return pl.pallas_call(
        kernel,
        out_shape=(jax.ShapeDtypeStruct((SB, TAG_PAD), jnp.float32),
                   jax.ShapeDtypeStruct((SB, TAG_PAD), jnp.int32)),
        grid=(1,),
        in_specs=[pl.BlockSpec((SB, D2), lambda i: (0, 0)),
                  pl.BlockSpec((D2, 8 * H), lambda i: (0, 0)),
                  pl.BlockSpec((2 * H, 8 * H), lambda i: (0, 0)),
                  pl.BlockSpec((1, 8 * H), lambda i: (0, 0)),
                  pl.BlockSpec((2 * H, TAG_PAD), lambda i: (0, 0)),
                  pl.BlockSpec((1, TAG_PAD), lambda i: (0, 0)),
                  pl.BlockSpec((TAG_FROM_PAD, TAG_PAD), lambda i: (0, 0))],
        out_specs=(pl.BlockSpec((SB, TAG_PAD), lambda i: (0, 0)),
                   pl.BlockSpec((SB, TAG_PAD), lambda i: (0, 0))),
        compiler_params=pltpu.CompilerParams(
            dimension_semantics=("arbitrary",)),
    )(x2, prep["w_ih_comb"], prep["w_hh_comb"], prep["b_comb"],
      prep["w2t_comb"], prep["b2t_pad"], prep["trans_pad"])


def _gaz_sum_kernel(x_ref, o_ref, *, num_slots):
    """Sum the G pre-weighted gaz slots: (G, M, 128) -> (M, 128), lane-dense."""
    acc = x_ref[0]
    for g in range(1, num_slots):
        acc = acc + x_ref[g]
    o_ref[...] = acc


def gaz_aggregate(gaz_embeds, gaz_mask, gaz_count):
    """gaz_embeds: (B,S,4,G,E); gaz_mask/gaz_count: (B,S,4,G) -> (B,S,4E)."""
    B, S, L, G, E = gaz_embeds.shape
    keep = 1.0 - gaz_mask.astype(jnp.float32)        # 1.0 where NOT masked
    cnt = gaz_count.astype(jnp.float32)
    csum = jnp.sum(cnt, axis=(2, 3), keepdims=True)  # sum over dims 3 then 2
    # Guard against all-zero counts (the torch reference would emit NaN here;
    # inputs in practice always have counts >= 1, where this is identical).
    csum = jnp.where(csum == 0.0, 1.0, csum)
    wcoef = keep * cnt * 4.0 / csum                                  # (B,S,L,G)

    # Mask/count weighting fuses in XLA with the gather; the kernel only sums
    # the G slots of the (G, B*S, L*E=128) lane-dense slab (no 256KB selection
    # matrix, no E-broadcast weight slab in HBM).
    weighted = gaz_embeds * wcoef[..., None]                         # (B,S,L,G,E)
    wt = jnp.transpose(weighted, (3, 0, 1, 2, 4)).reshape(G, B * S, L * E)

    out = pl.pallas_call(
        functools.partial(_gaz_sum_kernel, num_slots=G),
        out_shape=jax.ShapeDtypeStruct((B * S, L * E), jnp.float32),
        grid=(1,),
        in_specs=[pl.BlockSpec((G, B * S, L * E), lambda i: (0, 0, 0))],
        out_specs=pl.BlockSpec((B * S, L * E), lambda i: (0, 0)),
    )(wt)
    return out.reshape(B, S, L * E)                                  # (B,S,4E)


# ============================ CRF viterbi back-trace (glue) ==================
# TODO(synk): the back-pointer trace is a chain of tiny data-dependent gathers
# over a (S,B,20) table; it stays in plain JAX (the max/argmax DP itself now
# runs inside the Pallas kernel).

def crf_viterbi_backtrace(part_hist, bps, mask, transitions):
    """part_hist/bps: (S, B, T) from the kernel; mask: (B, S) -> (B, S) int32."""
    S, B, T = part_hist.shape
    mask_i = mask.astype(jnp.int32)
    lengths = jnp.sum(mask_i, axis=1)                                 # (B,)
    batch_idx = jnp.arange(B)
    last_pos = lengths - 1

    last_partition = part_hist[last_pos, batch_idx, :]                # (B,T)
    last_values = last_partition[:, :, None] + transitions[None, :, :]
    last_bp = jnp.argmax(last_values, axis=1).astype(jnp.int32)       # (B,T)
    pointer = last_bp[:, STOP_TAG]                                    # (B,)

    bps_masked = bps[1:] * jnp.transpose(mask_i)[1:, :, None]         # (S-1,B,T)
    back_points = jnp.concatenate(
        [bps_masked, jnp.zeros((1, B, T), jnp.int32)], axis=0)        # (S,B,T)
    back_points = back_points.at[last_pos, batch_idx, :].set(
        jnp.broadcast_to(pointer[:, None], (B, T)))

    def back_step(ptr, t):
        new_ptr = back_points[t, batch_idx, ptr]
        return new_ptr, new_ptr

    _, dec_rev = lax.scan(back_step, pointer, jnp.arange(S - 2, -1, -1))
    decode = jnp.concatenate([jnp.flip(dec_rev, axis=0), pointer[None]], axis=0)
    return jnp.transpose(decode)                                      # (B, S)


# ============================ parameters =====================================

def init_params(key):
    ks = jax.random.split(key, 14)
    u = lambda k, shape, s=0.1: jax.random.uniform(k, shape, jnp.float32, -s, s)
    params = {
        "word_emb": u(ks[0], (WORD_VOCAB, WORD_EMB_DIM), 0.5),
        "biword_emb": u(ks[1], (BIWORD_VOCAB, BIWORD_EMB_DIM), 0.5),
        "gaz_emb": u(ks[2], (GAZ_VOCAB, GAZ_EMB_DIM), 0.5),
        # nn.LSTM(input=64, hidden=32, num_layers=1, bidirectional=True)
        "lstm_fw": {
            "w_ih": u(ks[3], (4 * HIDDEN_DIM, CHAR_FEATURE_DIM)),
            "w_hh": u(ks[4], (4 * HIDDEN_DIM, HIDDEN_DIM)),
            "b_ih": u(ks[5], (4 * HIDDEN_DIM,)),
            "b_hh": u(ks[6], (4 * HIDDEN_DIM,)),
        },
        "lstm_bw": {
            "w_ih": u(ks[7], (4 * HIDDEN_DIM, CHAR_FEATURE_DIM)),
            "w_hh": u(ks[8], (4 * HIDDEN_DIM, HIDDEN_DIM)),
            "b_ih": u(ks[9], (4 * HIDDEN_DIM,)),
            "b_hh": u(ks[10], (4 * HIDDEN_DIM,)),
        },
        # hidden2tag = nn.Linear(2*hidden, label_alphabet_size + 2)
        "h2t_w": u(ks[11], (TAG_SIZE, LSTM_OUT_DIM)),
        "h2t_b": u(ks[12], (TAG_SIZE,)),
    }
    # CRF transitions[i, j] = score(from i -> to j); transitions INTO start and
    # OUT OF stop are forbidden (as in the reference CRF init).
    trans = jax.random.uniform(ks[13], (TAG_SIZE, TAG_SIZE), jnp.float32,
                               -0.1, 0.1)
    trans = trans.at[:, START_TAG].set(-10000.0)
    trans = trans.at[STOP_TAG, :].set(-10000.0)
    params["transitions"] = trans
    return params


def prepare_params(params):
    """One-time constant weight prep (hoisted out of the per-call wrapper)."""
    H = HIDDEN_DIM
    D = CHAR_FEATURE_DIM
    fw, bw = params["lstm_fw"], params["lstm_bw"]

    # Combined gate layout (8H lanes): [i_f i_b | f_f f_b | g_f g_b | o_f o_b].
    w_ih_comb = jnp.zeros((2 * D, 8 * H), jnp.float32)   # rows: [x_t | x_{S-1-t}]
    w_hh_comb = jnp.zeros((2 * H, 8 * H), jnp.float32)   # rows: [h_f | h_b]
    b_comb = jnp.zeros((1, 8 * H), jnp.float32)
    for g in range(4):                                    # PyTorch order i,f,g,o
        rs = slice(g * H, (g + 1) * H)
        cf = slice(2 * g * H, 2 * g * H + H)
        cb = slice(2 * g * H + H, 2 * (g + 1) * H)
        w_ih_comb = w_ih_comb.at[0:D, cf].set(jnp.transpose(fw["w_ih"][rs, :]))
        w_ih_comb = w_ih_comb.at[D:2 * D, cb].set(jnp.transpose(bw["w_ih"][rs, :]))
        w_hh_comb = w_hh_comb.at[0:H, cf].set(jnp.transpose(fw["w_hh"][rs, :]))
        w_hh_comb = w_hh_comb.at[H:2 * H, cb].set(jnp.transpose(bw["w_hh"][rs, :]))
        b_comb = b_comb.at[0, cf].set(fw["b_ih"][rs] + fw["b_hh"][rs])
        b_comb = b_comb.at[0, cb].set(bw["b_ih"][rs] + bw["b_hh"][rs])

    w2t_comb = jnp.zeros((2 * H, TAG_PAD), jnp.float32).at[:, :TAG_SIZE].set(
        jnp.transpose(params["h2t_w"]))
    b2t_pad = jnp.zeros((1, TAG_PAD), jnp.float32).at[0, :TAG_SIZE].set(
        params["h2t_b"])
    trans_pad = jnp.full((TAG_FROM_PAD, TAG_PAD), NEG_INF, jnp.float32)
    trans_pad = trans_pad.at[:TAG_SIZE, :TAG_SIZE].set(params["transitions"])

    return {
        "word_emb": params["word_emb"],
        "biword_emb": params["biword_emb"],
        "gaz_emb": params["gaz_emb"],
        "transitions": params["transitions"],
        "w_ih_comb": w_ih_comb,
        "w_hh_comb": w_hh_comb,
        "b_comb": b_comb,
        "w2t_comb": w2t_comb,
        "b2t_pad": b2t_pad,
        "trans_pad": trans_pad,
    }


# ============================ forward pass ===================================

def gazlstm_forward(prep, word_inputs, biword_inputs, layer_gaz, gaz_count,
                    gaz_mask, mask):
    """Mirrors GazLSTM.forward -> (tag_seq, gaz_match).

    Also returns gaz_embeds_cat so the (otherwise dead, exactly as in the
    PyTorch get_tags) gaz aggregation kernel is actually executed.
    """
    B, S = word_inputs.shape
    D = CHAR_FEATURE_DIM

    # ---- embeddings (gather = glue) ----
    word_embs = jnp.take(prep["word_emb"], word_inputs, axis=0)        # (B,S,32)
    biword_embs = jnp.take(prep["biword_emb"], biword_inputs, axis=0)
    word_inputs_d = jnp.concatenate([word_embs, biword_embs], axis=-1)  # (B,S,64)
    # self.drop(word_embs) -> identity (eval mode)

    # ---- gazetteer branch (use_char=False, use_count=True) ----
    gaz_embeds = jnp.take(prep["gaz_emb"], layer_gaz, axis=0)          # (B,S,4,G,E)
    gaz_embeds_cat = gaz_aggregate(gaz_embeds, gaz_mask, gaz_count)    # (B,S,4E)
    # NOTE: gaz_embeds_cat is NOT concatenated into word_input_cat in the
    # reference model (it is computed and left unused) -- we do the same.

    # ---- fused BiLSTM + hidden2tag + CRF forward DP (single Pallas kernel) --
    x_flat = jnp.transpose(word_inputs_d, (1, 0, 2)).reshape(S * B, D)  # (S*B,D)
    x_rev = x_flat.reshape(S, B, D)[::-1].reshape(S * B, D)             # time-reversed
    x2 = jnp.concatenate([x_flat, x_rev], axis=-1)                      # (S*B,2D=128)

    part_flat, bp_flat = bilstm_crf_scores(x2, prep, seq_len=S, batch=B)
    part_hist = part_flat.reshape(S, B, TAG_PAD)[:, :, :TAG_SIZE]       # (S,B,T)
    bps = bp_flat.reshape(S, B, TAG_PAD)[:, :, :TAG_SIZE]               # (S,B,T)

    # ---- CRF viterbi back-trace ----
    tag_seq = crf_viterbi_backtrace(part_hist, bps, mask, prep["transitions"])
    gaz_match = []
    return tag_seq, gaz_match, gaz_embeds_cat


# ============================ main ===========================================

if __name__ == "__main__":
    B, S, G = 2, 8, 4   # batch, seq_len, max_gaz_num (per BMES layer)

    params = init_params(jax.random.PRNGKey(0))
    prep = prepare_params(params)        # constant weight prep, done once

    kk = jax.random.split(jax.random.PRNGKey(0), 8)
    word_inputs = jax.random.randint(kk[1], (B, S), 1, WORD_VOCAB)
    biword_inputs = jax.random.randint(kk[2], (B, S), 1, BIWORD_VOCAB)
    layer_gaz = jax.random.randint(kk[3], (B, S, 4, G), 0, GAZ_VOCAB)
    gaz_count = jax.random.randint(kk[4], (B, S, 4, G), 1, 4).astype(jnp.float32)
    gaz_mask = jax.random.bernoulli(kk[5], 0.3, (B, S, 4, G))
    mask = jnp.ones((B, S), jnp.int32)          # full-length sequences

    forward_jit = jax.jit(gazlstm_forward)
    tag_seq, gaz_match, gaz_embeds_cat = forward_jit(
        prep, word_inputs, biword_inputs, layer_gaz, gaz_count, gaz_mask, mask)

    jax.block_until_ready(tag_seq)
    jax.block_until_ready(gaz_embeds_cat)
    assert tag_seq.shape == (B, S)
    assert gaz_embeds_cat.shape == (B, S, 4 * GAZ_EMB_DIM)
    print("KERNEL_OK")
</pallas_src>

<mosaic_0001>
module attributes {stable_mosaic.version = 11 : i64} {
  func.func @_bilstm_crf_kernel(%arg0: i32, %arg1: memref<16x128xf32, #tpu.memory_space<vmem>>, %arg2: memref<128x256xf32, #tpu.memory_space<vmem>>, %arg3: memref<64x256xf32, #tpu.memory_space<vmem>>, %arg4: memref<1x256xf32, #tpu.memory_space<vmem>>, %arg5: memref<64x128xf32, #tpu.memory_space<vmem>>, %arg6: memref<1x128xf32, #tpu.memory_space<vmem>>, %arg7: memref<32x128xf32, #tpu.memory_space<vmem>>, %arg8: memref<16x128xf32, #tpu.memory_space<vmem>>, %arg9: memref<16x128xi32, #tpu.memory_space<vmem>>) attributes {dimension_semantics = [#tpu.dimension_semantics<arbitrary>], iteration_bounds = array<i64: 1>, scalar_prefetch = 0 : i64, scratch_operands = 0 : i64, tpu.core_type = #tpu.core_type<tc>, window_params = [{pipeline_mode = #tpu.pipeline_mode<synchronous>, transform_indices = @transform_0, window_bounds = array<i64: 16, 128>}, {pipeline_mode = #tpu.pipeline_mode<synchronous>, transform_indices = @transform_1, window_bounds = array<i64: 128, 256>}, {pipeline_mode = #tpu.pipeline_mode<synchronous>, transform_indices = @transform_2, window_bounds = array<i64: 64, 256>}, {pipeline_mode = #tpu.pipeline_mode<synchronous>, transform_indices = @transform_3, window_bounds = array<i64: 1, 256>}, {pipeline_mode = #tpu.pipeline_mode<synchronous>, transform_indices = @transform_4, window_bounds = array<i64: 64, 128>}, {pipeline_mode = #tpu.pipeline_mode<synchronous>, transform_indices = @transform_5, window_bounds = array<i64: 1, 128>}, {pipeline_mode = #tpu.pipeline_mode<synchronous>, transform_indices = @transform_6, window_bounds = array<i64: 32, 128>}, {pipeline_mode = #tpu.pipeline_mode<synchronous>, transform_indices = @transform_7, window_bounds = array<i64: 16, 128>}, {pipeline_mode = #tpu.pipeline_mode<synchronous>, transform_indices = @transform_8, window_bounds = array<i64: 16, 128>}]} {
    %c0 = arith.constant 0 : index
    %c0_0 = arith.constant 0 : index
    %0 = vector.load %arg1[%c0, %c0_0] : memref<16x128xf32, #tpu.memory_space<vmem>>, vector<16x128xf32>
    %c0_1 = arith.constant 0 : index
    %c0_2 = arith.constant 0 : index
    %1 = vector.load %arg2[%c0_1, %c0_2] : memref<128x256xf32, #tpu.memory_space<vmem>>, vector<128x256xf32>
    %cst = arith.constant dense<0.000000e+00> : vector<16x256xf32>
    %2 = tpu.matmul %0, %1, %cst {dimension_numbers = #tpu.dot_dimension_numbers<[1], [0], [0], [1], [0, 0, 1, 1], [], []>} : vector<16x128xf32>, vector<128x256xf32>, vector<16x256xf32> -> vector<16x256xf32>
    %c0_3 = arith.constant 0 : index
    %c0_4 = arith.constant 0 : index
    %3 = vector.load %arg4[%c0_3, %c0_4] : memref<1x256xf32, #tpu.memory_space<vmem>>, vector<1x256xf32>
    %4 = vector.broadcast %3 : vector<1x256xf32> to vector<16x256xf32>
    %5 = arith.addf %2, %4 : vector<16x256xf32>
    %c0_5 = arith.constant 0 : index
    %c0_6 = arith.constant 0 : index
    %6 = vector.load %arg3[%c0_5, %c0_6] : memref<64x256xf32, #tpu.memory_space<vmem>>, vector<64x256xf32>
    %cst_7 = arith.constant 0.000000e+00 : f32
    %7 = vector.broadcast %cst_7 : f32 to vector<2x64xf32>
    %cst_8 = arith.constant 0.000000e+00 : f32
    %8 = vector.broadcast %cst_8 : f32 to vector<2x64xf32>
    %9 = vector.extract_strided_slice %5 {offsets = [0, 0], sizes = [2, 256], strides = [1, 1]} : vector<16x256xf32> to vector<2x256xf32>
    %cst_9 = arith.constant dense<0.000000e+00> : vector<2x256xf32>
    %10 = tpu.matmul %7, %6, %cst_9 {dimension_numbers = #tpu.dot_dimension_numbers<[1], [0], [0], [1], [0, 0, 1, 1], [], []>} : vector<2x64xf32>, vector<64x256xf32>, vector<2x256xf32> -> vector<2x256xf32>
    %11 = arith.addf %9, %10 : vector<2x256xf32>
    %12 = arith.negf %11 : vector<2x256xf32>
    %13 = math.exp %12 : vector<2x256xf32>
    %cst_10 = arith.constant 1.000000e+00 : f32
    %14 = vector.broadcast %cst_10 : f32 to vector<2x256xf32>
    %15 = arith.addf %14, %13 : vector<2x256xf32>
    %16 = arith.divf %14, %15 : vector<2x256xf32>
    %17 = math.tanh %11 : vector<2x256xf32>
    %18 = vector.extract_strided_slice %16 {offsets = [0, 64], sizes = [2, 64], strides = [1, 1]} : vector<2x256xf32> to vector<2x64xf32>
    %19 = arith.mulf %18, %8 : vector<2x64xf32>
    %20 = vector.extract_strided_slice %16 {offsets = [0, 0], sizes = [2, 64], strides = [1, 1]} : vector<2x256xf32> to vector<2x64xf32>
    %21 = vector.extract_strided_slice %17 {offsets = [0, 128], sizes = [2, 64], strides = [1, 1]} : vector<2x256xf32> to vector<2x64xf32>
    %22 = arith.mulf %20, %21 : vector<2x64xf32>
    %23 = arith.addf %19, %22 : vector<2x64xf32>
    %24 = vector.extract_strided_slice %16 {offsets = [0, 192], sizes = [2, 64], strides = [1, 1]} : vector<2x256xf32> to vector<2x64xf32>
    %25 = math.tanh %23 : vector<2x64xf32>
    %26 = arith.mulf %24, %25 : vector<2x64xf32>
    %27 = vector.extract_strided_slice %5 {offsets = [2, 0], sizes = [2, 256], strides = [1, 1]} : vector<16x256xf32> to vector<2x256xf32>
    %cst_11 = arith.constant dense<0.000000e+00> : vector<2x256xf32>
    %28 = tpu.matmul %26, %6, %cst_11 {dimension_numbers = #tpu.dot_dimension_numbers<[1], [0], [0], [1], [0, 0, 1, 1], [], []>} : vector<2x64xf32>, vector<64x256xf32>, vector<2x256xf32> -> vector<2x256xf32>
    %29 = arith.addf %27, %28 : vector<2x256xf32>
    %30 = arith.negf %29 : vector<2x256xf32>
    %31 = math.exp %30 : vector<2x256xf32>
    %cst_12 = arith.constant 1.000000e+00 : f32
    %32 = vector.broadcast %cst_12 : f32 to vector<2x256xf32>
    %33 = arith.addf %32, %31 : vector<2x256xf32>
    %34 = arith.divf %32, %33 : vector<2x256xf32>
    %35 = math.tanh %29 : vector<2x256xf32>
    %36 = vector.extract_strided_slice %34 {offsets = [0, 64], sizes = [2, 64], strides = [1, 1]} : vector<2x256xf32> to vector<2x64xf32>
    %37 = arith.mulf %36, %23 : vector<2x64xf32>
    %38 = vector.extract_strided_slice %34 {offsets = [0, 0], sizes = [2, 64], strides = [1, 1]} : vector<2x256xf32> to vector<2x64xf32>
    %39 = vector.extract_strided_slice %35 {offsets = [0, 128], sizes = [2, 64], strides = [1, 1]} : vector<2x256xf32> to vector<2x64xf32>
    %40 = arith.mulf %38, %39 : vector<2x64xf32>
    %41 = arith.addf %37, %40 : vector<2x64xf32>
    %42 = vector.extract_strided_slice %34 {offsets = [0, 192], sizes = [2, 64], strides = [1, 1]} : vector<2x256xf32> to vector<2x64xf32>
    %43 = math.tanh %41 : vector<2x64xf32>
    %44 = arith.mulf %42, %43 : vector<2x64xf32>
    %45 = vector.extract_strided_slice %5 {offsets = [4, 0], sizes = [2, 256], strides = [1, 1]} : vector<16x256xf32> to vector<2x256xf32>
    %cst_13 = arith.constant dense<0.000000e+00> : vector<2x256xf32>
    %46 = tpu.matmul %44, %6, %cst_13 {dimension_numbers = #tpu.dot_dimension_numbers<[1], [0], [0], [1], [0, 0, 1, 1], [], []>} : vector<2x64xf32>, vector<64x256xf32>, vector<2x256xf32> -> vector<2x256xf32>
    %47 = arith.addf %45, %46 : vector<2x256xf32>
    %48 = arith.negf %47 : vector<2x256xf32>
    %49 = math.exp %48 : vector<2x256xf32>
    %cst_14 = arith.constant 1.000000e+00 : f32
    %50 = vector.broadcast %cst_14 : f32 to vector<2x256xf32>
    %51 = arith.addf %50, %49 : vector<2x256xf32>
    %52 = arith.divf %50, %51 : vector<2x256xf32>
    %53 = math.tanh %47 : vector<2x256xf32>
    %54 = vector.extract_strided_slice %52 {offsets = [0, 64], sizes = [2, 64], strides = [1, 1]} : vector<2x256xf32> to vector<2x64xf32>
    %55 = arith.mulf %54, %41 : vector<2x64xf32>
    %56 = vector.extract_strided_slice %52 {offsets = [0, 0], sizes = [2, 64], strides = [1, 1]} : vector<2x256xf32> to vector<2x64xf32>
    %57 = vector.extract_strided_slice %53 {offsets = [0, 128], sizes = [2, 64], strides = [1, 1]} : vector<2x256xf32> to vector<2x64xf32>
    %58 = arith.mulf %56, %57 : vector<2x64xf32>
    %59 = arith.addf %55, %58 : vector<2x64xf32>
    %60 = vector.extract_strided_slice %52 {offsets = [0, 192], sizes = [2, 64], strides = [1, 1]} : vector<2x256xf32> to vector<2x64xf32>
    %61 = math.tanh %59 : vector<2x64xf32>
    %62 = arith.mulf %60, %61 : vector<2x64xf32>
    %63 = vector.extract_strided_slice %5 {offsets = [6, 0], sizes = [2, 256], strides = [1, 1]} : vector<16x256xf32> to vector<2x256xf32>
    %cst_15 = arith.constant dense<0.000000e+00> : vector<2x256xf32>
    %64 = tpu.matmul %62, %6, %cst_15 {dimension_numbers = #tpu.dot_dimension_numbers<[1], [0], [0], [1], [0, 0, 1, 1], [], []>} : vector<2x64xf32>, vector<64x256xf32>, vector<2x256xf32> -> vector<2x256xf32>
    %65 = arith.addf %63, %64 : vector<2x256xf32>
    %66 = arith.negf %65 : vector<2x256xf32>
    %67 = math.exp %66 : vector<2x256xf32>
    %cst_16 = arith.constant 1.000000e+00 : f32
    %68 = vector.broadcast %cst_16 : f32 to vector<2x256xf32>
    %69 = arith.addf %68, %67 : vector<2x256xf32>
    %70 = arith.divf %68, %69 : vector<2x256xf32>
    %71 = math.tanh %65 : vector<2x256xf32>
    %72 = vector.extract_strided_slice %70 {offsets = [0, 64], sizes = [2, 64], strides = [1, 1]} : vector<2x256xf32> to vector<2x64xf32>
    %73 = arith.mulf %72, %59 : vector<2x64xf32>
    %74 = vector.extract_strided_slice %70 {offsets = [0, 0], sizes = [2, 64], strides = [1, 1]} : vector<2x256xf32> to vector<2x64xf32>
    %75 = vector.extract_strided_slice %71 {offsets = [0, 128], sizes = [2, 64], strides = [1, 1]} : vector<2x256xf32> to vector<2x64xf32>
    %76 = arith.mulf %74, %75 : vector<2x64xf32>
    %77 = arith.addf %73, %76 : vector<2x64xf32>
    %78 = vector.extract_strided_slice %70 {offsets = [0, 192], sizes = [2, 64], strides = [1, 1]} : vector<2x256xf32> to vector<2x64xf32>
    %79 = math.tanh %77 : vector<2x64xf32>
    %80 = arith.mulf %78, %79 : vector<2x64xf32>
    %81 = vector.extract_strided_slice %5 {offsets = [8, 0], sizes = [2, 256], strides = [1, 1]} : vector<16x256xf32> to vector<2x256xf32>
    %cst_17 = arith.constant dense<0.000000e+00> : vector<2x256xf32>
    %82 = tpu.matmul %80, %6, %cst_17 {dimension_numbers = #tpu.dot_dimension_numbers<[1], [0], [0], [1], [0, 0, 1, 1], [], []>} : vector<2x64xf32>, vector<64x256xf32>, vector<2x256xf32> -> vector<2x256xf32>
    %83 = arith.addf %81, %82 : vector<2x256xf32>
    %84 = arith.negf %83 : vector<2x256xf32>
    %85 = math.exp %84 : vector<2x256xf32>
    %cst_18 = arith.constant 1.000000e+00 : f32
    %86 = vector.broadcast %cst_18 : f32 to vector<2x256xf32>
    %87 = arith.addf %86, %85 : vector<2x256xf32>
    %88 = arith.divf %86, %87 : vector<2x256xf32>
    %89 = math.tanh %83 : vector<2x256xf32>
    %90 = vector.extract_strided_slice %88 {offsets = [0, 64], sizes = [2, 64], strides = [1, 1]} : vector<2x256xf32> to vector<2x64xf32>
    %91 = arith.mulf %90, %77 : vector<2x64xf32>
    %92 = vector.extract_strided_slice %88 {offsets = [0, 0], sizes = [2, 64], strides = [1, 1]} : vector<2x256xf32> to vector<2x64xf32>
    %93 = vector.extract_strided_slice %89 {offsets = [0, 128], sizes = [2, 64], strides = [1, 1]} : vector<2x256xf32> to vector<2x64xf32>
    %94 = arith.mulf %92, %93 : vector<2x64xf32>
    %95 = arith.addf %91, %94 : vector<2x64xf32>
    %96 = vector.extract_strided_slice %88 {offsets = [0, 192], sizes = [2, 64], strides = [1, 1]} : vector<2x256xf32> to vector<2x64xf32>
    %97 = math.tanh %95 : vector<2x64xf32>
    %98 = arith.mulf %96, %97 : vector<2x64xf32>
    %99 = vector.extract_strided_slice %5 {offsets = [10, 0], sizes = [2, 256], strides = [1, 1]} : vector<16x256xf32> to vector<2x256xf32>
    %cst_19 = arith.constant dense<0.000000e+00> : vector<2x256xf32>
    %100 = tpu.matmul %98, %6, %cst_19 {dimension_numbers = #tpu.dot_dimension_numbers<[1], [0], [0], [1], [0, 0, 1, 1], [], []>} : vector<2x64xf32>, vector<64x256xf32>, vector<2x256xf32> -> vector<2x256xf32>
    %101 = arith.addf %99, %100 : vector<2x256xf32>
    %102 = arith.negf %101 : vector<2x256xf32>
    %103 = math.exp %102 : vector<2x256xf32>
    %cst_20 = arith.constant 1.000000e+00 : f32
    %104 = vector.broadcast %cst_20 : f32 to vector<2x256xf32>
    %105 = arith.addf %104, %103 : vector<2x256xf32>
    %106 = arith.divf %104, %105 : vector<2x256xf32>
    %107 = math.tanh %101 : vector<2x256xf32>
    %108 = vector.extract_strided_slice %106 {offsets = [0, 64], sizes = [2, 64], strides = [1, 1]} : vector<2x256xf32> to vector<2x64xf32>
    %109 = arith.mulf %108, %95 : vector<2x64xf32>
    %110 = vector.extract_strided_slice %106 {offsets = [0, 0], sizes = [2, 64], strides = [1, 1]} : vector<2x256xf32> to vector<2x64xf32>
    %111 = vector.extract_strided_slice %107 {offsets = [0, 128], sizes = [2, 64], strides = [1, 1]} : vector<2x256xf32> to vector<2x64xf32>
    %112 = arith.mulf %110, %111 : vector<2x64xf32>
    %113 = arith.addf %109, %112 : vector<2x64xf32>
    %114 = vector.extract_strided_slice %106 {offsets = [0, 192], sizes = [2, 64], strides = [1, 1]} : vector<2x256xf32> to vector<2x64xf32>
    %115 = math.tanh %113 : vector<2x64xf32>
    %116 = arith.mulf %114, %115 : vector<2x64xf32>
    %117 = vector.extract_strided_slice %5 {offsets = [12, 0], sizes = [2, 256], strides = [1, 1]} : vector<16x256xf32> to vector<2x256xf32>
    %cst_21 = arith.constant dense<0.000000e+00> : vector<2x256xf32>
    %118 = tpu.matmul %116, %6, %cst_21 {dimension_numbers = #tpu.dot_dimension_numbers<[1], [0], [0], [1], [0, 0, 1, 1], [], []>} : vector<2x64xf32>, vector<64x256xf32>, vector<2x256xf32> -> vector<2x256xf32>
    %119 = arith.addf %117, %118 : vector<2x256xf32>
    %120 = arith.negf %119 : vector<2x256xf32>
    %121 = math.exp %120 : vector<2x256xf32>
    %cst_22 = arith.constant 1.000000e+00 : f32
    %122 = vector.broadcast %cst_22 : f32 to vector<2x256xf32>
    %123 = arith.addf %122, %121 : vector<2x256xf32>
    %124 = arith.divf %122, %123 : vector<2x256xf32>
    %125 = math.tanh %119 : vector<2x256xf32>
    %126 = vector.extract_strided_slice %124 {offsets = [0, 64], sizes = [2, 64], strides = [1, 1]} : vector<2x256xf32> to vector<2x64xf32>
    %127 = arith.mulf %126, %113 : vector<2x64xf32>
    %128 = vector.extract_strided_slice %124 {offsets = [0, 0], sizes = [2, 64], strides = [1, 1]} : vector<2x256xf32> to vector<2x64xf32>
    %129 = vector.extract_strided_slice %125 {offsets = [0, 128], sizes = [2, 64], strides = [1, 1]} : vector<2x256xf32> to vector<2x64xf32>
    %130 = arith.mulf %128, %129 : vector<2x64xf32>
    %131 = arith.addf %127, %130 : vector<2x64xf32>
    %132 = vector.extract_strided_slice %124 {offsets = [0, 192], sizes = [2, 64], strides = [1, 1]} : vector<2x256xf32> to vector<2x64xf32>
    %133 = math.tanh %131 : vector<2x64xf32>
    %134 = arith.mulf %132, %133 : vector<2x64xf32>
    %135 = vector.extract_strided_slice %5 {offsets = [14, 0], sizes = [2, 256], strides = [1, 1]} : vector<16x256xf32> to vector<2x256xf32>
    %cst_23 = arith.constant dense<0.000000e+00> : vector<2x256xf32>
    %136 = tpu.matmul %134, %6, %cst_23 {dimension_numbers = #tpu.dot_dimension_numbers<[1], [0], [0], [1], [0, 0, 1, 1], [], []>} : vector<2x64xf32>, vector<64x256xf32>, vector<2x256xf32> -> vector<2x256xf32>
    %137 = arith.addf %135, %136 : vector<2x256xf32>
    %138 = arith.negf %137 : vector<2x256xf32>
    %139 = math.exp %138 : vector<2x256xf32>
    %cst_24 = arith.constant 1.000000e+00 : f32
    %140 = vector.broadcast %cst_24 : f32 to vector<2x256xf32>
    %141 = arith.addf %140, %139 : vector<2x256xf32>
    %142 = arith.divf %140, %141 : vector<2x256xf32>
    %143 = math.tanh %137 : vector<2x256xf32>
    %144 = vector.extract_strided_slice %142 {offsets = [0, 64], sizes = [2, 64], strides = [1, 1]} : vector<2x256xf32> to vector<2x64xf32>
    %145 = arith.mulf %144, %131 : vector<2x64xf32>
    %146 = vector.extract_strided_slice %142 {offsets = [0, 0], sizes = [2, 64], strides = [1, 1]} : vector<2x256xf32> to vector<2x64xf32>
    %147 = vector.extract_strided_slice %143 {offsets = [0, 128], sizes = [2, 64], strides = [1, 1]} : vector<2x256xf32> to vector<2x64xf32>
    %148 = arith.mulf %146, %147 : vector<2x64xf32>
    %149 = arith.addf %145, %148 : vector<2x64xf32>
    %150 = vector.extract_strided_slice %142 {offsets = [0, 192], sizes = [2, 64], strides = [1, 1]} : vector<2x256xf32> to vector<2x64xf32>
    %151 = math.tanh %149 : vector<2x64xf32>
    %152 = arith.mulf %150, %151 : vector<2x64xf32>
    %153 = tpu.iota {dimensions = array<i32: 1>} : vector<2x64xi32>
    %c32_i32 = arith.constant 32 : i32
    %154 = vector.broadcast %c32_i32 : i32 to vector<2x64xi32>
    %155 = arith.cmpi slt, %153, %154 : vector<2x64xi32>
    %156 = arith.select %155, %26, %152 : vector<2x64xi1>, vector<2x64xf32>
    %c32_i32_25 = arith.constant 32 : i32
    %157 = vector.broadcast %c32_i32_25 : i32 to vector<2x64xi32>
    %158 = arith.cmpi slt, %153, %157 : vector<2x64xi32>
    %159 = arith.select %158, %44, %134 : vector<2x64xi1>, vector<2x64xf32>
    %c32_i32_26 = arith.constant 32 : i32
    %160 = vector.broadcast %c32_i32_26 : i32 to vector<2x64xi32>
    %161 = arith.cmpi slt, %153, %160 : vector<2x64xi32>
    %162 = arith.select %161, %62, %116 : vector<2x64xi1>, vector<2x64xf32>
    %c32_i32_27 = arith.constant 32 : i32
    %163 = vector.broadcast %c32_i32_27 : i32 to vector<2x64xi32>
    %164 = arith.cmpi slt, %153, %163 : vector<2x64xi32>
    %165 = arith.select %164, %80, %98 : vector<2x64xi1>, vector<2x64xf32>
    %c32_i32_28 = arith.constant 32 : i32
    %166 = vector.broadcast %c32_i32_28 : i32 to vector<2x64xi32>
    %167 = arith.cmpi slt, %153, %166 : vector<2x64xi32>
    %168 = arith.select %167, %98, %80 : vector<2x64xi1>, vector<2x64xf32>
    %c32_i32_29 = arith.constant 32 : i32
    %169 = vector.broadcast %c32_i32_29 : i32 to vector<2x64xi32>
    %170 = arith.cmpi slt, %153, %169 : vector<2x64xi32>
    %171 = arith.select %170, %116, %62 : vector<2x64xi1>, vector<2x64xf32>
    %c32_i32_30 = arith.constant 32 : i32
    %172 = vector.broadcast %c32_i32_30 : i32 to vector<2x64xi32>
    %173 = arith.cmpi slt, %153, %172 : vector<2x64xi32>
    %174 = arith.select %173, %134, %44 : vector<2x64xi1>, vector<2x64xf32>
    %c32_i32_31 = arith.constant 32 : i32
    %175 = vector.broadcast %c32_i32_31 : i32 to vector<2x64xi32>
    %176 = arith.cmpi slt, %153, %175 : vector<2x64xi32>
    %177 = arith.select %176, %152, %26 : vector<2x64xi1>, vector<2x64xf32>
    %178 = tpu.concatenate %156, %159, %162, %165, %168, %171, %174, %177 in 0 : vector<2x64xf32>, vector<2x64xf32>, vector<2x64xf32>, vector<2x64xf32>, vector<2x64xf32>, vector<2x64xf32>, vector<2x64xf32>, vector<2x64xf32> -> vector<16x64xf32>
    %c0_32 = arith.constant 0 : index
    %c0_33 = arith.constant 0 : index
    %179 = vector.load %arg5[%c0_32, %c0_33] : memref<64x128xf32, #tpu.memory_space<vmem>>, vector<64x128xf32>
    %cst_34 = arith.constant dense<0.000000e+00> : vector<16x128xf32>
    %180 = tpu.matmul %178, %179, %cst_34 {dimension_numbers = #tpu.dot_dimension_numbers<[1], [0], [0], [1], [0, 0, 1, 1], [], []>} : vector<16x64xf32>, vector<64x128xf32>, vector<16x128xf32> -> vector<16x128xf32>
    %c0_35 = arith.constant 0 : index
    %c0_36 = arith.constant 0 : index
    %181 = vector.load %arg6[%c0_35, %c0_36] : memref<1x128xf32, #tpu.memory_space<vmem>>, vector<1x128xf32>
    %182 = vector.broadcast %181 : vector<1x128xf32> to vector<16x128xf32>
    %183 = arith.addf %180, %182 : vector<16x128xf32>
    %c0_37 = arith.constant 0 : index
    %c0_38 = arith.constant 0 : index
    %184 = vector.load %arg7[%c0_37, %c0_38] : memref<32x128xf32, #tpu.memory_space<vmem>>, vector<32x128xf32>
    %185 = tpu.iota {dimensions = array<i32: 0>} : vector<32x128xi32>
    %186 = tpu.iota {dimensions = array<i32: 1>} : vector<32x128xi32>
    %187 = arith.cmpi eq, %185, %186 : vector<32x128xi32>
    %188 = arith.extui %187 : vector<32x128xi1> to vector<32x128xi32>
    %189 = arith.sitofp %188 : vector<32x128xi32> to vector<32x128xf32>
    %190 = arith.sitofp %185 : vector<32x128xi32> to vector<32x128xf32>
    %191 = vector.extract_strided_slice %183 {offsets = [0, 0], sizes = [2, 128], strides = [1, 1]} : vector<16x128xf32> to vector<2x128xf32>
    %192 = vector.extract_strided_slice %184 {offsets = [18, 0], sizes = [1, 128], strides = [1, 1]} : vector<32x128xf32> to vector<1x128xf32>
    %193 = vector.broadcast %192 : vector<1x128xf32> to vector<2x128xf32>
    %194 = arith.addf %191, %193 : vector<2x128xf32>
    %c0_39 = arith.constant 0 : index
    %c0_40 = arith.constant 0 : index
    %195 = vector.load %arg8[%c0_39, %c0_40] : memref<16x128xf32, #tpu.memory_space<vmem>>, vector<2x128xf32>
    tpu.vector_store %arg8[%c0_39, %c0_40], %194 {strides = array<i32>} : memref<16x128xf32, #tpu.memory_space<vmem>>, vector<2x128xf32>,
    %c0_i32 = arith.constant 0 : i32
    %196 = vector.broadcast %c0_i32 : i32 to vector<2x128xi32>
    %c0_41 = arith.constant 0 : index
    %c0_42 = arith.constant 0 : index
    %197 = vector.load %arg9[%c0_41, %c0_42] : memref<16x128xi32, #tpu.memory_space<vmem>>, vector<2x128xi32>
    tpu.vector_store %arg9[%c0_41, %c0_42], %196 {strides = array<i32>} : memref<16x128xi32, #tpu.memory_space<vmem>>, vector<2x128xi32>,
    %198 = vector.extract_strided_slice %194 {offsets = [0, 0], sizes = [1, 128], strides = [1, 1]} : vector<2x128xf32> to vector<1x128xf32>
    %199 = vector.broadcast %198 : vector<1x128xf32> to vector<32x128xf32>
    %200 = arith.mulf %189, %199 : vector<32x128xf32>
    %cst_43 = arith.constant dense<0.000000e+00> : vector<32xf32>
    %201 = vector.multi_reduction <add>, %200, %cst_43 [1] : vector<32x128xf32> to vector<32xf32>
    %202 = vector.shape_cast %201 : vector<32xf32> to vector<32x1xf32>
    %203 = vector.broadcast %202 : vector<32x1xf32> to vector<32x128xf32>
    %204 = arith.addf %203, %184 : vector<32x128xf32>
    %cst_44 = arith.constant dense<0xFF800000> : vector<128xf32>
    %205 = vector.multi_reduction <maximumf>, %204, %cst_44 [0] : vector<32x128xf32> to vector<128xf32>
    %206 = vector.shape_cast %205 : vector<128xf32> to vector<1x128xf32>
    %207 = vector.broadcast %206 : vector<1x128xf32> to vector<32x128xf32>
    %208 = arith.cmpf oeq, %204, %207 : vector<32x128xf32>
    %cst_45 = arith.constant 1.000000e+09 : f32
    %209 = vector.broadcast %cst_45 : f32 to vector<32x128xf32>
    %210 = arith.select %208, %190, %209 : vector<32x128xi1>, vector<32x128xf32>
    %cst_46 = arith.constant dense<0x7F800000> : vector<128xf32>
    %211 = vector.multi_reduction <minimumf>, %210, %cst_46 [0] : vector<32x128xf32> to vector<128xf32>
    %212 = vector.shape_cast %211 : vector<128xf32> to vector<1x128xf32>
    %213 = arith.fptosi %212 : vector<1x128xf32> to vector<1x128xi32>
    %214 = vector.extract_strided_slice %183 {offsets = [2, 0], sizes = [1, 128], strides = [1, 1]} : vector<16x128xf32> to vector<1x128xf32>
    %215 = arith.addf %206, %214 : vector<1x128xf32>
    %216 = vector.extract_strided_slice %194 {offsets = [1, 0], sizes = [1, 128], strides = [1, 1]} : vector<2x128xf32> to vector<1x128xf32>
    %217 = vector.broadcast %216 : vector<1x128xf32> to vector<32x128xf32>
    %218 = arith.mulf %189, %217 : vector<32x128xf32>
    %cst_47 = arith.constant dense<0.000000e+00> : vector<32xf32>
    %219 = vector.multi_reduction <add>, %218, %cst_47 [1] : vector<32x128xf32> to vector<32xf32>
    %220 = vector.shape_cast %219 : vector<32xf32> to vector<32x1xf32>
    %221 = vector.broadcast %220 : vector<32x1xf32> to vector<32x128xf32>
    %222 = arith.addf %221, %184 : vector<32x128xf32>
    %cst_48 = arith.constant dense<0xFF800000> : vector<128xf32>
    %223 = vector.multi_reduction <maximumf>, %222, %cst_48 [0] : vector<32x128xf32> to vector<128xf32>
    %224 = vector.shape_cast %223 : vector<128xf32> to vector<1x128xf32>
    %225 = vector.broadcast %224 : vector<1x128xf32> to vector<32x128xf32>
    %226 = arith.cmpf oeq, %222, %225 : vector<32x128xf32>
    %cst_49 = arith.constant 1.000000e+09 : f32
    %227 = vector.broadcast %cst_49 : f32 to vector<32x128xf32>
    %228 = arith.select %226, %190, %227 : vector<32x128xi1>, vector<32x128xf32>
    %cst_50 = arith.constant dense<0x7F800000> : vector<128xf32>
    %229 = vector.multi_reduction <minimumf>, %228, %cst_50 [0] : vector<32x128xf32> to vector<128xf32>
    %230 = vector.shape_cast %229 : vector<128xf32> to vector<1x128xf32>
    %231 = arith.fptosi %230 : vector<1x128xf32> to vector<1x128xi32>
    %232 = vector.extract_strided_slice %183 {offsets = [3, 0], sizes = [1, 128], strides = [1, 1]} : vector<16x128xf32> to vector<1x128xf32>
    %233 = arith.addf %224, %232 : vector<1x128xf32>
    %234 = tpu.concatenate %215, %233 in 0 : vector<1x128xf32>, vector<1x128xf32> -> vector<2x128xf32>
    %c2 = arith.constant 2 : index
    %c0_51 = arith.constant 0 : index
    %235 = vector.load %arg8[%c2, %c0_51] : memref<16x128xf32, #tpu.memory_space<vmem>>, vector<2x128xf32>
    tpu.vector_store %arg8[%c2, %c0_51], %234 {strides = array<i32>} : memref<16x128xf32, #tpu.memory_space<vmem>>, vector<2x128xf32>,
    %236 = tpu.concatenate %213, %231 in 0 : vector<1x128xi32>, vector<1x128xi32> -> vector<2x128xi32>
    %c2_52 = arith.constant 2 : index
    %c0_53 = arith.constant 0 : index
    %237 = vector.load %arg9[%c2_52, %c0_53] : memref<16x128xi32, #tpu.memory_space<vmem>>, vector<2x128xi32>
    tpu.vector_store %arg9[%c2_52, %c0_53], %236 {strides = array<i32>} : memref<16x128xi32, #tpu.memory_space<vmem>>, vector<2x128xi32>,
    %238 = vector.extract_strided_slice %234 {offsets = [0, 0], sizes = [1, 128], strides = [1, 1]} : vector<2x128xf32> to vector<1x128xf32>
    %239 = vector.broadcast %238 : vector<1x128xf32> to vector<32x128xf32>
    %240 = arith.mulf %189, %239 : vector<32x128xf32>
    %cst_54 = arith.constant dense<0.000000e+00> : vector<32xf32>
    %241 = vector.multi_reduction <add>, %240, %cst_54 [1] : vector<32x128xf32> to vector<32xf32>
    %242 = vector.shape_cast %241 : vector<32xf32> to vector<32x1xf32>
    %243 = vector.broadcast %242 : vector<32x1xf32> to vector<32x128xf32>
    %244 = arith.addf %243, %184 : vector<32x128xf32>
    %cst_55 = arith.constant dense<0xFF800000> : vector<128xf32>
    %245 = vector.multi_reduction <maximumf>, %244, %cst_55 [0] : vector<32x128xf32> to vector<128xf32>
    %246 = vector.shape_cast %245 : vector<128xf32> to vector<1x128xf32>
    %247 = vector.broadcast %246 : vector<1x128xf32> to vector<32x128xf32>
    %248 = arith.cmpf oeq, %244, %247 : vector<32x128xf32>
    %cst_56 = arith.constant 1.000000e+09 : f32
    %249 = vector.broadcast %cst_56 : f32 to vector<32x128xf32>
    %250 = arith.select %248, %190, %249 : vector<32x128xi1>, vector<32x128xf32>
    %cst_57 = arith.constant dense<0x7F800000> : vector<128xf32>
    %251 = vector.multi_reduction <minimumf>, %250, %cst_57 [0] : vector<32x128xf32> to vector<128xf32>
    %252 = vector.shape_cast %251 : vector<128xf32> to vector<1x128xf32>
    %253 = arith.fptosi %252 : vector<1x128xf32> to vector<1x128xi32>
    %254 = vector.extract_strided_slice %183 {offsets = [4, 0], sizes = [1, 128], strides = [1, 1]} : vector<16x128xf32> to vector<1x128xf32>
    %255 = arith.addf %246, %254 : vector<1x128xf32>
    %256 = vector.extract_strided_slice %234 {offsets = [1, 0], sizes = [1, 128], strides = [1, 1]} : vector<2x128xf32> to vector<1x128xf32>
    %257 = vector.broadcast %256 : vector<1x128xf32> to vector<32x128xf32>
    %258 = arith.mulf %189, %257 : vector<32x128xf32>
    %cst_58 = arith.constant dense<0.000000e+00> : vector<32xf32>
    %259 = vector.multi_reduction <add>, %258, %cst_58 [1] : vector<32x128xf32> to vector<32xf32>
    %260 = vector.shape_cast %259 : vector<32xf32> to vector<32x1xf32>
    %261 = vector.broadcast %260 : vector<32x1xf32> to vector<32x128xf32>
    %262 = arith.addf %261, %184 : vector<32x128xf32>
    %cst_59 = arith.constant dense<0xFF800000> : vector<128xf32>
    %263 = vector.multi_reduction <maximumf>, %262, %cst_59 [0] : vector<32x128xf32> to vector<128xf32>
    %264 = vector.shape_cast %263 : vector<128xf32> to vector<1x128xf32>
    %265 = vector.broadcast %264 : vector<1x128xf32> to vector<32x128xf32>
    %266 = arith.cmpf oeq, %262, %265 : vector<32x128xf32>
    %cst_60 = arith.constant 1.000000e+09 : f32
    %267 = vector.broadcast %cst_60 : f32 to vector<32x128xf32>
    %268 = arith.select %266, %190, %267 : vector<32x128xi1>, vector<32x128xf32>
    %cst_61 = arith.constant dense<0x7F800000> : vector<128xf32>
    %269 = vector.multi_reduction <minimumf>, %268, %cst_61 [0] : vector<32x128xf32> to vector<128xf32>
    %270 = vector.shape_cast %269 : vector<128xf32> to vector<1x128xf32>
    %271 = arith.fptosi %270 : vector<1x128xf32> to vector<1x128xi32>
    %272 = vector.extract_strided_slice %183 {offsets = [5, 0], sizes = [1, 128], strides = [1, 1]} : vector<16x128xf32> to vector<1x128xf32>
    %273 = arith.addf %264, %272 : vector<1x128xf32>
    %274 = tpu.concatenate %255, %273 in 0 : vector<1x128xf32>, vector<1x128xf32> -> vector<2x128xf32>
    %c4 = arith.constant 4 : index
    %c0_62 = arith.constant 0 : index
    %275 = vector.load %arg8[%c4, %c0_62] : memref<16x128xf32, #tpu.memory_space<vmem>>, vector<2x128xf32>
    tpu.vector_store %arg8[%c4, %c0_62], %274 {strides = array<i32>} : memref<16x128xf32, #tpu.memory_space<vmem>>, vector<2x128xf32>,
    %276 = tpu.concatenate %253, %271 in 0 : vector<1x128xi32>, vector<1x128xi32> -> vector<2x128xi32>
    %c4_63 = arith.constant 4 : index
    %c0_64 = arith.constant 0 : index
    %277 = vector.load %arg9[%c4_63, %c0_64] : memref<16x128xi32, #tpu.memory_space<vmem>>, vector<2x128xi32>
    tpu.vector_store %arg9[%c4_63, %c0_64], %276 {strides = array<i32>} : memref<16x128xi32, #tpu.memory_space<vmem>>, vector<2x128xi32>,
    %278 = vector.extract_strided_slice %274 {offsets = [0, 0], sizes = [1, 128], strides = [1, 1]} : vector<2x128xf32> to vector<1x128xf32>
    %279 = vector.broadcast %278 : vector<1x128xf32> to vector<32x128xf32>
    %280 = arith.mulf %189, %279 : vector<32x128xf32>
    %cst_65 = arith.constant dense<0.000000e+00> : vector<32xf32>
    %281 = vector.multi_reduction <add>, %280, %cst_65 [1] : vector<32x128xf32> to vector<32xf32>
    %282 = vector.shape_cast %281 : vector<32xf32> to vector<32x1xf32>
    %283 = vector.broadcast %282 : vector<32x1xf32> to vector<32x128xf32>
    %284 = arith.addf %283, %184 : vector<32x128xf32>
    %cst_66 = arith.constant dense<0xFF800000> : vector<128xf32>
    %285 = vector.multi_reduction <maximumf>, %284, %cst_66 [0] : vector<32x128xf32> to vector<128xf32>
    %286 = vector.shape_cast %285 : vector<128xf32> to vector<1x128xf32>
    %287 = vector.broadcast %286 : vector<1x128xf32> to vector<32x128xf32>
    %288 = arith.cmpf oeq, %284, %287 : vector<32x128xf32>
    %cst_67 = arith.constant 1.000000e+09 : f32
    %289 = vector.broadcast %cst_67 : f32 to vector<32x128xf32>
    %290 = arith.select %288, %190, %289 : vector<32x128xi1>, vector<32x128xf32>
    %cst_68 = arith.constant dense<0x7F800000> : vector<128xf32>
    %291 = vector.multi_reduction <minimumf>, %290, %cst_68 [0] : vector<32x128xf32> to vector<128xf32>
    %292 = vector.shape_cast %291 : vector<128xf32> to vector<1x128xf32>
    %293 = arith.fptosi %292 : vector<1x128xf32> to vector<1x128xi32>
    %294 = vector.extract_strided_slice %183 {offsets = [6, 0], sizes = [1, 128], strides = [1, 1]} : vector<16x128xf32> to vector<1x128xf32>
    %295 = arith.addf %286, %294 : vector<1x128xf32>
    %296 = vector.extract_strided_slice %274 {offsets = [1, 0], sizes = [1, 128], strides = [1, 1]} : vector<2x128xf32> to vector<1x128xf32>
    %297 = vector.broadcast %296 : vector<1x128xf32> to vector<32x128xf32>
    %298 = arith.mulf %189, %297 : vector<32x128xf32>
    %cst_69 = arith.constant dense<0.000000e+00> : vector<32xf32>
    %299 = vector.multi_reduction <add>, %298, %cst_69 [1] : vector<32x128xf32> to vector<32xf32>
    %300 = vector.shape_cast %299 : vector<32xf32> to vector<32x1xf32>
    %301 = vector.broadcast %300 : vector<32x1xf32> to vector<32x128xf32>
    %302 = arith.addf %301, %184 : vector<32x128xf32>
    %cst_70 = arith.constant dense<0xFF800000> : vector<128xf32>
    %303 = vector.multi_reduction <maximumf>, %302, %cst_70 [0] : vector<32x128xf32> to vector<128xf32>
    %304 = vector.shape_cast %303 : vector<128xf32> to vector<1x128xf32>
    %305 = vector.broadcast %304 : vector<1x128xf32> to vector<32x128xf32>
    %306 = arith.cmpf oeq, %302, %305 : vector<32x128xf32>
    %cst_71 = arith.constant 1.000000e+09 : f32
    %307 = vector.broadcast %cst_71 : f32 to vector<32x128xf32>
    %308 = arith.select %306, %190, %307 : vector<32x128xi1>, vector<32x128xf32>
    %cst_72 = arith.constant dense<0x7F800000> : vector<128xf32>
    %309 = vector.multi_reduction <minimumf>, %308, %cst_72 [0] : vector<32x128xf32> to vector<128xf32>
    %310 = vector.shape_cast %309 : vector<128xf32> to vector<1x128xf32>
    %311 = arith.fptosi %310 : vector<1x128xf32> to vector<1x128xi32>
    %312 = vector.extract_strided_slice %183 {offsets = [7, 0], sizes = [1, 128], strides = [1, 1]} : vector<16x128xf32> to vector<1x128xf32>
    %313 = arith.addf %304, %312 : vector<1x128xf32>
    %314 = tpu.concatenate %295, %313 in 0 : vector<1x128xf32>, vector<1x128xf32> -> vector<2x128xf32>
    %c6 = arith.constant 6 : index
    %c0_73 = arith.constant 0 : index
    %315 = vector.load %arg8[%c6, %c0_73] : memref<16x128xf32, #tpu.memory_space<vmem>>, vector<2x128xf32>
    tpu.vector_store %arg8[%c6, %c0_73], %314 {strides = array<i32>} : memref<16x128xf32, #tpu.memory_space<vmem>>, vector<2x128xf32>,
    %316 = tpu.concatenate %293, %311 in 0 : vector<1x128xi32>, vector<1x128xi32> -> vector<2x128xi32>
    %c6_74 = arith.constant 6 : index
    %c0_75 = arith.constant 0 : index
    %317 = vector.load %arg9[%c6_74, %c0_75] : memref<16x128xi32, #tpu.memory_space<vmem>>, vector<2x128xi32>
    tpu.vector_store %arg9[%c6_74, %c0_75], %316 {strides = array<i32>} : memref<16x128xi32, #tpu.memory_space<vmem>>, vector<2x128xi32>,
    %318 = vector.extract_strided_slice %314 {offsets = [0, 0], sizes = [1, 128], strides = [1, 1]} : vector<2x128xf32> to vector<1x128xf32>
    %319 = vector.broadcast %318 : vector<1x128xf32> to vector<32x128xf32>
    %320 = arith.mulf %189, %319 : vector<32x128xf32>
    %cst_76 = arith.constant dense<0.000000e+00> : vector<32xf32>
    %321 = vector.multi_reduction <add>, %320, %cst_76 [1] : vector<32x128xf32> to vector<32xf32>
    %322 = vector.shape_cast %321 : vector<32xf32> to vector<32x1xf32>
    %323 = vector.broadcast %322 : vector<32x1xf32> to vector<32x128xf32>
    %324 = arith.addf %323, %184 : vector<32x128xf32>
    %cst_77 = arith.constant dense<0xFF800000> : vector<128xf32>
    %325 = vector.multi_reduction <maximumf>, %324, %cst_77 [0] : vector<32x128xf32> to vector<128xf32>
    %326 = vector.shape_cast %325 : vector<128xf32> to vector<1x128xf32>
    %327 = vector.broadcast %326 : vector<1x128xf32> to vector<32x128xf32>
    %328 = arith.cmpf oeq, %324, %327 : vector<32x128xf32>
    %cst_78 = arith.constant 1.000000e+09 : f32
    %329 = vector.broadcast %cst_78 : f32 to vector<32x128xf32>
    %330 = arith.select %328, %190, %329 : vector<32x128xi1>, vector<32x128xf32>
    %cst_79 = arith.constant dense<0x7F800000> : vector<128xf32>
    %331 = vector.multi_reduction <minimumf>, %330, %cst_79 [0] : vector<32x128xf32> to vector<128xf32>
    %332 = vector.shape_cast %331 : vector<128xf32> to vector<1x128xf32>
    %333 = arith.fptosi %332 : vector<1x128xf32> to vector<1x128xi32>
    %334 = vector.extract_strided_slice %183 {offsets = [8, 0], sizes = [1, 128], strides = [1, 1]} : vector<16x128xf32> to vector<1x128xf32>
    %335 = arith.addf %326, %334 : vector<1x128xf32>
    %336 = vector.extract_strided_slice %314 {offsets = [1, 0], sizes = [1, 128], strides = [1, 1]} : vector<2x128xf32> to vector<1x128xf32>
    %337 = vector.broadcast %336 : vector<1x128xf32> to vector<32x128xf32>
    %338 = arith.mulf %189, %337 : vector<32x128xf32>
    %cst_80 = arith.constant dense<0.000000e+00> : vector<32xf32>
    %339 = vector.multi_reduction <add>, %338, %cst_80 [1] : vector<32x128xf32> to vector<32xf32>
    %340 = vector.shape_cast %339 : vector<32xf32> to vector<32x1xf32>
    %341 = vector.broadcast %340 : vector<32x1xf32> to vector<32x128xf32>
    %342 = arith.addf %341, %184 : vector<32x128xf32>
    %cst_81 = arith.constant dense<0xFF800000> : vector<128xf32>
    %343 = vector.multi_reduction <maximumf>, %342, %cst_81 [0] : vector<32x128xf32> to vector<128xf32>
    %344 = vector.shape_cast %343 : vector<128xf32> to vector<1x128xf32>
    %345 = vector.broadcast %344 : vector<1x128xf32> to vector<32x128xf32>
    %346 = arith.cmpf oeq, %342, %345 : vector<32x128xf32>
    %cst_82 = arith.constant 1.000000e+09 : f32
    %347 = vector.broadcast %cst_82 : f32 to vector<32x128xf32>
    %348 = arith.select %346, %190, %347 : vector<32x128xi1>, vector<32x128xf32>
    %cst_83 = arith.constant dense<0x7F800000> : vector<128xf32>
    %349 = vector.multi_reduction <minimumf>, %348, %cst_83 [0] : vector<32x128xf32> to vector<128xf32>
    %350 = vector.shape_cast %349 : vector<128xf32> to vector<1x128xf32>
    %351 = arith.fptosi %350 : vector<1x128xf32> to vector<1x128xi32>
    %352 = vector.extract_strided_slice %183 {offsets = [9, 0], sizes = [1, 128], strides = [1, 1]} : vector<16x128xf32> to vector<1x128xf32>
    %353 = arith.addf %344, %352 : vector<1x128xf32>
    %354 = tpu.concatenate %335, %353 in 0 : vector<1x128xf32>, vector<1x128xf32> -> vector<2x128xf32>
    %c8 = arith.constant 8 : index
    %c0_84 = arith.constant 0 : index
    %355 = vector.load %arg8[%c8, %c0_84] : memref<16x128xf32, #tpu.memory_space<vmem>>, vector<2x128xf32>
    tpu.vector_store %arg8[%c8, %c0_84], %354 {strides = array<i32>} : memref<16x128xf32, #tpu.memory_space<vmem>>, vector<2x128xf32>,
    %356 = tpu.concatenate %333, %351 in 0 : vector<1x128xi32>, vector<1x128xi32> -> vector<2x128xi32>
    %c8_85 = arith.constant 8 : index
    %c0_86 = arith.constant 0 : index
    %357 = vector.load %arg9[%c8_85, %c0_86] : memref<16x128xi32, #tpu.memory_space<vmem>>, vector<2x128xi32>
    tpu.vector_store %arg9[%c8_85, %c0_86], %356 {strides = array<i32>} : memref<16x128xi32, #tpu.memory_space<vmem>>, vector<2x128xi32>,
    %358 = vector.extract_strided_slice %354 {offsets = [0, 0], sizes = [1, 128], strides = [1, 1]} : vector<2x128xf32> to vector<1x128xf32>
    %359 = vector.broadcast %358 : vector<1x128xf32> to vector<32x128xf32>
    %360 = arith.mulf %189, %359 : vector<32x128xf32>
    %cst_87 = arith.constant dense<0.000000e+00> : vector<32xf32>
    %361 = vector.multi_reduction <add>, %360, %cst_87 [1] : vector<32x128xf32> to vector<32xf32>
    %362 = vector.shape_cast %361 : vector<32xf32> to vector<32x1xf32>
    %363 = vector.broadcast %362 : vector<32x1xf32> to vector<32x128xf32>
    %364 = arith.addf %363, %184 : vector<32x128xf32>
    %cst_88 = arith.constant dense<0xFF800000> : vector<128xf32>
    %365 = vector.multi_reduction <maximumf>, %364, %cst_88 [0] : vector<32x128xf32> to vector<128xf32>
    %366 = vector.shape_cast %365 : vector<128xf32> to vector<1x128xf32>
    %367 = vector.broadcast %366 : vector<1x128xf32> to vector<32x128xf32>
    %368 = arith.cmpf oeq, %364, %367 : vector<32x128xf32>
    %cst_89 = arith.constant 1.000000e+09 : f32
    %369 = vector.broadcast %cst_89 : f32 to vector<32x128xf32>
    %370 = arith.select %368, %190, %369 : vector<32x128xi1>, vector<32x128xf32>
    %cst_90 = arith.constant dense<0x7F800000> : vector<128xf32>
    %371 = vector.multi_reduction <minimumf>, %370, %cst_90 [0] : vector<32x128xf32> to vector<128xf32>
    %372 = vector.shape_cast %371 : vector<128xf32> to vector<1x128xf32>
    %373 = arith.fptosi %372 : vector<1x128xf32> to vector<1x128xi32>
    %374 = vector.extract_strided_slice %183 {offsets = [10, 0], sizes = [1, 128], strides = [1, 1]} : vector<16x128xf32> to vector<1x128xf32>
    %375 = arith.addf %366, %374 : vector<1x128xf32>
    %376 = vector.extract_strided_slice %354 {offsets = [1, 0], sizes = [1, 128], strides = [1, 1]} : vector<2x128xf32> to vector<1x128xf32>
    %377 = vector.broadcast %376 : vector<1x128xf32> to vector<32x128xf32>
    %378 = arith.mulf %189, %377 : vector<32x128xf32>
    %cst_91 = arith.constant dense<0.000000e+00> : vector<32xf32>
    %379 = vector.multi_reduction <add>, %378, %cst_91 [1] : vector<32x128xf32> to vector<32xf32>
    %380 = vector.shape_cast %379 : vector<32xf32> to vector<32x1xf32>
    %381 = vector.broadcast %380 : vector<32x1xf32> to vector<32x128xf32>
    %382 = arith.addf %381, %184 : vector<32x128xf32>
    %cst_92 = arith.constant dense<0xFF800000> : vector<128xf32>
    %383 = vector.multi_reduction <maximumf>, %382, %cst_92 [0] : vector<32x128xf32> to vector<128xf32>
    %384 = vector.shape_cast %383 : vector<128xf32> to vector<1x128xf32>
    %385 = vector.broadcast %384 : vector<1x128xf32> to vector<32x128xf32>
    %386 = arith.cmpf oeq, %382, %385 : vector<32x128xf32>
    %cst_93 = arith.constant 1.000000e+09 : f32
    %387 = vector.broadcast %cst_93 : f32 to vector<32x128xf32>
    %388 = arith.select %386, %190, %387 : vector<32x128xi1>, vector<32x128xf32>
    %cst_94 = arith.constant dense<0x7F800000> : vector<128xf32>
    %389 = vector.multi_reduction <minimumf>, %388, %cst_94 [0] : vector<32x128xf32> to vector<128xf32>
    %390 = vector.shape_cast %389 : vector<128xf32> to vector<1x128xf32>
    %391 = arith.fptosi %390 : vector<1x128xf32> to vector<1x128xi32>
    %392 = vector.extract_strided_slice %183 {offsets = [11, 0], sizes = [1, 128], strides = [1, 1]} : vector<16x128xf32> to vector<1x128xf32>
    %393 = arith.addf %384, %392 : vector<1x128xf32>
    %394 = tpu.concatenate %375, %393 in 0 : vector<1x128xf32>, vector<1x128xf32> -> vector<2x128xf32>
    %c10 = arith.constant 10 : index
    %c0_95 = arith.constant 0 : index
    %395 = vector.load %arg8[%c10, %c0_95] : memref<16x128xf32, #tpu.memory_space<vmem>>, vector<2x128xf32>
    tpu.vector_store %arg8[%c10, %c0_95], %394 {strides = array<i32>} : memref<16x128xf32, #tpu.memory_space<vmem>>, vector<2x128xf32>,
    %396 = tpu.concatenate %373, %391 in 0 : vector<1x128xi32>, vector<1x128xi32> -> vector<2x128xi32>
    %c10_96 = arith.constant 10 : index
    %c0_97 = arith.constant 0 : index
    %397 = vector.load %arg9[%c10_96, %c0_97] : memref<16x128xi32, #tpu.memory_space<vmem>>, vector<2x128xi32>
    tpu.vector_store %arg9[%c10_96, %c0_97], %396 {strides = array<i32>} : memref<16x128xi32, #tpu.memory_space<vmem>>, vector<2x128xi32>,
    %398 = vector.extract_strided_slice %394 {offsets = [0, 0], sizes = [1, 128], strides = [1, 1]} : vector<2x128xf32> to vector<1x128xf32>
    %399 = vector.broadcast %398 : vector<1x128xf32> to vector<32x128xf32>
    %400 = arith.mulf %189, %399 : vector<32x128xf32>
    %cst_98 = arith.constant dense<0.000000e+00> : vector<32xf32>
    %401 = vector.multi_reduction <add>, %400, %cst_98 [1] : vector<32x128xf32> to vector<32xf32>
    %402 = vector.shape_cast %401 : vector<32xf32> to vector<32x1xf32>
    %403 = vector.broadcast %402 : vector<32x1xf32> to vector<32x128xf32>
    %404 = arith.addf %403, %184 : vector<32x128xf32>
    %cst_99 = arith.constant dense<0xFF800000> : vector<128xf32>
    %405 = vector.multi_reduction <maximumf>, %404, %cst_99 [0] : vector<32x128xf32> to vector<128xf32>
    %406 = vector.shape_cast %405 : vector<128xf32> to vector<1x128xf32>
    %407 = vector.broadcast %406 : vector<1x128xf32> to vector<32x128xf32>
    %408 = arith.cmpf oeq, %404, %407 : vector<32x128xf32>
    %cst_100 = arith.constant 1.000000e+09 : f32
    %409 = vector.broadcast %cst_100 : f32 to vector<32x128xf32>
    %410 = arith.select %408, %190, %409 : vector<32x128xi1>, vector<32x128xf32>
    %cst_101 = arith.constant dense<0x7F800000> : vector<128xf32>
    %411 = vector.multi_reduction <minimumf>, %410, %cst_101 [0] : vector<32x128xf32> to vector<128xf32>
    %412 = vector.shape_cast %411 : vector<128xf32> to vector<1x128xf32>
    %413 = arith.fptosi %412 : vector<1x128xf32> to vector<1x128xi32>
    %414 = vector.extract_strided_slice %183 {offsets = [12, 0], sizes = [1, 128], strides = [1, 1]} : vector<16x128xf32> to vector<1x128xf32>
    %415 = arith.addf %406, %414 : vector<1x128xf32>
    %416 = vector.extract_strided_slice %394 {offsets = [1, 0], sizes = [1, 128], strides = [1, 1]} : vector<2x128xf32> to vector<1x128xf32>
    %417 = vector.broadcast %416 : vector<1x128xf32> to vector<32x128xf32>
    %418 = arith.mulf %189, %417 : vector<32x128xf32>
    %cst_102 = arith.constant dense<0.000000e+00> : vector<32xf32>
    %419 = vector.multi_reduction <add>, %418, %cst_102 [1] : vector<32x128xf32> to vector<32xf32>
    %420 = vector.shape_cast %419 : vector<32xf32> to vector<32x1xf32>
    %421 = vector.broadcast %420 : vector<32x1xf32> to vector<32x128xf32>
    %422 = arith.addf %421, %184 : vector<32x128xf32>
    %cst_103 = arith.constant dense<0xFF800000> : vector<128xf32>
    %423 = vector.multi_reduction <maximumf>, %422, %cst_103 [0] : vector<32x128xf32> to vector<128xf32>
    %424 = vector.shape_cast %423 : vector<128xf32> to vector<1x128xf32>
    %425 = vector.broadcast %424 : vector<1x128xf32> to vector<32x128xf32>
    %426 = arith.cmpf oeq, %422, %425 : vector<32x128xf32>
    %cst_104 = arith.constant 1.000000e+09 : f32
    %427 = vector.broadcast %cst_104 : f32 to vector<32x128xf32>
    %428 = arith.select %426, %190, %427 : vector<32x128xi1>, vector<32x128xf32>
    %cst_105 = arith.constant dense<0x7F800000> : vector<128xf32>
    %429 = vector.multi_reduction <minimumf>, %428, %cst_105 [0] : vector<32x128xf32> to vector<128xf32>
    %430 = vector.shape_cast %429 : vector<128xf32> to vector<1x128xf32>
    %431 = arith.fptosi %430 : vector<1x128xf32> to vector<1x128xi32>
    %432 = vector.extract_strided_slice %183 {offsets = [13, 0], sizes = [1, 128], strides = [1, 1]} : vector<16x128xf32> to vector<1x128xf32>
    %433 = arith.addf %424, %432 : vector<1x128xf32>
    %434 = tpu.concatenate %415, %433 in 0 : vector<1x128xf32>, vector<1x128xf32> -> vector<2x128xf32>
    %c12 = arith.constant 12 : index
    %c0_106 = arith.constant 0 : index
    %435 = vector.load %arg8[%c12, %c0_106] : memref<16x128xf32, #tpu.memory_space<vmem>>, vector<2x128xf32>
    tpu.vector_store %arg8[%c12, %c0_106], %434 {strides = array<i32>} : memref<16x128xf32, #tpu.memory_space<vmem>>, vector<2x128xf32>,
    %436 = tpu.concatenate %413, %431 in 0 : vector<1x128xi32>, vector<1x128xi32> -> vector<2x128xi32>
    %c12_107 = arith.constant 12 : index
    %c0_108 = arith.constant 0 : index
    %437 = vector.load %arg9[%c12_107, %c0_108] : memref<16x128xi32, #tpu.memory_space<vmem>>, vector<2x128xi32>
    tpu.vector_store %arg9[%c12_107, %c0_108], %436 {strides = array<i32>} : memref<16x128xi32, #tpu.memory_space<vmem>>, vector<2x128xi32>,
    %438 = vector.extract_strided_slice %434 {offsets = [0, 0], sizes = [1, 128], strides = [1, 1]} : vector<2x128xf32> to vector<1x128xf32>
    %439 = vector.broadcast %438 : vector<1x128xf32> to vector<32x128xf32>
    %440 = arith.mulf %189, %439 : vector<32x128xf32>
    %cst_109 = arith.constant dense<0.000000e+00> : vector<32xf32>
    %441 = vector.multi_reduction <add>, %440, %cst_109 [1] : vector<32x128xf32> to vector<32xf32>
    %442 = vector.shape_cast %441 : vector<32xf32> to vector<32x1xf32>
    %443 = vector.broadcast %442 : vector<32x1xf32> to vector<32x128xf32>
    %444 = arith.addf %443, %184 : vector<32x128xf32>
    %cst_110 = arith.constant dense<0xFF800000> : vector<128xf32>
    %445 = vector.multi_reduction <maximumf>, %444, %cst_110 [0] : vector<32x128xf32> to vector<128xf32>
    %446 = vector.shape_cast %445 : vector<128xf32> to vector<1x128xf32>
    %447 = vector.broadcast %446 : vector<1x128xf32> to vector<32x128xf32>
    %448 = arith.cmpf oeq, %444, %447 : vector<32x128xf32>
    %cst_111 = arith.constant 1.000000e+09 : f32
    %449 = vector.broadcast %cst_111 : f32 to vector<32x128xf32>
    %450 = arith.select %448, %190, %449 : vector<32x128xi1>, vector<32x128xf32>
    %cst_112 = arith.constant dense<0x7F800000> : vector<128xf32>
    %451 = vector.multi_reduction <minimumf>, %450, %cst_112 [0] : vector<32x128xf32> to vector<128xf32>
    %452 = vector.shape_cast %451 : vector<128xf32> to vector<1x128xf32>
    %453 = arith.fptosi %452 : vector<1x128xf32> to vector<1x128xi32>
    %454 = vector.extract_strided_slice %183 {offsets = [14, 0], sizes = [1, 128], strides = [1, 1]} : vector<16x128xf32> to vector<1x128xf32>
    %455 = arith.addf %446, %454 : vector<1x128xf32>
    %456 = vector.extract_strided_slice %434 {offsets = [1, 0], sizes = [1, 128], strides = [1, 1]} : vector<2x128xf32> to vector<1x128xf32>
    %457 = vector.broadcast %456 : vector<1x128xf32> to vector<32x128xf32>
    %458 = arith.mulf %189, %457 : vector<32x128xf32>
    %cst_113 = arith.constant dense<0.000000e+00> : vector<32xf32>
    %459 = vector.multi_reduction <add>, %458, %cst_113 [1] : vector<32x128xf32> to vector<32xf32>
    %460 = vector.shape_cast %459 : vector<32xf32> to vector<32x1xf32>
    %461 = vector.broadcast %460 : vector<32x1xf32> to vector<32x128xf32>
    %462 = arith.addf %461, %184 : vector<32x128xf32>
    %cst_114 = arith.constant dense<0xFF800000> : vector<128xf32>
    %463 = vector.multi_reduction <maximumf>, %462, %cst_114 [0] : vector<32x128xf32> to vector<128xf32>
    %464 = vector.shape_cast %463 : vector<128xf32> to vector<1x128xf32>
    %465 = vector.broadcast %464 : vector<1x128xf32> to vector<32x128xf32>
    %466 = arith.cmpf oeq, %462, %465 : vector<32x128xf32>
    %cst_115 = arith.constant 1.000000e+09 : f32
    %467 = vector.broadcast %cst_115 : f32 to vector<32x128xf32>
    %468 = arith.select %466, %190, %467 : vector<32x128xi1>, vector<32x128xf32>
    %cst_116 = arith.constant dense<0x7F800000> : vector<128xf32>
    %469 = vector.multi_reduction <minimumf>, %468, %cst_116 [0] : vector<32x128xf32> to vector<128xf32>
    %470 = vector.shape_cast %469 : vector<128xf32> to vector<1x128xf32>
    %471 = arith.fptosi %470 : vector<1x128xf32> to vector<1x128xi32>
    %472 = vector.extract_strided_slice %183 {offsets = [15, 0], sizes = [1, 128], strides = [1, 1]} : vector<16x128xf32> to vector<1x128xf32>
    %473 = arith.addf %464, %472 : vector<1x128xf32>
    %474 = tpu.concatenate %455, %473 in 0 : vector<1x128xf32>, vector<1x128xf32> -> vector<2x128xf32>
    %c14 = arith.constant 14 : index
    %c0_117 = arith.constant 0 : index
    %475 = vector.load %arg8[%c14, %c0_117] : memref<16x128xf32, #tpu.memory_space<vmem>>, vector<2x128xf32>
    tpu.vector_store %arg8[%c14, %c0_117], %474 {strides = array<i32>} : memref<16x128xf32, #tpu.memory_space<vmem>>, vector<2x128xf32>,
    %476 = tpu.concatenate %453, %471 in 0 : vector<1x128xi32>, vector<1x128xi32> -> vector<2x128xi32>
    %c14_118 = arith.constant 14 : index
    %c0_119 = arith.constant 0 : index
    %477 = vector.load %arg9[%c14_118, %c0_119] : memref<16x128xi32, #tpu.memory_space<vmem>>, vector<2x128xi32>
    tpu.vector_store %arg9[%c14_118, %c0_119], %476 {strides = array<i32>} : memref<16x128xi32, #tpu.memory_space<vmem>>, vector<2x128xi32>,
    return
  }
  func.func @transform_0(%arg0: i32) -> (i32, i32) {
    %c0_i32 = arith.constant 0 : i32
    %c0_i32_0 = arith.constant 0 : i32
    %c0_i32_1 = arith.constant 0 : i32
    return %c0_i32, %c0_i32_0 : i32, i32
  }
  func.func @transform_1(%arg0: i32) -> (i32, i32) {
    %c0_i32 = arith.constant 0 : i32
    %c0_i32_0 = arith.constant 0 : i32
    %c0_i32_1 = arith.constant 0 : i32
    return %c0_i32, %c0_i32_0 : i32, i32
  }
  func.func @transform_2(%arg0: i32) -> (i32, i32) {
    %c0_i32 = arith.constant 0 : i32
    %c0_i32_0 = arith.constant 0 : i32
    %c0_i32_1 = arith.constant 0 : i32
    return %c0_i32, %c0_i32_0 : i32, i32
  }
  func.func @transform_3(%arg0: i32) -> (i32, i32) {
    %c0_i32 = arith.constant 0 : i32
    %c0_i32_0 = arith.constant 0 : i32
    %c0_i32_1 = arith.constant 0 : i32
    return %c0_i32, %c0_i32_0 : i32, i32
  }
  func.func @transform_4(%arg0: i32) -> (i32, i32) {
    %c0_i32 = arith.constant 0 : i32
    %c0_i32_0 = arith.constant 0 : i32
    %c0_i32_1 = arith.constant 0 : i32
    return %c0_i32, %c0_i32_0 : i32, i32
  }
  func.func @transform_5(%arg0: i32) -> (i32, i32) {
    %c0_i32 = arith.constant 0 : i32
    %c0_i32_0 = arith.constant 0 : i32
    %c0_i32_1 = arith.constant 0 : i32
    return %c0_i32, %c0_i32_0 : i32, i32
  }
  func.func @transform_6(%arg0: i32) -> (i32, i32) {
    %c0_i32 = arith.constant 0 : i32
    %c0_i32_0 = arith.constant 0 : i32
    %c0_i32_1 = arith.constant 0 : i32
    return %c0_i32, %c0_i32_0 : i32, i32
  }
  func.func @transform_7(%arg0: i32) -> (i32, i32) {
    %c0_i32 = arith.constant 0 : i32
    %c0_i32_0 = arith.constant 0 : i32
    %c0_i32_1 = arith.constant 0 : i32
    return %c0_i32, %c0_i32_0 : i32, i32
  }
  func.func @transform_8(%arg0: i32) -> (i32, i32) {
    %c0_i32 = arith.constant 0 : i32
    %c0_i32_0 = arith.constant 0 : i32
    %c0_i32_1 = arith.constant 0 : i32
    return %c0_i32, %c0_i32_0 : i32, i32
  }
}

module attributes {stable_mosaic.version = 11 : i64} {
  func.func @_gaz_sum_kernel(%arg0: i32, %arg1: memref<4x16x128xf32, #tpu.memory_space<vmem>>, %arg2: memref<16x128xf32, #tpu.memory_space<vmem>>) attributes {dimension_semantics = [#tpu.dimension_semantics<arbitrary>], iteration_bounds = array<i64: 1>, scalar_prefetch = 0 : i64, scratch_operands = 0 : i64, tpu.core_type = #tpu.core_type<tc>, window_params = [{pipeline_mode = #tpu.pipeline_mode<synchronous>, transform_indices = @transform_0, window_bounds = array<i64: 4, 16, 128>}, {pipeline_mode = #tpu.pipeline_mode<synchronous>, transform_indices = @transform_1, window_bounds = array<i64: 16, 128>}]} {
    %c0 = arith.constant 0 : index
    %c0_0 = arith.constant 0 : index
    %c0_1 = arith.constant 0 : index
    %0 = vector.load %arg1[%c0, %c0_0, %c0_1] : memref<4x16x128xf32, #tpu.memory_space<vmem>>, vector<1x16x128xf32>
    %1 = vector.shape_cast %0 : vector<1x16x128xf32> to vector<16x128xf32>
    %c1 = arith.constant 1 : index
    %c0_2 = arith.constant 0 : index
    %c0_3 = arith.constant 0 : index
    %2 = vector.load %arg1[%c1, %c0_2, %c0_3] : memref<4x16x128xf32, #tpu.memory_space<vmem>>, vector<1x16x128xf32>
    %3 = vector.shape_cast %2 : vector<1x16x128xf32> to vector<16x128xf32>
    %4 = arith.addf %1, %3 : vector<16x128xf32>
    %c2 = arith.constant 2 : index
    %c0_4 = arith.constant 0 : index
    %c0_5 = arith.constant 0 : index
    %5 = vector.load %arg1[%c2, %c0_4, %c0_5] : memref<4x16x128xf32, #tpu.memory_space<vmem>>, vector<1x16x128xf32>
    %6 = vector.shape_cast %5 : vector<1x16x128xf32> to vector<16x128xf32>
    %7 = arith.addf %4, %6 : vector<16x128xf32>
    %c3 = arith.constant 3 : index
    %c0_6 = arith.constant 0 : index
    %c0_7 = arith.constant 0 : index
    %8 = vector.load %arg1[%c3, %c0_6, %c0_7] : memref<4x16x128xf32, #tpu.memory_space<vmem>>, vector<1x16x128xf32>
    %9 = vector.shape_cast %8 : vector<1x16x128xf32> to vector<16x128xf32>
    %10 = arith.addf %7, %9 : vector<16x128xf32>
    %c0_8 = arith.constant 0 : index
    %c0_9 = arith.constant 0 : index
    %11 = vector.load %arg2[%c0_8, %c0_9] : memref<16x128xf32, #tpu.memory_space<vmem>>, vector<16x128xf32>
    tpu.vector_store %arg2[%c0_8, %c0_9], %10 {strides = array<i32>} : memref<16x128xf32, #tpu.memory_space<vmem>>, vector<16x128xf32>,
    return
  }
  func.func @transform_0(%arg0: i32) -> (i32, i32, i32) {
    %c0_i32 = arith.constant 0 : i32
    %c0_i32_0 = arith.constant 0 : i32
    %c0_i32_1 = arith.constant 0 : i32
    %c0_i32_2 = arith.constant 0 : i32
    return %c0_i32, %c0_i32_0, %c0_i32_1 : i32, i32, i32
  }
  func.func @transform_1(%arg0: i32) -> (i32, i32) {
    %c0_i32 = arith.constant 0 : i32
    %c0_i32_0 = arith.constant 0 : i32
    %c0_i32_1 = arith.constant 0 : i32
    return %c0_i32, %c0_i32_0 : i32, i32
  }
}

</mosaic_0001>

<llo_original>
// kernel: custom-call.13
$region0: #{custom-call.13}
  %s0 = inlined_call_operand.vmem [shape: s32[7,2], index: 0, kind: output, shape index: {}]

// kernel: gazlstm_forward.2
$region0: #{gazlstm_forward.2}
  #allocation0 [shape = 'u32[]', space=smem, size = 0x4, offset = 0x4, fixed_abs, tag = 'smem constant byte address 0x4 - core index']
  #allocation1 [shape = 'u32[144,128]{1,0:T(1,128)}', space=vmem, size = 0x12000, scoped, tag = 'internal scratch']
  %s0 = inlined_call_operand.vmem [shape: f32[4,16,128], index: 0, kind: input, shape index: {}]
  %s1 = inlined_call_operand.hbm [shape: f32[16,128], index: 1, kind: output, shape index: {}]
  %s2 = sld [smem:[#allocation0]]
  $region14: #{gazlstm_forward.2} parent=0
    _
  %s4 = ssub.s32 1, %s2
  %s5 = scalar_select 0, %s4, %s2
  $region1: #{gazlstm_forward.2} parent=0
    #allocation2 [shape = 'u8[8192]{0}', space=vmem, size = 0x2000, scoped, tag = 'output window, operand 0, single buffered']
    #allocation3 [shape = 's32[1]{0}', space=sflag, size = 0x4, scoped, tag = 'scoped memory for gazlstm_forward.2']
    %6 = vsyncpa [#allocation3], 0
    // Predicated region
    $region2: #{gazlstm_forward.2} parent=1 // pred_check
      _
    $region3: #{gazlstm_forward.2} parent=1 // pred_check_branch
      %8 = sbr.rel (0) target = $region5
    $region4: #{gazlstm_forward.2} parent=1 // pred_region
      _
    $region5: #{gazlstm_forward.2} parent=1 // pred_fallthru
      _
    %v9 = vld [vmem:[%s0] sm:$0xff]
    %v10 = vld [vmem:[%s0 + $0x8] sm:$0xff]
    %s11 = scalar_lea.vmem %s0, 16
    %v12 = vld [vmem:[%s11] sm:$0xff]
    %v13 = vld [vmem:[%s11 + $0x8] sm:$0xff]
    %v14 = vadd.f32 %v9, %v12
    %v15 = vadd.f32 %v10, %v13
    %s16 = scalar_lea.vmem %s0, 32
    %v17 = vld [vmem:[%s16] sm:$0xff]
    %v18 = vld [vmem:[%s16 + $0x8] sm:$0xff]
    %v19 = vadd.f32 %v14, %v17
    %v20 = vadd.f32 %v15, %v18
    %s21 = scalar_lea.vmem %s0, 48
    %v22 = vld [vmem:[%s21] sm:$0xff]
    %v23 = vld [vmem:[%s21 + $0x8] sm:$0xff]
    %v24 = vadd.f32 %v19, %v22
    %v25 = vadd.f32 %v20, %v23
    %26 = vst [vmem:[#allocation2] sm:$0xff] %v24
    %27 = vst [vmem:[#allocation2 + $0x8] sm:$0xff] %v25
    // Predicated region
    $region6: #{gazlstm_forward.2} parent=1 // pred_check
      _
    $region7: #{gazlstm_forward.2} parent=1 // pred_check_branch
      %29 = sbr.rel (0) target = $region9
    $region8: #{gazlstm_forward.2} parent=1 // pred_region
      %s31 = ssub.s32 256, 256
      %32 = vsyncadd [#allocation3], %s31
      %s33 = sshll.u32 [#allocation2], 4
      %s34 = int_to_ptr.vmem [resolvable:$true] %s33
      %39 = dma.vmem_to_hbm [thread:$0]  %s34, 256, %s1, [#allocation3], 128, 128, 8
    $region9: #{gazlstm_forward.2} parent=1 // pred_fallthru
      _
    // Predicated region
    $region10: #{gazlstm_forward.2} parent=1 // pred_check
      _
    $region11: #{gazlstm_forward.2} parent=1 // pred_check_branch
      %41 = sbr.rel (0) target = $region13
    $region12: #{gazlstm_forward.2} parent=1 // pred_region
      %42 = dma.done [#allocation3], 256
    $region13: #{gazlstm_forward.2} parent=1 // pred_fallthru
      _
    %43 = vsyncpa [#allocation3], 1

// kernel: gazlstm_forward.3
$region0: #{gazlstm_forward.3}
  #allocation0 [shape = 'u32[]', space=smem, size = 0x4, offset = 0x4, fixed_abs, tag = 'smem constant byte address 0x4 - core index']
  #allocation1 [shape = 'u32[144,128]{1,0:T(1,128)}', space=vmem, size = 0x12000, scoped, tag = 'internal scratch']
  %s0 = inlined_call_operand.vmem [shape: f32[16,128], index: 0, kind: input, shape index: {}]
  %s1 = inlined_call_operand.vmem [shape: f32[128,256], index: 1, kind: input, shape index: {}]
  %s2 = inlined_call_operand.vmem [shape: f32[64,256], index: 2, kind: input, shape index: {}]
  %s3 = inlined_call_operand.vmem [shape: f32[1,256], index: 3, kind: input, shape index: {}]
  %s4 = inlined_call_operand.vmem [shape: f32[64,128], index: 4, kind: input, shape index: {}]
  %s5 = inlined_call_operand.vmem [shape: f32[1,128], index: 5, kind: input, shape index: {}]
  %s6 = inlined_call_operand.vmem [shape: f32[32,128], index: 6, kind: input, shape index: {}]
  %s7 = inlined_call_operand.vmem [shape: f32[16,128], index: 7, kind: output, shape index: {0}]
  %s8 = inlined_call_operand.vmem [shape: s32[16,128], index: 8, kind: output, shape index: {1}]
  %9 = xla_tuple %s7, %s8
  %s10 = sld [smem:[#allocation0]]
  $region46: #{gazlstm_forward.3} parent=0
    _
  %s12 = ssub.s32 1, %s10
  %s13 = scalar_select 0, %s12, %s10
  // Predicated region
  $region2: #{gazlstm_forward.3} parent=0 // pred_check
    _
  $region3: #{gazlstm_forward.3} parent=0 // pred_check_branch
    %15 = sbr.rel (0) target = $region5
  $region4: #{gazlstm_forward.3} parent=0 // pred_region
    _
  $region5: #{gazlstm_forward.3} parent=0 // pred_fallthru
    _
  // Predicated region
  $region6: #{gazlstm_forward.3} parent=0 // pred_check
    _
  $region7: #{gazlstm_forward.3} parent=0 // pred_check_branch
    %17 = sbr.rel (0) target = $region9
  $region8: #{gazlstm_forward.3} parent=0 // pred_region
    _
  $region9: #{gazlstm_forward.3} parent=0 // pred_fallthru
    _
  // Predicated region
  $region10: #{gazlstm_forward.3} parent=0 // pred_check
    _
  $region11: #{gazlstm_forward.3} parent=0 // pred_check_branch
    %19 = sbr.rel (0) target = $region13
  $region12: #{gazlstm_forward.3} parent=0 // pred_region
    _
  $region13: #{gazlstm_forward.3} parent=0 // pred_fallthru
    _
  // Predicated region
  $region14: #{gazlstm_forward.3} parent=0 // pred_check
    _
  $region15: #{gazlstm_forward.3} parent=0 // pred_check_branch
    %21 = sbr.rel (0) target = $region17
  $region16: #{gazlstm_forward.3} parent=0 // pred_region
    _
  $region17: #{gazlstm_forward.3} parent=0 // pred_fallthru
    _
  // Predicated region
  $region18: #{gazlstm_forward.3} parent=0 // pred_check
    _
  $region19: #{gazlstm_forward.3} parent=0 // pred_check_branch
    %23 = sbr.rel (0) target = $region21
  $region20: #{gazlstm_forward.3} parent=0 // pred_region
    _
  $region21: #{gazlstm_forward.3} parent=0 // pred_fallthru
    _
  // Predicated region
  $region22: #{gazlstm_forward.3} parent=0 // pred_check
    _
  $region23: #{gazlstm_forward.3} parent=0 // pred_check_branch
    %25 = sbr.rel (0) target = $region25
  $region24: #{gazlstm_forward.3} parent=0 // pred_region
    _
  $region25: #{gazlstm_forward.3} parent=0 // pred_fallthru
    _
  // Predicated region
  $region26: #{gazlstm_forward.3} parent=0 // pred_check
    _
  $region27: #{gazlstm_forward.3} parent=0 // pred_check_branch
    %27 = sbr.rel (0) target = $region29
  $region28: #{gazlstm_forward.3} parent=0 // pred_region
    _
  $region29: #{gazlstm_forward.3} parent=0 // pred_fallthru
    _
  %v28 = vld [vmem:[%s0] sm:$0xff]
  %v29 = vld [vmem:[%s0 + $0x8] sm:$0xff]
  %v30 = vld [vmem:[%s1] sm:$0xff]
  %v31 = vld [vmem:[%s1 + $0x8] sm:$0xff]
  %v32 = vld [vmem:[%s1 + $0x10] sm:$0xff]
  %v33 = vld [vmem:[%s1 + $0x18] sm:$0xff]
  %v34 = vld [vmem:[%s1 + $0x20] sm:$0xff]
  %v35 = vld [vmem:[%s1 + $0x28] sm:$0xff]
  %v36 = vld [vmem:[%s1 + $0x30] sm:$0xff]
  %v37 = vld [vmem:[%s1 + $0x38] sm:$0xff]
  %v38 = vld [vmem:[%s1 + $0x40] sm:$0xff]
  %v39 = vld [vmem:[%s1 + $0x48] sm:$0xff]
  %v40 = vld [vmem:[%s1 + $0x50] sm:$0xff]
  %v41 = vld [vmem:[%s1 + $0x58] sm:$0xff]
  %v42 = vld [vmem:[%s1 + $0x60] sm:$0xff]
  %v43 = vld [vmem:[%s1 + $0x68] sm:$0xff]
  %v44 = vld [vmem:[%s1 + $0x70] sm:$0xff]
  %v45 = vld [vmem:[%s1 + $0x78] sm:$0xff]
  %v46 = vld [vmem:[%s1 + $0x80] sm:$0xff]
  %v47 = vld [vmem:[%s1 + $0x88] sm:$0xff]
  %v48 = vld [vmem:[%s1 + $0x90] sm:$0xff]
  %v49 = vld [vmem:[%s1 + $0x98] sm:$0xff]
  %v50 = vld [vmem:[%s1 + $0xa0] sm:$0xff]
  %v51 = vld [vmem:[%s1 + $0xa8] sm:$0xff]
  %v52 = vld [vmem:[%s1 + $0xb0] sm:$0xff]
  %v53 = vld [vmem:[%s1 + $0xb8] sm:$0xff]
  %v54 = vld [vmem:[%s1 + $0xc0] sm:$0xff]
  %v55 = vld [vmem:[%s1 + $0xc8] sm:$0xff]
  %v56 = vld [vmem:[%s1 + $0xd0] sm:$0xff]
  %v57 = vld [vmem:[%s1 + $0xd8] sm:$0xff]
  %v58 = vld [vmem:[%s1 + $0xe0] sm:$0xff]
  %v59 = vld [vmem:[%s1 + $0xe8] sm:$0xff]
  %v60 = vld [vmem:[%s1 + $0xf0] sm:$0xff]
  %v61 = vld [vmem:[%s1 + $0xf8] sm:$0xff]
  %v62 = vld [vmem:[%s3] sm:$0x3]
  %v64 = vlaneseq
  %v65 = vshrl.u32 %v64, 7
  %v66 = vsub.s32 0, %v65
  %v67 = vrot.slane %v62, %v66
  %v68 = vlaneseq
  %v69 = vshrl.u32 %v68, 7
  %v70 = vsub.s32 1, %v69
  %v71 = vrot.slane %v62, %v70
  %74 = vmatprep.subr.mxu0 %v31
  %75 = vmatpush1.msra.mxu0 %v30
  %76 = vmatprep.subr.mxu0 %v33
  %77 = vmatpush1.msra.mxu0 %v32
  %78 = vmatprep.subr.mxu0 %v35
  %79 = vmatpush1.msra.mxu0 %v34
  %80 = vmatprep.subr.mxu0 %v37
  %81 = vmatpush1.msra.mxu0 %v36
  %82 = vmatprep.subr.mxu0 %v39
  %83 = vmatpush1.msra.mxu0 %v38
  %84 = vmatprep.subr.mxu0 %v41
  %85 = vmatpush1.msra.mxu0 %v40
  %86 = vmatprep.subr.mxu0 %v43
  %87 = vmatpush1.msra.mxu0 %v42
  %88 = vmatprep.subr.mxu0 %v45
  %89 = vmatpush1.msra.mxu0 %v44
  %90 = vmatprep.subr.mxu0 %v47
  %91 = vmatpush1.msra.mxu0 %v46
  %92 = vmatprep.subr.mxu0 %v49
  %93 = vmatpush1.msra.mxu0 %v48
  %94 = vmatprep.subr.mxu0 %v51
  %95 = vmatpush1.msra.mxu0 %v50
  %96 = vmatprep.subr.mxu0 %v53
  %97 = vmatpush1.msra.mxu0 %v52
  %98 = vmatprep.subr.mxu0 %v55
  %99 = vmatpush1.msra.mxu0 %v54
  %100 = vmatprep.subr.mxu0 %v57
  %101 = vmatpush1.msra.mxu0 %v56
  %102 = vmatprep.subr.mxu0 %v59
  %103 = vmatpush1.msra.mxu0 %v58
  %104 = vmatprep.subr.mxu0 %v61
  %105 = vmatpush1.msra.mxu0 %v60
  %106 = vmatprep.subr.mxu0 0.0
  %107 = vmatpush1.msra.mxu0 0.0
  %108 = vmatprep.subr.mxu0 0.0
  %109 = vmatpush1.msra.mxu0 0.0
  %110 = vmatprep.subr.mxu0 0.0
  %111 = vmatpush1.msra.mxu0 0.0
  %112 = vmatprep.subr.mxu0 0.0
  %113 = vmatpush1.msra.mxu0 0.0
  %114 = vmatprep.subr.mxu0 0.0
  %115 = vmatpush1.msra.mxu0 0.0
  %116 = vmatprep.subr.mxu0 0.0
  %117 = vmatpush1.msra.mxu0 0.0
  %118 = vmatprep.subr.mxu0 0.0
  %119 = vmatpush1.msra.mxu0 0.0
  %120 = vmatprep.subr.mxu0 0.0
  %121 = vmatpush1.msra.mxu0 0.0
  %122 = vmatprep.subr.mxu0 0.0
  %123 = vmatpush1.msra.mxu0 0.0
  %124 = vmatprep.subr.mxu0 0.0
  %125 = vmatpush1.msra.mxu0 0.0
  %126 = vmatprep.subr.mxu0 0.0
  %127 = vmatpush1.msra.mxu0 0.0
  %128 = vmatprep.subr.mxu0 0.0
  %129 = vmatpush1.msra.mxu0 0.0
  %130 = vmatprep.subr.mxu0 0.0
  %131 = vmatpush1.msra.mxu0 0.0
  %132 = vmatprep.subr.mxu0 0.0
  %133 = vmatpush1.msra.mxu0 0.0
  %134 = vmatprep.subr.mxu0 0.0
  %135 = vmatpush1.msra.mxu0 0.0
  %136 = vmatprep.subr.mxu0 0.0
  %137 = vmatpush1.msra.mxu0 0.0
  %138 = vmatprep.mubr.f32.mxu0 0.0
  %139 = vmatmul.mubr.f32.gmra.mrb[0].mxu0 %v28
  %v140 = vpop.f32.mrb[0].mxu0
  %v141 = vadd.f32 %v67, %v140
  %v142 = vpop.f32.mrb[0].mxu0
  %v143 = vadd.f32 %v71, %v142
  %144 = vmatprep.mubr.f32.mxu0 0.0
  %145 = vmatmul.mubr.f32.gmra.mrb[0].mxu0 %v29
  %v146 = vpop.f32.mrb[0].mxu0
  %v147 = vadd.f32 %v67, %v146
  %v148 = vpop.f32.mrb[0].mxu0
  %v149 = vadd.f32 %v71, %v148
  %150 = vdwg.mxu0
  %v151 = vld [vmem:[%s2] sm:$0xff]
  %v152 = vld [vmem:[%s2 + $0x8] sm:$0xff]
  %v153 = vld [vmem:[%s2 + $0x10] sm:$0xff]
  %v154 = vld [vmem:[%s2 + $0x18] sm:$0xff]
  %v155 = vld [vmem:[%s2 + $0x20] sm:$0xff]
  %v156 = vld [vmem:[%s2 + $0x28] sm:$0xff]
  %v157 = vld [vmem:[%s2 + $0x30] sm:$0xff]
  %v158 = vld [vmem:[%s2 + $0x38] sm:$0xff]
  %v159 = vld [vmem:[%s2 + $0x40] sm:$0xff]
  %v160 = vld [vmem:[%s2 + $0x48] sm:$0xff]
  %v161 = vld [vmem:[%s2 + $0x50] sm:$0xff]
  %v162 = vld [vmem:[%s2 + $0x58] sm:$0xff]
  %v163 = vld [vmem:[%s2 + $0x60] sm:$0xff]
  %v164 = vld [vmem:[%s2 + $0x68] sm:$0xff]
  %v165 = vld [vmem:[%s2 + $0x70] sm:$0xff]
  %v166 = vld [vmem:[%s2 + $0x78] sm:$0xff]
  %vm167 = vcmask 523264
  %v169 = vsel %vm167, 0.0, 0
  %171 = vmatprep.subr.mxu0 %v152
  %172 = vmatpush1.msra.mxu0 %v151
  %173 = vmatprep.subr.mxu0 %v154
  %174 = vmatpush1.msra.mxu0 %v153
  %175 = vmatprep.subr.mxu0 %v156
  %176 = vmatpush1.msra.mxu0 %v155
  %177 = vmatprep.subr.mxu0 %v158
  %178 = vmatpush1.msra.mxu0 %v157
  %179 = vmatprep.subr.mxu0 %v160
  %180 = vmatpush1.msra.mxu0 %v159
  %181 = vmatprep.subr.mxu0 %v162
  %182 = vmatpush1.msra.mxu0 %v161
  %183 = vmatprep.subr.mxu0 %v164
  %184 = vmatpush1.msra.mxu0 %v163
  %185 = vmatprep.subr.mxu0 %v166
  %186 = vmatpush1.msra.mxu0 %v165
  %187 = vmatprep.subr.mxu0 0.0
  %188 = vmatpush1.msra.mxu0 0.0
  %189 = vmatprep.subr.mxu0 0.0
  %190 = vmatpush1.msra.mxu0 0.0
  %191 = vmatprep.subr.mxu0 0.0
  %192 = vmatpush1.msra.mxu0 0.0
  %193 = vmatprep.subr.mxu0 0.0
  %194 = vmatpush1.msra.mxu0 0.0
  %195 = vmatprep.subr.mxu0 0.0
  %196 = vmatpush1.msra.mxu0 0.0
  %197 = vmatprep.subr.mxu0 0.0
  %198 = vmatpush1.msra.mxu0 0.0
  %199 = vmatprep.subr.mxu0 0.0
  %200 = vmatpush1.msra.mxu0 0.0
  %201 = vmatprep.subr.mxu0 0.0
  %202 = vmatpush1.msra.mxu0 0.0
  %203 = vmatprep.subr.mxu0 0.0
  %204 = vmatpush1.msra.mxu0 0.0
  %205 = vmatprep.subr.mxu0 0.0
  %206 = vmatpush1.msra.mxu0 0.0
  %207 = vmatprep.subr.mxu0 0.0
  %208 = vmatpush1.msra.mxu0 0.0
  %209 = vmatprep.subr.mxu0 0.0
  %210 = vmatpush1.msra.mxu0 0.0
  %211 = vmatprep.subr.mxu0 0.0
  %212 = vmatpush1.msra.mxu0 0.0
  %213 = vmatprep.subr.mxu0 0.0
  %214 = vmatpush1.msra.mxu0 0.0
  %215 = vmatprep.subr.mxu0 0.0
  %216 = vmatpush1.msra.mxu0 0.0
  %217 = vmatprep.subr.mxu0 0.0
  %218 = vmatpush1.msra.mxu0 0.0
  %219 = vmatprep.subr.mxu0 0.0
  %220 = vmatpush1.msra.mxu0 0.0
  %221 = vmatprep.subr.mxu0 0.0
  %222 = vmatpush1.msra.mxu0 0.0
  %223 = vmatprep.subr.mxu0 0.0
  %224 = vmatpush1.msra.mxu0 0.0
  %225 = vmatprep.subr.mxu0 0.0
  %226 = vmatpush1.msra.mxu0 0.0
  %227 = vmatprep.subr.mxu0 0.0
  %228 = vmatpush1.msra.mxu0 0.0
  %229 = vmatprep.subr.mxu0 0.0
  %230 = vmatpush1.msra.mxu0 0.0
  %231 = vmatprep.subr.mxu0 0.0
  %232 = vmatpush1.msra.mxu0 0.0
  %233 = vmatprep.subr.mxu0 0.0
  %234 = vmatpush1.msra.mxu0 0.0
  %235 = vmatprep.mubr.f32.mxu0 0.0
  %236 = vmatmul.mubr.f32.gmra.mrb[0].mxu0 %v169
  %v237 = vpop.f32.mrb[0].mxu0
  %v238 = vadd.f32 0.0, %v237
  %v239 = vpop.f32.mrb[0].mxu0
  %v240 = vadd.f32 0.0, %v239
  %241 = vdwg.mxu0
  %v242 = vadd.f32 %v141, %v238
  %v243 = vadd.f32 %v143, %v240
  %v244 = vxor.u32 %v242, 2147483648
  %v245 = vxor.u32 %v243, 2147483648
  %v246 = vmul.f32 %v244, 1.442695
  %v247 = vpow.pop %v246
  %v248 = vmul.f32 %v245, 1.442695
  %v249 = vpow.pop %v248
  %v250 = vadd.f32 %v247, 1.0
  %v251 = vadd.f32 %v249, 1.0
  %v252 = vrcp.pop %v250
  %v253 = vmul.f32 1.0, %v252
  %v254 = vrcp.pop %v251
  %v255 = vmul.f32 1.0, %v254
  %v256 = vtanh.pop %v243
  %v257 = vmul.f32 %v253, 0.0
  %v258 = vmul.f32 %v253, %v256
  %260 = vrot.lane.b32.xlu0 %v258, 64
  %v261 = vpop.permute.xlu0 %260
  %v263 = vadd.f32 %v257, %v261
  %v264 = vtanh.pop %v263
  %v265 = vmul.f32 %v255, %v264
  %267 = vrot.lane.b32.xlu0 %v265, 64
  %v268 = vpop.permute.xlu0 %267
  %v269 = vsel %vm167, %v268, 0
  %271 = vmatprep.subr.mxu0 %v152
  %272 = vmatpush1.msra.mxu0 %v151
  %273 = vmatprep.subr.mxu0 %v154
  %274 = vmatpush1.msra.mxu0 %v153
  %275 = vmatprep.subr.mxu0 %v156
  %276 = vmatpush1.msra.mxu0 %v155
  %277 = vmatprep.subr.mxu0 %v158
  %278 = vmatpush1.msra.mxu0 %v157
  %279 = vmatprep.subr.mxu0 %v160
  %280 = vmatpush1.msra.mxu0 %v159
  %281 = vmatprep.subr.mxu0 %v162
  %282 = vmatpush1.msra.mxu0 %v161
  %283 = vmatprep.subr.mxu0 %v164
  %284 = vmatpush1.msra.mxu0 %v163
  %285 = vmatprep.subr.mxu0 %v166
  %286 = vmatpush1.msra.mxu0 %v165
  %287 = vmatprep.subr.mxu0 0.0
  %288 = vmatpush1.msra.mxu0 0.0
  %289 = vmatprep.subr.mxu0 0.0
  %290 = vmatpush1.msra.mxu0 0.0
  %291 = vmatprep.subr.mxu0 0.0
  %292 = vmatpush1.msra.mxu0 0.0
  %293 = vmatprep.subr.mxu0 0.0
  %294 = vmatpush1.msra.mxu0 0.0
  %295 = vmatprep.subr.mxu0 0.0
  %296 = vmatpush1.msra.mxu0 0.0
  %297 = vmatprep.subr.mxu0 0.0
  %298 = vmatpush1.msra.mxu0 0.0
  %299 = vmatprep.subr.mxu0 0.0
  %300 = vmatpush1.msra.mxu0 0.0
  %301 = vmatprep.subr.mxu0 0.0
  %302 = vmatpush1.msra.mxu0 0.0
  %303 = vmatprep.subr.mxu0 0.0
  %304 = vmatpush1.msra.mxu0 0.0
  %305 = vmatprep.subr.mxu0 0.0
  %306 = vmatpush1.msra.mxu0 0.0
  %307 = vmatprep.subr.mxu0 0.0
  %308 = vmatpush1.msra.mxu0 0.0
  %309 = vmatprep.subr.mxu0 0.0
  %310 = vmatpush1.msra.mxu0 0.0
  %311 = vmatprep.subr.mxu0 0.0
  %312 = vmatpush1.msra.mxu0 0.0
  %313 = vmatprep.subr.mxu0 0.0
  %314 = vmatpush1.msra.mxu0 0.0
  %315 = vmatprep.subr.mxu0 0.0
  %316 = vmatpush1.msra.mxu0 0.0
  %317 = vmatprep.subr.mxu0 0.0
  %318 = vmatpush1.msra.mxu0 0.0
  %319 = vmatprep.subr.mxu0 0.0
  %320 = vmatpush1.msra.mxu0 0.0
  %321 = vmatprep.subr.mxu0 0.0
  %322 = vmatpush1.msra.mxu0 0.0
  %323 = vmatprep.subr.mxu0 0.0
  %324 = vmatpush1.msra.mxu0 0.0
  %325 = vmatprep.subr.mxu0 0.0
  %326 = vmatpush1.msra.mxu0 0.0
  %327 = vmatprep.subr.mxu0 0.0
  %328 = vmatpush1.msra.mxu0 0.0
  %329 = vmatprep.subr.mxu0 0.0
  %330 = vmatpush1.msra.mxu0 0.0
  %331 = vmatprep.subr.mxu0 0.0
  %332 = vmatpush1.msra.mxu0 0.0
  %333 = vmatprep.subr.mxu0 0.0
  %334 = vmatpush1.msra.mxu0 0.0
  %335 = vmatprep.mubr.f32.mxu0 0.0
  %336 = vmatmul.mubr.f32.gmra.mrb[0].mxu0 %v269
  %v337 = vpop.f32.mrb[0].mxu0
  %v338 = vadd.f32 0.0, %v337
  %v339 = vpop.f32.mrb[0].mxu0
  %v340 = vadd.f32 0.0, %v339
  %341 = vdwg.mxu0
  %v344 = vrot.slane %v338, 6
  %v345 = vrot.slane %v340, 6
  %v348 = vadd.f32 %v141, %v344
  %v349 = vadd.f32 %v143, %v345
  %v350 = vxor.u32 %v348, 2147483648
  %v351 = vxor.u32 %v349, 2147483648
  %v352 = vmul.f32 %v350, 1.442695
  %v353 = vpow.pop %v352
  %v354 = vmul.f32 %v351, 1.442695
  %v355 = vpow.pop %v354
  %v356 = vadd.f32 %v353, 1.0
  %v357 = vadd.f32 %v355, 1.0
  %v358 = vrcp.pop %v356
  %v359 = vmul.f32 1.0, %v358
  %v360 = vrcp.pop %v357
  %v361 = vmul.f32 1.0, %v360
  %v362 = vtanh.pop %v349
  %v364 = vrot.slane %v263, 6
  %v366 = vmul.f32 %v359, %v364
  %v367 = vmul.f32 %v359, %v362
  %369 = vrot.lane.b32.xlu0 %v367, 64
  %v370 = vpop.permute.xlu0 %369
  %v372 = vadd.f32 %v366, %v370
  %v373 = vtanh.pop %v372
  %v374 = vmul.f32 %v361, %v373
  %v376 = vrot.slane %v374, 2
  %377 = vrot.lane.b32.xlu0 %v376, 64
  %v378 = vpop.permute.xlu0 %377
  %v379 = vsel %vm167, %v378, 0
  %381 = vmatprep.subr.mxu0 %v152
  %382 = vmatpush1.msra.mxu0 %v151
  %383 = vmatprep.subr.mxu0 %v154
  %384 = vmatpush1.msra.mxu0 %v153
  %385 = vmatprep.subr.mxu0 %v156
  %386 = vmatpush1.msra.mxu0 %v155
  %387 = vmatprep.subr.mxu0 %v158
  %388 = vmatpush1.msra.mxu0 %v157
  %389 = vmatprep.subr.mxu0 %v160
  %390 = vmatpush1.msra.mxu0 %v159
  %391 = vmatprep.subr.mxu0 %v162
  %392 = vmatpush1.msra.mxu0 %v161
  %393 = vmatprep.subr.mxu0 %v164
  %394 = vmatpush1.msra.mxu0 %v163
  %395 = vmatprep.subr.mxu0 %v166
  %396 = vmatpush1.msra.mxu0 %v165
  %397 = vmatprep.subr.mxu0 0.0
  %398 = vmatpush1.msra.mxu0 0.0
  %399 = vmatprep.subr.mxu0 0.0
  %400 = vmatpush1.msra.mxu0 0.0
  %401 = vmatprep.subr.mxu0 0.0
  %402 = vmatpush1.msra.mxu0 0.0
  %403 = vmatprep.subr.mxu0 0.0
  %404 = vmatpush1.msra.mxu0 0.0
  %405 = vmatprep.subr.mxu0 0.0
  %406 = vmatpush1.msra.mxu0 0.0
  %407 = vmatprep.subr.mxu0 0.0
  %408 = vmatpush1.msra.mxu0 0.0
  %409 = vmatprep.subr.mxu0 0.0
  %410 = vmatpush1.msra.mxu0 0.0
  %411 = vmatprep.subr.mxu0 0.0
  %412 = vmatpush1.msra.mxu0 0.0
  %413 = vmatprep.subr.mxu0 0.0
  %414 = vmatpush1.msra.mxu0 0.0
  %415 = vmatprep.subr.mxu0 0.0
  %416 = vmatpush1.msra.mxu0 0.0
  %417 = vmatprep.subr.mxu0 0.0
  %418 = vmatpush1.msra.mxu0 0.0
  %419 = vmatprep.subr.mxu0 0.0
  %420 = vmatpush1.msra.mxu0 0.0
  %421 = vmatprep.subr.mxu0 0.0
  %422 = vmatpush1.msra.mxu0 0.0
  %423 = vmatprep.subr.mxu0 0.0
  %424 = vmatpush1.msra.mxu0 0.0
  %425 = vmatprep.subr.mxu0 0.0
  %426 = vmatpush1.msra.mxu0 0.0
  %427 = vmatprep.subr.mxu0 0.0
  %428 = vmatpush1.msra.mxu0 0.0
  %429 = vmatprep.subr.mxu0 0.0
  %430 = vmatpush1.msra.mxu0 0.0
  %431 = vmatprep.subr.mxu0 0.0
  %432 = vmatpush1.msra.mxu0 0.0
  %433 = vmatprep.subr.mxu0 0.0
  %434 = vmatpush1.msra.mxu0 0.0
  %435 = vmatprep.subr.mxu0 0.0
  %436 = vmatpush1.msra.mxu0 0.0
  %437 = vmatprep.subr.mxu0 0.0
  %438 = vmatpush1.msra.mxu0 0.0
  %439 = vmatprep.subr.mxu0 0.0
  %440 = vmatpush1.msra.mxu0 0.0
  %441 = vmatprep.subr.mxu0 0.0
  %442 = vmatpush1.msra.mxu0 0.0
  %443 = vmatprep.subr.mxu0 0.0
  %444 = vmatpush1.msra.mxu0 0.0
  %445 = vmatprep.mubr.f32.mxu0 0.0
  %446 = vmatmul.mubr.f32.gmra.mrb[0].mxu0 %v379
  %v447 = vpop.f32.mrb[0].mxu0
  %v448 = vadd.f32 0.0, %v447
  %v449 = vpop.f32.mrb[0].mxu0
  %v450 = vadd.f32 0.0, %v449
  %451 = vdwg.mxu0
  %v454 = vrot.slane %v448, 4
  %v455 = vrot.slane %v450, 4
  %v458 = vadd.f32 %v141, %v454
  %v459 = vadd.f32 %v143, %v455
  %v460 = vxor.u32 %v458, 2147483648
  %v461 = vxor.u32 %v459, 2147483648
  %v462 = vmul.f32 %v460, 1.442695
  %v463 = vpow.pop %v462
  %v464 = vmul.f32 %v461, 1.442695
  %v465 = vpow.pop %v464
  %v466 = vadd.f32 %v463, 1.0
  %v467 = vadd.f32 %v465, 1.0
  %v468 = vrcp.pop %v466
  %v469 = vmul.f32 1.0, %v468
  %v470 = vrcp.pop %v467
  %v471 = vmul.f32 1.0, %v470
  %v472 = vtanh.pop %v459
  %v474 = vrot.slane %v372, 6
  %v476 = vmul.f32 %v469, %v474
  %v477 = vmul.f32 %v469, %v472
  %479 = vrot.lane.b32.xlu0 %v477, 64
  %v480 = vpop.permute.xlu0 %479
  %v482 = vadd.f32 %v476, %v480
  %v483 = vtanh.pop %v482
  %v484 = vmul.f32 %v471, %v483
  %v486 = vrot.slane %v484, 4
  %487 = vrot.lane.b32.xlu0 %v486, 64
  %v488 = vpop.permute.xlu0 %487
  %v489 = vsel %vm167, %v488, 0
  %491 = vmatprep.subr.mxu0 %v152
  %492 = vmatpush1.msra.mxu0 %v151
  %493 = vmatprep.subr.mxu0 %v154
  %494 = vmatpush1.msra.mxu0 %v153
  %495 = vmatprep.subr.mxu0 %v156
  %496 = vmatpush1.msra.mxu0 %v155
  %497 = vmatprep.subr.mxu0 %v158
  %498 = vmatpush1.msra.mxu0 %v157
  %499 = vmatprep.subr.mxu0 %v160
  %500 = vmatpush1.msra.mxu0 %v159
  %501 = vmatprep.subr.mxu0 %v162
  %502 = vmatpush1.msra.mxu0 %v161
  %503 = vmatprep.subr.mxu0 %v164
  %504 = vmatpush1.msra.mxu0 %v163
  %505 = vmatprep.subr.mxu0 %v166
  %506 = vmatpush1.msra.mxu0 %v165
  %507 = vmatprep.subr.mxu0 0.0
  %508 = vmatpush1.msra.mxu0 0.0
  %509 = vmatprep.subr.mxu0 0.0
  %510 = vmatpush1.msra.mxu0 0.0
  %511 = vmatprep.subr.mxu0 0.0
  %512 = vmatpush1.msra.mxu0 0.0
  %513 = vmatprep.subr.mxu0 0.0
  %514 = vmatpush1.msra.mxu0 0.0
  %515 = vmatprep.subr.mxu0 0.0
  %516 = vmatpush1.msra.mxu0 0.0
  %517 = vmatprep.subr.mxu0 0.0
  %518 = vmatpush1.msra.mxu0 0.0
  %519 = vmatprep.subr.mxu0 0.0
  %520 = vmatpush1.msra.mxu0 0.0
  %521 = vmatprep.subr.mxu0 0.0
  %522 = vmatpush1.msra.mxu0 0.0
  %523 = vmatprep.subr.mxu0 0.0
  %524 = vmatpush1.msra.mxu0 0.0
  %525 = vmatprep.subr.mxu0 0.0
  %526 = vmatpush1.msra.mxu0 0.0
  %527 = vmatprep.subr.mxu0 0.0
  %528 = vmatpush1.msra.mxu0 0.0
  %529 = vmatprep.subr.mxu0 0.0
  %530 = vmatpush1.msra.mxu0 0.0
  %531 = vmatprep.subr.mxu0 0.0
  %532 = vmatpush1.msra.mxu0 0.0
  %533 = vmatprep.subr.mxu0 0.0
  %534 = vmatpush1.msra.mxu0 0.0
  %535 = vmatprep.subr.mxu0 0.0
  %536 = vmatpush1.msra.mxu0 0.0
  %537 = vmatprep.subr.mxu0 0.0
  %538 = vmatpush1.msra.mxu0 0.0
  %539 = vmatprep.subr.mxu0 0.0
  %540 = vmatpush1.msra.mxu0 0.0
  %541 = vmatprep.subr.mxu0 0.0
  %542 = vmatpush1.msra.mxu0 0.0
  %543 = vmatprep.subr.mxu0 0.0
  %544 = vmatpush1.msra.mxu0 0.0
  %545 = vmatprep.subr.mxu0 0.0
  %546 = vmatpush1.msra.mxu0 0.0
  %547 = vmatprep.subr.mxu0 0.0
  %548 = vmatpush1.msra.mxu0 0.0
  %549 = vmatprep.subr.mxu0 0.0
  %550 = vmatpush1.msra.mxu0 0.0
  %551 = vmatprep.subr.mxu0 0.0
  %552 = vmatpush1.msra.mxu0 0.0
  %553 = vmatprep.subr.mxu0 0.0
  %554 = vmatpush1.msra.mxu0 0.0
  %555 = vmatprep.mubr.f32.mxu0 0.0
  %556 = vmatmul.mubr.f32.gmra.mrb[0].mxu0 %v489
  %v557 = vpop.f32.mrb[0].mxu0
  %v558 = vadd.f32 0.0, %v557
  %v559 = vpop.f32.mrb[0].mxu0
  %v560 = vadd.f32 0.0, %v559
  %561 = vdwg.mxu0
  %v564 = vrot.slane %v558, 2
  %v565 = vrot.slane %v560, 2
  %v568 = vadd.f32 %v141, %v564
  %v569 = vadd.f32 %v143, %v565
  %v570 = vxor.u32 %v568, 2147483648
  %v571 = vxor.u32 %v569, 2147483648
  %v572 = vmul.f32 %v570, 1.442695
  %v573 = vpow.pop %v572
  %v574 = vmul.f32 %v571, 1.442695
  %v575 = vpow.pop %v574
  %v576 = vadd.f32 %v573, 1.0
  %v577 = vadd.f32 %v575, 1.0
  %v578 = vrcp.pop %v576
  %v579 = vmul.f32 1.0, %v578
  %v580 = vrcp.pop %v577
  %v581 = vmul.f32 1.0, %v580
  %v582 = vtanh.pop %v569
  %v584 = vrot.slane %v482, 6
  %v586 = vmul.f32 %v579, %v584
  %v587 = vmul.f32 %v579, %v582
  %589 = vrot.lane.b32.xlu0 %v587, 64
  %v590 = vpop.permute.xlu0 %589
  %v592 = vadd.f32 %v586, %v590
  %v593 = vtanh.pop %v592
  %v594 = vmul.f32 %v581, %v593
  %v596 = vrot.slane %v594, 6
  %597 = vrot.lane.b32.xlu0 %v596, 64
  %v598 = vpop.permute.xlu0 %597
  %v599 = vsel %vm167, %v598, 0
  %601 = vmatprep.subr.mxu0 %v152
  %602 = vmatpush1.msra.mxu0 %v151
  %603 = vmatprep.subr.mxu0 %v154
  %604 = vmatpush1.msra.mxu0 %v153
  %605 = vmatprep.subr.mxu0 %v156
  %606 = vmatpush1.msra.mxu0 %v155
  %607 = vmatprep.subr.mxu0 %v158
  %608 = vmatpush1.msra.mxu0 %v157
  %609 = vmatprep.subr.mxu0 %v160
  %610 = vmatpush1.msra.mxu0 %v159
  %611 = vmatprep.subr.mxu0 %v162
  %612 = vmatpush1.msra.mxu0 %v161
  %613 = vmatprep.subr.mxu0 %v164
  %614 = vmatpush1.msra.mxu0 %v163
  %615 = vmatprep.subr.mxu0 %v166
  %616 = vmatpush1.msra.mxu0 %v165
  %617 = vmatprep.subr.mxu0 0.0
  %618 = vmatpush1.msra.mxu0 0.0
  %619 = vmatprep.subr.mxu0 0.0
  %620 = vmatpush1.msra.mxu0 0.0
  %621 = vmatprep.subr.mxu0 0.0
  %622 = vmatpush1.msra.mxu0 0.0
  %623 = vmatprep.subr.mxu0 0.0
  %624 = vmatpush1.msra.mxu0 0.0
  %625 = vmatprep.subr.mxu0 0.0
  %626 = vmatpush1.msra.mxu0 0.0
  %627 = vmatprep.subr.mxu0 0.0
  %628 = vmatpush1.msra.mxu0 0.0
  %629 = vmatprep.subr.mxu0 0.0
  %630 = vmatpush1.msra.mxu0 0.0
  %631 = vmatprep.subr.mxu0 0.0
  %632 = vmatpush1.msra.mxu0 0.0
  %633 = vmatprep.subr.mxu0 0.0
  %634 = vmatpush1.msra.mxu0 0.0
  %635 = vmatprep.subr.mxu0 0.0
  %636 = vmatpush1.msra.mxu0 0.0
  %637 = vmatprep.subr.mxu0 0.0
  %638 = vmatpush1.msra.mxu0 0.0
  %639 = vmatprep.subr.mxu0 0.0
  %640 = vmatpush1.msra.mxu0 0.0
  %641 = vmatprep.subr.mxu0 0.0
  %642 = vmatpush1.msra.mxu0 0.0
  %643 = vmatprep.subr.mxu0 0.0
  %644 = vmatpush1.msra.mxu0 0.0
  %645 = vmatprep.subr.mxu0 0.0
  %646 = vmatpush1.msra.mxu0 0.0
  %647 = vmatprep.subr.mxu0 0.0
  %648 = vmatpush1.msra.mxu0 0.0
  %649 = vmatprep.subr.mxu0 0.0
  %650 = vmatpush1.msra.mxu0 0.0
  %651 = vmatprep.subr.mxu0 0.0
  %652 = vmatpush1.msra.mxu0 0.0
  %653 = vmatprep.subr.mxu0 0.0
  %654 = vmatpush1.msra.mxu0 0.0
  %655 = vmatprep.subr.mxu0 0.0
  %656 = vmatpush1.msra.mxu0 0.0
  %657 = vmatprep.subr.mxu0 0.0
  %658 = vmatpush1.msra.mxu0 0.0
  %659 = vmatprep.subr.mxu0 0.0
  %660 = vmatpush1.msra.mxu0 0.0
  %661 = vmatprep.subr.mxu0 0.0
  %662 = vmatpush1.msra.mxu0 0.0
  %663 = vmatprep.subr.mxu0 0.0
  %664 = vmatpush1.msra.mxu0 0.0
  %665 = vmatprep.mubr.f32.mxu0 0.0
  %666 = vmatmul.mubr.f32.gmra.mrb[0].mxu0 %v599
  %v667 = vpop.f32.mrb[0].mxu0
  %v668 = vadd.f32 0.0, %v667
  %v669 = vpop.f32.mrb[0].mxu0
  %v670 = vadd.f32 0.0, %v669
  %671 = vdwg.mxu0
  %v672 = vadd.f32 %v147, %v668
  %v673 = vadd.f32 %v149, %v670
  %v674 = vxor.u32 %v672, 2147483648
  %v675 = vxor.u32 %v673, 2147483648
  %v676 = vmul.f32 %v674, 1.442695
  %v677 = vpow.pop %v676
  %v678 = vmul.f32 %v675, 1.442695
  %v679 = vpow.pop %v678
  %v680 = vadd.f32 %v677, 1.0
  %v681 = vadd.f32 %v679, 1.0
  %v682 = vrcp.pop %v680
  %v683 = vmul.f32 1.0, %v682
  %v684 = vrcp.pop %v681
  %v685 = vmul.f32 1.0, %v684
  %v686 = vtanh.pop %v673
  %v688 = vrot.slane %v592, 6
  %v690 = vmul.f32 %v683, %v688
  %v691 = vmul.f32 %v683, %v686
  %693 = vrot.lane.b32.xlu0 %v691, 64
  %v694 = vpop.permute.xlu0 %693
  %v696 = vadd.f32 %v690, %v694
  %v697 = vtanh.pop %v696
  %v698 = vmul.f32 %v685, %v697
  %700 = vrot.lane.b32.xlu0 %v698, 64
  %v701 = vpop.permute.xlu0 %700
  %v702 = vsel %vm167, %v701, 0
  %704 = vmatprep.subr.mxu0 %v152
  %705 = vmatpush1.msra.mxu0 %v151
  %706 = vmatprep.subr.mxu0 %v154
  %707 = vmatpush1.msra.mxu0 %v153
  %708 = vmatprep.subr.mxu0 %v156
  %709 = vmatpush1.msra.mxu0 %v155
  %710 = vmatprep.subr.mxu0 %v158
  %711 = vmatpush1.msra.mxu0 %v157
  %712 = vmatprep.subr.mxu0 %v160
  %713 = vmatpush1.msra.mxu0 %v159
  %714 = vmatprep.subr.mxu0 %v162
  %715 = vmatpush1.msra.mxu0 %v161
  %716 = vmatprep.subr.mxu0 %v164
  %717 = vmatpush1.msra.mxu0 %v163
  %718 = vmatprep.subr.mxu0 %v166
  %719 = vmatpush1.msra.mxu0 %v165
  %720 = vmatprep.subr.mxu0 0.0
  %721 = vmatpush1.msra.mxu0 0.0
  %722 = vmatprep.subr.mxu0 0.0
  %723 = vmatpush1.msra.mxu0 0.0
  %724 = vmatprep.subr.mxu0 0.0
  %725 = vmatpush1.msra.mxu0 0.0
  %726 = vmatprep.subr.mxu0 0.0
  %727 = vmatpush1.msra.mxu0 0.0
  %728 = vmatprep.subr.mxu0 0.0
  %729 = vmatpush1.msra.mxu0 0.0
  %730 = vmatprep.subr.mxu0 0.0
  %731 = vmatpush1.msra.mxu0 0.0
  %732 = vmatprep.subr.mxu0 0.0
  %733 = vmatpush1.msra.mxu0 0.0
  %734 = vmatprep.subr.mxu0 0.0
  %735 = vmatpush1.msra.mxu0 0.0
  %736 = vmatprep.subr.mxu0 0.0
  %737 = vmatpush1.msra.mxu0 0.0
  %738 = vmatprep.subr.mxu0 0.0
  %739 = vmatpush1.msra.mxu0 0.0
  %740 = vmatprep.subr.mxu0 0.0
  %741 = vmatpush1.msra.mxu0 0.0
  %742 = vmatprep.subr.mxu0 0.0
  %743 = vmatpush1.msra.mxu0 0.0
  %744 = vmatprep.subr.mxu0 0.0
  %745 = vmatpush1.msra.mxu0 0.0
  %746 = vmatprep.subr.mxu0 0.0
  %747 = vmatpush1.msra.mxu0 0.0
  %748 = vmatprep.subr.mxu0 0.0
  %749 = vmatpush1.msra.mxu0 0.0
  %750 = vmatprep.subr.mxu0 0.0
  %751 = vmatpush1.msra.mxu0 0.0
  %752 = vmatprep.subr.mxu0 0.0
  %753 = vmatpush1.msra.mxu0 0.0
  %754 = vmatprep.subr.mxu0 0.0
  %755 = vmatpush1.msra.mxu0 0.0
  %756 = vmatprep.subr.mxu0 0.0
  %757 = vmatpush1.msra.mxu0 0.0
  %758 = vmatprep.subr.mxu0 0.0
  %759 = vmatpush1.msra.mxu0 0.0
  %760 = vmatprep.subr.mxu0 0.0
  %761 = vmatpush1.msra.mxu0 0.0
  %762 = vmatprep.subr.mxu0 0.0
  %763 = vmatpush1.msra.mxu0 0.0
  %764 = vmatprep.subr.mxu0 0.0
  %765 = vmatpush1.msra.mxu0 0.0
  %766 = vmatprep.subr.mxu0 0.0
  %767 = vmatpush1.msra.mxu0 0.0
  %768 = vmatprep.mubr.f32.mxu0 0.0
  %769 = vmatmul.mubr.f32.gmra.mrb[0].mxu0 %v702
  %v770 = vpop.f32.mrb[0].mxu0
  %v771 = vadd.f32 0.0, %v770
  %v772 = vpop.f32.mrb[0].mxu0
  %v773 = vadd.f32 0.0, %v772
  %774 = vdwg.mxu0
  %v777 = vrot.slane %v771, 6
  %v778 = vrot.slane %v773, 6
  %v781 = vadd.f32 %v147, %v777
  %v782 = vadd.f32 %v149, %v778
  %v783 = vxor.u32 %v781, 2147483648
  %v784 = vxor.u32 %v782, 2147483648
  %v785 = vmul.f32 %v783, 1.442695
  %v786 = vpow.pop %v785
  %v787 = vmul.f32 %v784, 1.442695
  %v788 = vpow.pop %v787
  %v789 = vadd.f32 %v786, 1.0
  %v790 = vadd.f32 %v788, 1.0
  %v791 = vrcp.pop %v789
  %v792 = vmul.f32 1.0, %v791
  %v793 = vrcp.pop %v790
  %v794 = vmul.f32 1.0, %v793
  %v795 = vtanh.pop %v782
  %v797 = vrot.slane %v696, 6
  %v799 = vmul.f32 %v792, %v797
  %v800 = vmul.f32 %v792, %v795
  %802 = vrot.lane.b32.xlu0 %v800, 64
  %v803 = vpop.permute.xlu0 %802
  %v805 = vadd.f32 %v799, %v803
  %v806 = vtanh.pop %v805
  %v807 = vmul.f32 %v794, %v806
  %v809 = vrot.slane %v807, 2
  %810 = vrot.lane.b32.xlu0 %v809, 64
  %v811 = vpop.permute.xlu0 %810
  %v812 = vsel %vm167, %v811, 0
  %814 = vmatprep.subr.mxu0 %v152
  %815 = vmatpush1.msra.mxu0 %v151
  %816 = vmatprep.subr.mxu0 %v154
  %817 = vmatpush1.msra.mxu0 %v153
  %818 = vmatprep.subr.mxu0 %v156
  %819 = vmatpush1.msra.mxu0 %v155
  %820 = vmatprep.subr.mxu0 %v158
  %821 = vmatpush1.msra.mxu0 %v157
  %822 = vmatprep.subr.mxu0 %v160
  %823 = vmatpush1.msra.mxu0 %v159
  %824 = vmatprep.subr.mxu0 %v162
  %825 = vmatpush1.msra.mxu0 %v161
  %826 = vmatprep.subr.mxu0 %v164
  %827 = vmatpush1.msra.mxu0 %v163
  %828 = vmatprep.subr.mxu0 %v166
  %829 = vmatpush1.msra.mxu0 %v165
  %830 = vmatprep.subr.mxu0 0.0
  %831 = vmatpush1.msra.mxu0 0.0
  %832 = vmatprep.subr.mxu0 0.0
  %833 = vmatpush1.msra.mxu0 0.0
  %834 = vmatprep.subr.mxu0 0.0
  %835 = vmatpush1.msra.mxu0 0.0
  %836 = vmatprep.subr.mxu0 0.0
  %837 = vmatpush1.msra.mxu0 0.0
  %838 = vmatprep.subr.mxu0 0.0
  %839 = vmatpush1.msra.mxu0 0.0
  %840 = vmatprep.subr.mxu0 0.0
  %841 = vmatpush1.msra.mxu0 0.0
  %842 = vmatprep.subr.mxu0 0.0
  %843 = vmatpush1.msra.mxu0 0.0
  %844 = vmatprep.subr.mxu0 0.0
  %845 = vmatpush1.msra.mxu0 0.0
  %846 = vmatprep.subr.mxu0 0.0
  %847 = vmatpush1.msra.mxu0 0.0
  %848 = vmatprep.subr.mxu0 0.0
  %849 = vmatpush1.msra.mxu0 0.0
  %850 = vmatprep.subr.mxu0 0.0
  %851 = vmatpush1.msra.mxu0 0.0
  %852 = vmatprep.subr.mxu0 0.0
  %853 = vmatpush1.msra.mxu0 0.0
  %854 = vmatprep.subr.mxu0 0.0
  %855 = vmatpush1.msra.mxu0 0.0
  %856 = vmatprep.subr.mxu0 0.0
  %857 = vmatpush1.msra.mxu0 0.0
  %858 = vmatprep.subr.mxu0 0.0
  %859 = vmatpush1.msra.mxu0 0.0
  %860 = vmatprep.subr.mxu0 0.0
  %861 = vmatpush1.msra.mxu0 0.0
  %862 = vmatprep.subr.mxu0 0.0
  %863 = vmatpush1.msra.mxu0 0.0
  %864 = vmatprep.subr.mxu0 0.0
  %865 = vmatpush1.msra.mxu0 0.0
  %866 = vmatprep.subr.mxu0 0.0
  %867 = vmatpush1.msra.mxu0 0.0
  %868 = vmatprep.subr.mxu0 0.0
  %869 = vmatpush1.msra.mxu0 0.0
  %870 = vmatprep.subr.mxu0 0.0
  %871 = vmatpush1.msra.mxu0 0.0
  %872 = vmatprep.subr.mxu0 0.0
  %873 = vmatpush1.msra.mxu0 0.0
  %874 = vmatprep.subr.mxu0 0.0
  %875 = vmatpush1.msra.mxu0 0.0
  %876 = vmatprep.subr.mxu0 0.0
  %877 = vmatpush1.msra.mxu0 0.0
  %878 = vmatprep.mubr.f32.mxu0 0.0
  %879 = vmatmul.mubr.f32.gmra.mrb[0].mxu0 %v812
  %v880 = vpop.f32.mrb[0].mxu0
  %v881 = vadd.f32 0.0, %v880
  %v882 = vpop.f32.mrb[0].mxu0
  %v883 = vadd.f32 0.0, %v882
  %884 = vdwg.mxu0
  %v887 = vrot.slane %v881, 4
  %v888 = vrot.slane %v883, 4
  %v891 = vadd.f32 %v147, %v887
  %v892 = vadd.f32 %v149, %v888
  %v893 = vxor.u32 %v891, 2147483648
  %v894 = vxor.u32 %v892, 2147483648
  %v895 = vmul.f32 %v893, 1.442695
  %v896 = vpow.pop %v895
  %v897 = vmul.f32 %v894, 1.442695
  %v898 = vpow.pop %v897
  %v899 = vadd.f32 %v896, 1.0
  %v900 = vadd.f32 %v898, 1.0
  %v901 = vrcp.pop %v899
  %v902 = vmul.f32 1.0, %v901
  %v903 = vrcp.pop %v900
  %v904 = vmul.f32 1.0, %v903
  %v905 = vtanh.pop %v892
  %v907 = vrot.slane %v805, 6
  %v909 = vmul.f32 %v902, %v907
  %v910 = vmul.f32 %v902, %v905
  %912 = vrot.lane.b32.xlu0 %v910, 64
  %v913 = vpop.permute.xlu0 %912
  %v915 = vadd.f32 %v909, %v913
  %v916 = vtanh.pop %v915
  %v917 = vmul.f32 %v904, %v916
  %v919 = vrot.slane %v917, 4
  %920 = vrot.lane.b32.xlu0 %v919, 64
  %v921 = vpop.permute.xlu0 %920
  %v922 = vsel %vm167, %v921, 0
  %924 = vmatprep.subr.mxu0 %v152
  %925 = vmatpush1.msra.mxu0 %v151
  %926 = vmatprep.subr.mxu0 %v154
  %927 = vmatpush1.msra.mxu0 %v153
  %928 = vmatprep.subr.mxu0 %v156
  %929 = vmatpush1.msra.mxu0 %v155
  %930 = vmatprep.subr.mxu0 %v158
  %931 = vmatpush1.msra.mxu0 %v157
  %932 = vmatprep.subr.mxu0 %v160
  %933 = vmatpush1.msra.mxu0 %v159
  %934 = vmatprep.subr.mxu0 %v162
  %935 = vmatpush1.msra.mxu0 %v161
  %936 = vmatprep.subr.mxu0 %v164
  %937 = vmatpush1.msra.mxu0 %v163
  %938 = vmatprep.subr.mxu0 %v166
  %939 = vmatpush1.msra.mxu0 %v165
  %940 = vmatprep.subr.mxu0 0.0
  %941 = vmatpush1.msra.mxu0 0.0
  %942 = vmatprep.subr.mxu0 0.0
  %943 = vmatpush1.msra.mxu0 0.0
  %944 = vmatprep.subr.mxu0 0.0
  %945 = vmatpush1.msra.mxu0 0.0
  %946 = vmatprep.subr.mxu0 0.0
  %947 = vmatpush1.msra.mxu0 0.0
  %948 = vmatprep.subr.mxu0 0.0
  %949 = vmatpush1.msra.mxu0 0.0
  %950 = vmatprep.subr.mxu0 0.0
  %951 = vmatpush1.msra.mxu0 0.0
  %952 = vmatprep.subr.mxu0 0.0
  %953 = vmatpush1.msra.mxu0 0.0
  %954 = vmatprep.subr.mxu0 0.0
  %955 = vmatpush1.msra.mxu0 0.0
  %956 = vmatprep.subr.mxu0 0.0
  %957 = vmatpush1.msra.mxu0 0.0
  %958 = vmatprep.subr.mxu0 0.0
  %959 = vmatpush1.msra.mxu0 0.0
  %960 = vmatprep.subr.mxu0 0.0
  %961 = vmatpush1.msra.mxu0 0.0
  %962 = vmatprep.subr.mxu0 0.0
  %963 = vmatpush1.msra.mxu0 0.0
  %964 = vmatprep.subr.mxu0 0.0
  %965 = vmatpush1.msra.mxu0 0.0
  %966 = vmatprep.subr.mxu0 0.0
  %967 = vmatpush1.msra.mxu0 0.0
  %968 = vmatprep.subr.mxu0 0.0
  %969 = vmatpush1.msra.mxu0 0.0
  %970 = vmatprep.subr.mxu0 0.0
  %971 = vmatpush1.msra.mxu0 0.0
  %972 = vmatprep.subr.mxu0 0.0
  %973 = vmatpush1.msra.mxu0 0.0
  %974 = vmatprep.subr.mxu0 0.0
  %975 = vmatpush1.msra.mxu0 0.0
  %976 = vmatprep.subr.mxu0 0.0
  %977 = vmatpush1.msra.mxu0 0.0
  %978 = vmatprep.subr.mxu0 0.0
  %979 = vmatpush1.msra.mxu0 0.0
  %980 = vmatprep.subr.mxu0 0.0
  %981 = vmatpush1.msra.mxu0 0.0
  %982 = vmatprep.subr.mxu0 0.0
  %983 = vmatpush1.msra.mxu0 0.0
  %984 = vmatprep.subr.mxu0 0.0
  %985 = vmatpush1.msra.mxu0 0.0
  %986 = vmatprep.subr.mxu0 0.0
  %987 = vmatpush1.msra.mxu0 0.0
  %988 = vmatprep.mubr.f32.mxu0 0.0
  %989 = vmatmul.mubr.f32.gmra.mrb[0].mxu0 %v922
  %v990 = vpop.f32.mrb[0].mxu0
  %v991 = vadd.f32 0.0, %v990
  %v992 = vpop.f32.mrb[0].mxu0
  %v993 = vadd.f32 0.0, %v992
  %994 = vdwg.mxu0
  %v997 = vrot.slane %v991, 2
  %v998 = vrot.slane %v993, 2
  %v1001 = vadd.f32 %v147, %v997
  %v1002 = vadd.f32 %v149, %v998
  %v1003 = vxor.u32 %v1001, 2147483648
  %v1004 = vxor.u32 %v1002, 2147483648
  %v1005 = vmul.f32 %v1003, 1.442695
  %v1006 = vpow.pop %v1005
  %v1007 = vmul.f32 %v1004, 1.442695
  %v1008 = vpow.pop %v1007
  %v1009 = vadd.f32 %v1006, 1.0
  %v1010 = vadd.f32 %v1008, 1.0
  %v1011 = vrcp.pop %v1009
  %v1012 = vmul.f32 1.0, %v1011
  %v1013 = vrcp.pop %v1010
  %v1014 = vmul.f32 1.0, %v1013
  %v1015 = vtanh.pop %v1002
  %v1017 = vrot.slane %v915, 6
  %v1019 = vmul.f32 %v1012, %v1017
  %v1020 = vmul.f32 %v1012, %v1015
  %1022 = vrot.lane.b32.xlu0 %v1020, 64
  %v1023 = vpop.permute.xlu0 %1022
  %v1025 = vadd.f32 %v1019, %v1023
  %v1026 = vtanh.pop %v1025
  %v1027 = vmul.f32 %v1014, %v1026
  %v1028 = vlaneseq
  %v1029 = vand.u32 %v1028, 127
  %vm1030 = vcmp.lt.s32.totalorder %v1029, 32
  %v1033 = vrot.slane %v1027, 6
  %1034 = vrot.lane.b32.xlu0 %v1033, 64
  %v1035 = vpop.permute.xlu0 %1034
  %v1037 = vsel %vm1030, %v268, %v1035
  %v1040 = vsel %vm1030, %v378, %v921
  %v1043 = vsel %vm1030, %v488, %v811
  %v1046 = vsel %vm1030, %v598, %v701
  %v1047 = vsel %vm1030, %v701, %v598
  %v1048 = vsel %vm1030, %v811, %v488
  %v1049 = vsel %vm1030, %v921, %v378
  %v1050 = vsel %vm1030, %v1035, %v268
  %v1052 = vrot.slane %v1040, 6
  %v1055 = vrot.slane %v1043, 4
  %v1058 = vrot.slane %v1046, 2
  %v1061 = vrot.slane %v1048, 6
  %v1064 = vrot.slane %v1049, 4
  %v1067 = vrot.slane %v1050, 2
  %vm1069 = vcmask 1041408
  %v1070 = vsel %vm1069, %v1037, %v1052
  %vm1071 = vcmask 1043456
  %v1072 = vsel %vm1071, %v1070, %v1055
  %vm1073 = vcmask 1045504
  %v1074 = vsel %vm1073, %v1072, %v1058
  %v1075 = vsel %vm1069, %v1047, %v1061
  %v1076 = vsel %vm1071, %v1075, %v1064
  %v1077 = vsel %vm1073, %v1076, %v1067
  %v1078 = vld [vmem:[%s4] sm:$0xff]
  %v1079 = vld [vmem:[%s4 + $0x8] sm:$0xff]
  %v1080 = vld [vmem:[%s4 + $0x10] sm:$0xff]
  %v1081 = vld [vmem:[%s4 + $0x18] sm:$0xff]
  %v1082 = vld [vmem:[%s4 + $0x20] sm:$0xff]
  %v1083 = vld [vmem:[%s4 + $0x28] sm:$0xff]
  %v1084 = vld [vmem:[%s4 + $0x30] sm:$0xff]
  %v1085 = vld [vmem:[%s4 + $0x38] sm:$0xff]
  %v1086 = vld [vmem:[%s5] sm:$0x1]
  %v1088 = vlaneseq
  %v1089 = vshrl.u32 %v1088, 7
  %v1090 = vsub.s32 0, %v1089
  %v1091 = vrot.slane %v1086, %v1090
  %v1094 = vsel %vm167, %v1074, 0
  %v1097 = vsel %vm167, %v1077, 0
  %1099 = vmatprep.subr.mxu0 0.0
  %1100 = vmatpush1.msra.mxu0 %v1078
  %1101 = vmatprep.subr.mxu0 0.0
  %1102 = vmatpush1.msra.mxu0 %v1079
  %1103 = vmatprep.subr.mxu0 0.0
  %1104 = vmatpush1.msra.mxu0 %v1080
  %1105 = vmatprep.subr.mxu0 0.0
  %1106 = vmatpush1.msra.mxu0 %v1081
  %1107 = vmatprep.subr.mxu0 0.0
  %1108 = vmatpush1.msra.mxu0 %v1082
  %1109 = vmatprep.subr.mxu0 0.0
  %1110 = vmatpush1.msra.mxu0 %v1083
  %1111 = vmatprep.subr.mxu0 0.0
  %1112 = vmatpush1.msra.mxu0 %v1084
  %1113 = vmatprep.subr.mxu0 0.0
  %1114 = vmatpush1.msra.mxu0 %v1085
  %1115 = vmatprep.subr.mxu0 0.0
  %1116 = vmatpush1.msra.mxu0 0.0
  %1117 = vmatprep.subr.mxu0 0.0
  %1118 = vmatpush1.msra.mxu0 0.0
  %1119 = vmatprep.subr.mxu0 0.0
  %1120 = vmatpush1.msra.mxu0 0.0
  %1121 = vmatprep.subr.mxu0 0.0
  %1122 = vmatpush1.msra.mxu0 0.0
  %1123 = vmatprep.subr.mxu0 0.0
  %1124 = vmatpush1.msra.mxu0 0.0
  %1125 = vmatprep.subr.mxu0 0.0
  %1126 = vmatpush1.msra.mxu0 0.0
  %1127 = vmatprep.subr.mxu0 0.0
  %1128 = vmatpush1.msra.mxu0 0.0
  %1129 = vmatprep.subr.mxu0 0.0
  %1130 = vmatpush1.msra.mxu0 0.0
  %1131 = vmatprep.subr.mxu0 0.0
  %1132 = vmatpush1.msra.mxu0 0.0
  %1133 = vmatprep.subr.mxu0 0.0
  %1134 = vmatpush1.msra.mxu0 0.0
  %1135 = vmatprep.subr.mxu0 0.0
  %1136 = vmatpush1.msra.mxu0 0.0
  %1137 = vmatprep.subr.mxu0 0.0
  %1138 = vmatpush1.msra.mxu0 0.0
  %1139 = vmatprep.subr.mxu0 0.0
  %1140 = vmatpush1.msra.mxu0 0.0
  %1141 = vmatprep.subr.mxu0 0.0
  %1142 = vmatpush1.msra.mxu0 0.0
  %1143 = vmatprep.subr.mxu0 0.0
  %1144 = vmatpush1.msra.mxu0 0.0
  %1145 = vmatprep.subr.mxu0 0.0
  %1146 = vmatpush1.msra.mxu0 0.0
  %1147 = vmatprep.subr.mxu0 0.0
  %1148 = vmatpush1.msra.mxu0 0.0
  %1149 = vmatprep.subr.mxu0 0.0
  %1150 = vmatpush1.msra.mxu0 0.0
  %1151 = vmatprep.subr.mxu0 0.0
  %1152 = vmatpush1.msra.mxu0 0.0
  %1153 = vmatprep.subr.mxu0 0.0
  %1154 = vmatpush1.msra.mxu0 0.0
  %1155 = vmatprep.subr.mxu0 0.0
  %1156 = vmatpush1.msra.mxu0 0.0
  %1157 = vmatprep.subr.mxu0 0.0
  %1158 = vmatpush1.msra.mxu0 0.0
  %1159 = vmatprep.subr.mxu0 0.0
  %1160 = vmatpush1.msra.mxu0 0.0
  %1161 = vmatprep.subr.mxu0 0.0
  %1162 = vmatpush1.msra.mxu0 0.0
  %1163 = vmatprep.mubr.f32.mxu0 0.0
  %1164 = vmatmul.mubr.f32.gmra.mrb[0].mxu0 %v1094
  %v1165 = vpop.f32.mrb[0].mxu0
  %v1166 = vadd.f32 %v1091, %v1165
  %v1167 = vpop.f32.mrb[0].mxu0
  %1168 = vmatprep.mubr.f32.mxu0 0.0
  %1169 = vmatmul.mubr.f32.gmra.mrb[0].mxu0 %v1097
  %v1170 = vpop.f32.mrb[0].mxu0
  %v1171 = vadd.f32 %v1091, %v1170
  %v1172 = vpop.f32.mrb[0].mxu0
  %1173 = vdwg.mxu0
  %v1174 = vld [vmem:[%s6] sm:$0xff]
  %v1175 = vld [vmem:[%s6 + $0x8] sm:$0xff]
  %v1176 = vld [vmem:[%s6 + $0x10] sm:$0xff]
  %v1177 = vld [vmem:[%s6 + $0x18] sm:$0xff]
  %v1178 = vlaneseq
  %v1179 = vshrl.u32 %v1178, 7
  %v1180 = vadd.s32 %v1179, 8
  %v1181 = vadd.s32 %v1179, 16
  %v1182 = vadd.s32 %v1179, 24
  %vm1183 = vcmp.eq.s32.totalorder %v1179, %v1029
  %vm1184 = vcmp.eq.s32.totalorder %v1180, %v1029
  %vm1185 = vcmp.eq.s32.totalorder %v1181, %v1029
  %vm1186 = vcmp.eq.s32.totalorder %v1182, %v1029
  %v1187 = vsel %vm1183, 1, 0
  %v1188 = vsel %vm1184, 1, 0
  %v1189 = vsel %vm1185, 1, 0
  %v1190 = vsel %vm1186, 1, 0
  %v1191 = vcvt.s32.f32 %v1187
  %v1192 = vcvt.s32.f32 %v1188
  %v1193 = vcvt.s32.f32 %v1189
  %v1194 = vcvt.s32.f32 %v1190
  %v1195 = vcvt.s32.f32 %v1179
  %v1196 = vcvt.s32.f32 %v1180
  %v1197 = vcvt.s32.f32 %v1181
  %v1198 = vcvt.s32.f32 %v1182
  %v1199 = vlaneseq
  %v1200 = vshrl.u32 %v1199, 7
  %v1201 = vsub.s32 2, %v1200
  %v1202 = vrot.slane %v1176, %v1201
  %v1203 = vadd.f32 %v1166, %v1202
  %1204 = vst [vmem:[%s7] sm:$0x3] %v1203
  %1205 = vst [vmem:[%s8] sm:$0x3] 0
  %v1206 = vlaneseq
  %v1207 = vshrl.u32 %v1206, 7
  %v1208 = vsub.s32 0, %v1207
  %v1209 = vrot.slane %v1203, %v1208
  %v1210 = vmul.f32 %v1191, %v1209
  %v1211 = vmul.f32 %v1192, %v1209
  %v1212 = vmul.f32 %v1193, %v1209
  %v1213 = vmul.f32 %v1194, %v1209
  %1214 = vadd.xlane.f32.xlu0 %v1210
  %v1215 = vpop.xlane.xlu0 %1214
  %1216 = vadd.xlane.f32.xlu0 %v1211
  %v1217 = vpop.xlane.xlu0 %1216
  %1218 = vadd.xlane.f32.xlu0 %v1212
  %v1219 = vpop.xlane.xlu0 %1218
  %1220 = vadd.xlane.f32.xlu0 %v1213
  %v1221 = vpop.xlane.xlu0 %1220
  %v1222 = vadd.f32 %v1215, %v1174
  %v1223 = vadd.f32 %v1217, %v1175
  %v1224 = vadd.f32 %v1219, %v1176
  %v1225 = vadd.f32 %v1221, %v1177
  %v1226 = vmax.f32 %v1222, %v1223
  %v1227 = vmax.f32 %v1224, %v1225
  %v1228 = vmax.f32 %v1226, %v1227
  %v1229 = vrot.slane %v1228, 4
  %v1230 = vmax.f32 %v1228, %v1229
  %v1231 = vrot.slane %v1230, 2
  %v1232 = vmax.f32 %v1230, %v1231
  %v1233 = vrot.slane %v1232, 1
  %v1234 = vmax.f32 %v1232, %v1233
  %vm1235 = vcmp.eq.f32.partialorder %v1222, %v1234
  %vm1236 = vcmp.eq.f32.partialorder %v1223, %v1234
  %vm1237 = vcmp.eq.f32.partialorder %v1224, %v1234
  %vm1238 = vcmp.eq.f32.partialorder %v1225, %v1234
  %v1239 = vsel %vm1235, %v1195, 1e+09
  %v1240 = vsel %vm1236, %v1196, 1e+09
  %v1241 = vsel %vm1237, %v1197, 1e+09
  %v1242 = vsel %vm1238, %v1198, 1e+09
  %v1243 = vmin.f32 %v1239, %v1240
  %v1244 = vmin.f32 %v1241, %v1242
  %v1245 = vmin.f32 %v1243, %v1244
  %v1246 = vrot.slane %v1245, 4
  %v1247 = vmin.f32 %v1245, %v1246
  %v1248 = vrot.slane %v1247, 2
  %v1249 = vmin.f32 %v1247, %v1248
  %v1250 = vrot.slane %v1249, 1
  %v1251 = vmin.f32 %v1249, %v1250
  %v1252 = vcvt.f32.s32.to.zero.pseudo %v1251
  %v1253 = vadd.f32 %v1234, %v1166
  %v1254 = vlaneseq
  %v1255 = vshrl.u32 %v1254, 7
  %v1256 = vsub.s32 1, %v1255
  %v1257 = vrot.slane %v1203, %v1256
  %v1258 = vmul.f32 %v1191, %v1257
  %v1259 = vmul.f32 %v1192, %v1257
  %v1260 = vmul.f32 %v1193, %v1257
  %v1261 = vmul.f32 %v1194, %v1257
  %1262 = vadd.xlane.f32.xlu0 %v1258
  %v1263 = vpop.xlane.xlu0 %1262
  %1264 = vadd.xlane.f32.xlu0 %v1259
  %v1265 = vpop.xlane.xlu0 %1264
  %1266 = vadd.xlane.f32.xlu0 %v1260
  %v1267 = vpop.xlane.xlu0 %1266
  %1268 = vadd.xlane.f32.xlu0 %v1261
  %v1269 = vpop.xlane.xlu0 %1268
  %v1270 = vadd.f32 %v1263, %v1174
  %v1271 = vadd.f32 %v1265, %v1175
  %v1272 = vadd.f32 %v1267, %v1176
  %v1273 = vadd.f32 %v1269, %v1177
  %v1274 = vmax.f32 %v1270, %v1271
  %v1275 = vmax.f32 %v1272, %v1273
  %v1276 = vmax.f32 %v1274, %v1275
  %v1277 = vrot.slane %v1276, 4
  %v1278 = vmax.f32 %v1276, %v1277
  %v1279 = vrot.slane %v1278, 2
  %v1280 = vmax.f32 %v1278, %v1279
  %v1281 = vrot.slane %v1280, 1
  %v1282 = vmax.f32 %v1280, %v1281
  %vm1283 = vcmp.eq.f32.partialorder %v1270, %v1282
  %vm1284 = vcmp.eq.f32.partialorder %v1271, %v1282
  %vm1285 = vcmp.eq.f32.partialorder %v1272, %v1282
  %vm1286 = vcmp.eq.f32.partialorder %v1273, %v1282
  %v1287 = vsel %vm1283, %v1195, 1e+09
  %v1288 = vsel %vm1284, %v1196, 1e+09
  %v1289 = vsel %vm1285, %v1197, 1e+09
  %v1290 = vsel %vm1286, %v1198, 1e+09
  %v1291 = vmin.f32 %v1287, %v1288
  %v1292 = vmin.f32 %v1289, %v1290
  %v1293 = vmin.f32 %v1291, %v1292
  %v1294 = vrot.slane %v1293, 4
  %v1295 = vmin.f32 %v1293, %v1294
  %v1296 = vrot.slane %v1295, 2
  %v1297 = vmin.f32 %v1295, %v1296
  %v1298 = vrot.slane %v1297, 1
  %v1299 = vmin.f32 %v1297, %v1298
  %v1300 = vcvt.f32.s32.to.zero.pseudo %v1299
  %v1301 = vadd.f32 %v1282, %v1166
  %v1303 = vrot.slane %v1253, 2
  %v1306 = vrot.slane %v1301, 2
  %vm1308 = vcmask 1040384
  %v1309 = vsel %vm1308, %v1303, %v1306
  %1310 = vst [vmem:[%s7 + $0x2] sm:$0x3] %v1309
  %v1311 = vsel %vm1308, %v1252, %v1300
  %1312 = vst [vmem:[%s8 + $0x2] sm:$0x3] %v1311
  %v1313 = vlaneseq
  %v1314 = vshrl.u32 %v1313, 7
  %v1315 = vsub.s32 0, %v1314
  %v1316 = vrot.slane %v1309, %v1315
  %v1317 = vmul.f32 %v1191, %v1316
  %v1318 = vmul.f32 %v1192, %v1316
  %v1319 = vmul.f32 %v1193, %v1316
  %v1320 = vmul.f32 %v1194, %v1316
  %1321 = vadd.xlane.f32.xlu0 %v1317
  %v1322 = vpop.xlane.xlu0 %1321
  %1323 = vadd.xlane.f32.xlu0 %v1318
  %v1324 = vpop.xlane.xlu0 %1323
  %1325 = vadd.xlane.f32.xlu0 %v1319
  %v1326 = vpop.xlane.xlu0 %1325
  %1327 = vadd.xlane.f32.xlu0 %v1320
  %v1328 = vpop.xlane.xlu0 %1327
  %v1329 = vadd.f32 %v1322, %v1174
  %v1330 = vadd.f32 %v1324, %v1175
  %v1331 = vadd.f32 %v1326, %v1176
  %v1332 = vadd.f32 %v1328, %v1177
  %v1333 = vmax.f32 %v1329, %v1330
  %v1334 = vmax.f32 %v1331, %v1332
  %v1335 = vmax.f32 %v1333, %v1334
  %v1336 = vrot.slane %v1335, 4
  %v1337 = vmax.f32 %v1335, %v1336
  %v1338 = vrot.slane %v1337, 2
  %v1339 = vmax.f32 %v1337, %v1338
  %v1340 = vrot.slane %v1339, 1
  %v1341 = vmax.f32 %v1339, %v1340
  %vm1342 = vcmp.eq.f32.partialorder %v1329, %v1341
  %vm1343 = vcmp.eq.f32.partialorder %v1330, %v1341
  %vm1344 = vcmp.eq.f32.partialorder %v1331, %v1341
  %vm1345 = vcmp.eq.f32.partialorder %v1332, %v1341
  %v1346 = vsel %vm1342, %v1195, 1e+09
  %v1347 = vsel %vm1343, %v1196, 1e+09
  %v1348 = vsel %vm1344, %v1197, 1e+09
  %v1349 = vsel %vm1345, %v1198, 1e+09
  %v1350 = vmin.f32 %v1346, %v1347
  %v1351 = vmin.f32 %v1348, %v1349
  %v1352 = vmin.f32 %v1350, %v1351
  %v1353 = vrot.slane %v1352, 4
  %v1354 = vmin.f32 %v1352, %v1353
  %v1355 = vrot.slane %v1354, 2
  %v1356 = vmin.f32 %v1354, %v1355
  %v1357 = vrot.slane %v1356, 1
  %v1358 = vmin.f32 %v1356, %v1357
  %v1359 = vcvt.f32.s32.to.zero.pseudo %v1358
  %v1360 = vadd.f32 %v1341, %v1166
  %v1361 = vlaneseq
  %v1362 = vshrl.u32 %v1361, 7
  %v1363 = vsub.s32 1, %v1362
  %v1364 = vrot.slane %v1309, %v1363
  %v1365 = vmul.f32 %v1191, %v1364
  %v1366 = vmul.f32 %v1192, %v1364
  %v1367 = vmul.f32 %v1193, %v1364
  %v1368 = vmul.f32 %v1194, %v1364
  %1369 = vadd.xlane.f32.xlu0 %v1365
  %v1370 = vpop.xlane.xlu0 %1369
  %1371 = vadd.xlane.f32.xlu0 %v1366
  %v1372 = vpop.xlane.xlu0 %1371
  %1373 = vadd.xlane.f32.xlu0 %v1367
  %v1374 = vpop.xlane.xlu0 %1373
  %1375 = vadd.xlane.f32.xlu0 %v1368
  %v1376 = vpop.xlane.xlu0 %1375
  %v1377 = vadd.f32 %v1370, %v1174
  %v1378 = vadd.f32 %v1372, %v1175
  %v1379 = vadd.f32 %v1374, %v1176
  %v1380 = vadd.f32 %v1376, %v1177
  %v1381 = vmax.f32 %v1377, %v1378
  %v1382 = vmax.f32 %v1379, %v1380
  %v1383 = vmax.f32 %v1381, %v1382
  %v1384 = vrot.slane %v1383, 4
  %v1385 = vmax.f32 %v1383, %v1384
  %v1386 = vrot.slane %v1385, 2
  %v1387 = vmax.f32 %v1385, %v1386
  %v1388 = vrot.slane %v1387, 1
  %v1389 = vmax.f32 %v1387, %v1388
  %vm1390 = vcmp.eq.f32.partialorder %v1377, %v1389
  %vm1391 = vcmp.eq.f32.partialorder %v1378, %v1389
  %vm1392 = vcmp.eq.f32.partialorder %v1379, %v1389
  %vm1393 = vcmp.eq.f32.partialorder %v1380, %v1389
  %v1394 = vsel %vm1390, %v1195, 1e+09
  %v1395 = vsel %vm1391, %v1196, 1e+09
  %v1396 = vsel %vm1392, %v1197, 1e+09
  %v1397 = vsel %vm1393, %v1198, 1e+09
  %v1398 = vmin.f32 %v1394, %v1395
  %v1399 = vmin.f32 %v1396, %v1397
  %v1400 = vmin.f32 %v1398, %v1399
  %v1401 = vrot.slane %v1400, 4
  %v1402 = vmin.f32 %v1400, %v1401
  %v1403 = vrot.slane %v1402, 2
  %v1404 = vmin.f32 %v1402, %v1403
  %v1405 = vrot.slane %v1404, 1
  %v1406 = vmin.f32 %v1404, %v1405
  %v1407 = vcvt.f32.s32.to.zero.pseudo %v1406
  %v1408 = vadd.f32 %v1389, %v1166
  %v1410 = vrot.slane %v1360, 4
  %v1413 = vrot.slane %v1408, 4
  %v1415 = vsel %vm1308, %v1410, %v1413
  %1416 = vst [vmem:[%s7 + $0x4] sm:$0x3] %v1415
  %v1417 = vsel %vm1308, %v1359, %v1407
  %1418 = vst [vmem:[%s8 + $0x4] sm:$0x3] %v1417
  %v1419 = vlaneseq
  %v1420 = vshrl.u32 %v1419, 7
  %v1421 = vsub.s32 0, %v1420
  %v1422 = vrot.slane %v1415, %v1421
  %v1423 = vmul.f32 %v1191, %v1422
  %v1424 = vmul.f32 %v1192, %v1422
  %v1425 = vmul.f32 %v1193, %v1422
  %v1426 = vmul.f32 %v1194, %v1422
  %1427 = vadd.xlane.f32.xlu0 %v1423
  %v1428 = vpop.xlane.xlu0 %1427
  %1429 = vadd.xlane.f32.xlu0 %v1424
  %v1430 = vpop.xlane.xlu0 %1429
  %1431 = vadd.xlane.f32.xlu0 %v1425
  %v1432 = vpop.xlane.xlu0 %1431
  %1433 = vadd.xlane.f32.xlu0 %v1426
  %v1434 = vpop.xlane.xlu0 %1433
  %v1435 = vadd.f32 %v1428, %v1174
  %v1436 = vadd.f32 %v1430, %v1175
  %v1437 = vadd.f32 %v1432, %v1176
  %v1438 = vadd.f32 %v1434, %v1177
  %v1439 = vmax.f32 %v1435, %v1436
  %v1440 = vmax.f32 %v1437, %v1438
  %v1441 = vmax.f32 %v1439, %v1440
  %v1442 = vrot.slane %v1441, 4
  %v1443 = vmax.f32 %v1441, %v1442
  %v1444 = vrot.slane %v1443, 2
  %v1445 = vmax.f32 %v1443, %v1444
  %v1446 = vrot.slane %v1445, 1
  %v1447 = vmax.f32 %v1445, %v1446
  %vm1448 = vcmp.eq.f32.partialorder %v1435, %v1447
  %vm1449 = vcmp.eq.f32.partialorder %v1436, %v1447
  %vm1450 = vcmp.eq.f32.partialorder %v1437, %v1447
  %vm1451 = vcmp.eq.f32.partialorder %v1438, %v1447
  %v1452 = vsel %vm1448, %v1195, 1e+09
  %v1453 = vsel %vm1449, %v1196, 1e+09
  %v1454 = vsel %vm1450, %v1197, 1e+09
  %v1455 = vsel %vm1451, %v1198, 1e+09
  %v1456 = vmin.f32 %v1452, %v1453
  %v1457 = vmin.f32 %v1454, %v1455
  %v1458 = vmin.f32 %v1456, %v1457
  %v1459 = vrot.slane %v1458, 4
  %v1460 = vmin.f32 %v1458, %v1459
  %v1461 = vrot.slane %v1460, 2
  %v1462 = vmin.f32 %v1460, %v1461
  %v1463 = vrot.slane %v1462, 1
  %v1464 = vmin.f32 %v1462, %v1463
  %v1465 = vcvt.f32.s32.to.zero.pseudo %v1464
  %v1466 = vadd.f32 %v1447, %v1166
  %v1467 = vlaneseq
  %v1468 = vshrl.u32 %v1467, 7
  %v1469 = vsub.s32 1, %v1468
  %v1470 = vrot.slane %v1415, %v1469
  %v1471 = vmul.f32 %v1191, %v1470
  %v1472 = vmul.f32 %v1192, %v1470
  %v1473 = vmul.f32 %v1193, %v1470
  %v1474 = vmul.f32 %v1194, %v1470
  %1475 = vadd.xlane.f32.xlu0 %v1471
  %v1476 = vpop.xlane.xlu0 %1475
  %1477 = vadd.xlane.f32.xlu0 %v1472
  %v1478 = vpop.xlane.xlu0 %1477
  %1479 = vadd.xlane.f32.xlu0 %v1473
  %v1480 = vpop.xlane.xlu0 %1479
  %1481 = vadd.xlane.f32.xlu0 %v1474
  %v1482 = vpop.xlane.xlu0 %1481
  %v1483 = vadd.f32 %v1476, %v1174
  %v1484 = vadd.f32 %v1478, %v1175
  %v1485 = vadd.f32 %v1480, %v1176
  %v1486 = vadd.f32 %v1482, %v1177
  %v1487 = vmax.f32 %v1483, %v1484
  %v1488 = vmax.f32 %v1485, %v1486
  %v1489 = vmax.f32 %v1487, %v1488
  %v1490 = vrot.slane %v1489, 4
  %v1491 = vmax.f32 %v1489, %v1490
  %v1492 = vrot.slane %v1491, 2
  %v1493 = vmax.f32 %v1491, %v1492
  %v1494 = vrot.slane %v1493, 1
  %v1495 = vmax.f32 %v1493, %v1494
  %vm1496 = vcmp.eq.f32.partialorder %v1483, %v1495
  %vm1497 = vcmp.eq.f32.partialorder %v1484, %v1495
  %vm1498 = vcmp.eq.f32.partialorder %v1485, %v1495
  %vm1499 = vcmp.eq.f32.partialorder %v1486, %v1495
  %v1500 = vsel %vm1496, %v1195, 1e+09
  %v1501 = vsel %vm1497, %v1196, 1e+09
  %v1502 = vsel %vm1498, %v1197, 1e+09
  %v1503 = vsel %vm1499, %v1198, 1e+09
  %v1504 = vmin.f32 %v1500, %v1501
  %v1505 = vmin.f32 %v1502, %v1503
  %v1506 = vmin.f32 %v1504, %v1505
  %v1507 = vrot.slane %v1506, 4
  %v1508 = vmin.f32 %v1506, %v1507
  %v1509 = vrot.slane %v1508, 2
  %v1510 = vmin.f32 %v1508, %v1509
  %v1511 = vrot.slane %v1510, 1
  %v1512 = vmin.f32 %v1510, %v1511
  %v1513 = vcvt.f32.s32.to.zero.pseudo %v1512
  %v1514 = vadd.f32 %v1495, %v1166
  %v1516 = vrot.slane %v1466, 6
  %v1519 = vrot.slane %v1514, 6
  %v1521 = vsel %vm1308, %v1516, %v1519
  %1522 = vst [vmem:[%s7 + $0x6] sm:$0x3] %v1521
  %v1523 = vsel %vm1308, %v1465, %v1513
  %1524 = vst [vmem:[%s8 + $0x6] sm:$0x3] %v1523
  %v1525 = vlaneseq
  %v1526 = vshrl.u32 %v1525, 7
  %v1527 = vsub.s32 0, %v1526
  %v1528 = vrot.slane %v1521, %v1527
  %v1529 = vmul.f32 %v1191, %v1528
  %v1530 = vmul.f32 %v1192, %v1528
  %v1531 = vmul.f32 %v1193, %v1528
  %v1532 = vmul.f32 %v1194, %v1528
  %1533 = vadd.xlane.f32.xlu0 %v1529
  %v1534 = vpop.xlane.xlu0 %1533
  %1535 = vadd.xlane.f32.xlu0 %v1530
  %v1536 = vpop.xlane.xlu0 %1535
  %1537 = vadd.xlane.f32.xlu0 %v1531
  %v1538 = vpop.xlane.xlu0 %1537
  %1539 = vadd.xlane.f32.xlu0 %v1532
  %v1540 = vpop.xlane.xlu0 %1539
  %v1541 = vadd.f32 %v1534, %v1174
  %v1542 = vadd.f32 %v1536, %v1175
  %v1543 = vadd.f32 %v1538, %v1176
  %v1544 = vadd.f32 %v1540, %v1177
  %v1545 = vmax.f32 %v1541, %v1542
  %v1546 = vmax.f32 %v1543, %v1544
  %v1547 = vmax.f32 %v1545, %v1546
  %v1548 = vrot.slane %v1547, 4
  %v1549 = vmax.f32 %v1547, %v1548
  %v1550 = vrot.slane %v1549, 2
  %v1551 = vmax.f32 %v1549, %v1550
  %v1552 = vrot.slane %v1551, 1
  %v1553 = vmax.f32 %v1551, %v1552
  %vm1554 = vcmp.eq.f32.partialorder %v1541, %v1553
  %vm1555 = vcmp.eq.f32.partialorder %v1542, %v1553
  %vm1556 = vcmp.eq.f32.partialorder %v1543, %v1553
  %vm1557 = vcmp.eq.f32.partialorder %v1544, %v1553
  %v1558 = vsel %vm1554, %v1195, 1e+09
  %v1559 = vsel %vm1555, %v1196, 1e+09
  %v1560 = vsel %vm1556, %v1197, 1e+09
  %v1561 = vsel %vm1557, %v1198, 1e+09
  %v1562 = vmin.f32 %v1558, %v1559
  %v1563 = vmin.f32 %v1560, %v1561
  %v1564 = vmin.f32 %v1562, %v1563
  %v1565 = vrot.slane %v1564, 4
  %v1566 = vmin.f32 %v1564, %v1565
  %v1567 = vrot.slane %v1566, 2
  %v1568 = vmin.f32 %v1566, %v1567
  %v1569 = vrot.slane %v1568, 1
  %v1570 = vmin.f32 %v1568, %v1569
  %v1571 = vcvt.f32.s32.to.zero.pseudo %v1570
  %v1572 = vadd.f32 %v1553, %v1171
  %v1573 = vlaneseq
  %v1574 = vshrl.u32 %v1573, 7
  %v1575 = vsub.s32 1, %v1574
  %v1576 = vrot.slane %v1521, %v1575
  %v1577 = vmul.f32 %v1191, %v1576
  %v1578 = vmul.f32 %v1192, %v1576
  %v1579 = vmul.f32 %v1193, %v1576
  %v1580 = vmul.f32 %v1194, %v1576
  %1581 = vadd.xlane.f32.xlu0 %v1577
  %v1582 = vpop.xlane.xlu0 %1581
  %1583 = vadd.xlane.f32.xlu0 %v1578
  %v1584 = vpop.xlane.xlu0 %1583
  %1585 = vadd.xlane.f32.xlu0 %v1579
  %v1586 = vpop.xlane.xlu0 %1585
  %1587 = vadd.xlane.f32.xlu0 %v1580
  %v1588 = vpop.xlane.xlu0 %1587
  %v1589 = vadd.f32 %v1582, %v1174
  %v1590 = vadd.f32 %v1584, %v1175
  %v1591 = vadd.f32 %v1586, %v1176
  %v1592 = vadd.f32 %v1588, %v1177
  %v1593 = vmax.f32 %v1589, %v1590
  %v1594 = vmax.f32 %v1591, %v1592
  %v1595 = vmax.f32 %v1593, %v1594
  %v1596 = vrot.slane %v1595, 4
  %v1597 = vmax.f32 %v1595, %v1596
  %v1598 = vrot.slane %v1597, 2
  %v1599 = vmax.f32 %v1597, %v1598
  %v1600 = vrot.slane %v1599, 1
  %v1601 = vmax.f32 %v1599, %v1600
  %vm1602 = vcmp.eq.f32.partialorder %v1589, %v1601
  %vm1603 = vcmp.eq.f32.partialorder %v1590, %v1601
  %vm1604 = vcmp.eq.f32.partialorder %v1591, %v1601
  %vm1605 = vcmp.eq.f32.partialorder %v1592, %v1601
  %v1606 = vsel %vm1602, %v1195, 1e+09
  %v1607 = vsel %vm1603, %v1196, 1e+09
  %v1608 = vsel %vm1604, %v1197, 1e+09
  %v1609 = vsel %vm1605, %v1198, 1e+09
  %v1610 = vmin.f32 %v1606, %v1607
  %v1611 = vmin.f32 %v1608, %v1609
  %v1612 = vmin.f32 %v1610, %v1611
  %v1613 = vrot.slane %v1612, 4
  %v1614 = vmin.f32 %v1612, %v1613
  %v1615 = vrot.slane %v1614, 2
  %v1616 = vmin.f32 %v1614, %v1615
  %v1617 = vrot.slane %v1616, 1
  %v1618 = vmin.f32 %v1616, %v1617
  %v1619 = vcvt.f32.s32.to.zero.pseudo %v1618
  %v1620 = vadd.f32 %v1601, %v1171
  %v1621 = vsel %vm1308, %v1572, %v1620
  %1622 = vst [vmem:[%s7 + $0x8] sm:$0x3] %v1621
  %v1623 = vsel %vm1308, %v1571, %v1619
  %1624 = vst [vmem:[%s8 + $0x8] sm:$0x3] %v1623
  %v1625 = vlaneseq
  %v1626 = vshrl.u32 %v1625, 7
  %v1627 = vsub.s32 0, %v1626
  %v1628 = vrot.slane %v1621, %v1627
  %v1629 = vmul.f32 %v1191, %v1628
  %v1630 = vmul.f32 %v1192, %v1628
  %v1631 = vmul.f32 %v1193, %v1628
  %v1632 = vmul.f32 %v1194, %v1628
  %1633 = vadd.xlane.f32.xlu0 %v1629
  %v1634 = vpop.xlane.xlu0 %1633
  %1635 = vadd.xlane.f32.xlu0 %v1630
  %v1636 = vpop.xlane.xlu0 %1635
  %1637 = vadd.xlane.f32.xlu0 %v1631
  %v1638 = vpop.xlane.xlu0 %1637
  %1639 = vadd.xlane.f32.xlu0 %v1632
  %v1640 = vpop.xlane.xlu0 %1639
  %v1641 = vadd.f32 %v1634, %v1174
  %v1642 = vadd.f32 %v1636, %v1175
  %v1643 = vadd.f32 %v1638, %v1176
  %v1644 = vadd.f32 %v1640, %v1177
  %v1645 = vmax.f32 %v1641, %v1642
  %v1646 = vmax.f32 %v1643, %v1644
  %v1647 = vmax.f32 %v1645, %v1646
  %v1648 = vrot.slane %v1647, 4
  %v1649 = vmax.f32 %v1647, %v1648
  %v1650 = vrot.slane %v1649, 2
  %v1651 = vmax.f32 %v1649, %v1650
  %v1652 = vrot.slane %v1651, 1
  %v1653 = vmax.f32 %v1651, %v1652
  %vm1654 = vcmp.eq.f32.partialorder %v1641, %v1653
  %vm1655 = vcmp.eq.f32.partialorder %v1642, %v1653
  %vm1656 = vcmp.eq.f32.partialorder %v1643, %v1653
  %vm1657 = vcmp.eq.f32.partialorder %v1644, %v1653
  %v1658 = vsel %vm1654, %v1195, 1e+09
  %v1659 = vsel %vm1655, %v1196, 1e+09
  %v1660 = vsel %vm1656, %v1197, 1e+09
  %v1661 = vsel %vm1657, %v1198, 1e+09
  %v1662 = vmin.f32 %v1658, %v1659
  %v1663 = vmin.f32 %v1660, %v1661
  %v1664 = vmin.f32 %v1662, %v1663
  %v1665 = vrot.slane %v1664, 4
  %v1666 = vmin.f32 %v1664, %v1665
  %v1667 = vrot.slane %v1666, 2
  %v1668 = vmin.f32 %v1666, %v1667
  %v1669 = vrot.slane %v1668, 1
  %v1670 = vmin.f32 %v1668, %v1669
  %v1671 = vcvt.f32.s32.to.zero.pseudo %v1670
  %v1672 = vadd.f32 %v1653, %v1171
  %v1673 = vlaneseq
  %v1674 = vshrl.u32 %v1673, 7
  %v1675 = vsub.s32 1, %v1674
  %v1676 = vrot.slane %v1621, %v1675
  %v1677 = vmul.f32 %v1191, %v1676
  %v1678 = vmul.f32 %v1192, %v1676
  %v1679 = vmul.f32 %v1193, %v1676
  %v1680 = vmul.f32 %v1194, %v1676
  %1681 = vadd.xlane.f32.xlu0 %v1677
  %v1682 = vpop.xlane.xlu0 %1681
  %1683 = vadd.xlane.f32.xlu0 %v1678
  %v1684 = vpop.xlane.xlu0 %1683
  %1685 = vadd.xlane.f32.xlu0 %v1679
  %v1686 = vpop.xlane.xlu0 %1685
  %1687 = vadd.xlane.f32.xlu0 %v1680
  %v1688 = vpop.xlane.xlu0 %1687
  %v1689 = vadd.f32 %v1682, %v1174
  %v1690 = vadd.f32 %v1684, %v1175
  %v1691 = vadd.f32 %v1686, %v1176
  %v1692 = vadd.f32 %v1688, %v1177
  %v1693 = vmax.f32 %v1689, %v1690
  %v1694 = vmax.f32 %v1691, %v1692
  %v1695 = vmax.f32 %v1693, %v1694
  %v1696 = vrot.slane %v1695, 4
  %v1697 = vmax.f32 %v1695, %v1696
  %v1698 = vrot.slane %v1697, 2
  %v1699 = vmax.f32 %v1697, %v1698
  %v1700 = vrot.slane %v1699, 1
  %v1701 = vmax.f32 %v1699, %v1700
  %vm1702 = vcmp.eq.f32.partialorder %v1689, %v1701
  %vm1703 = vcmp.eq.f32.partialorder %v1690, %v1701
  %vm1704 = vcmp.eq.f32.partialorder %v1691, %v1701
  %vm1705 = vcmp.eq.f32.partialorder %v1692, %v1701
  %v1706 = vsel %vm1702, %v1195, 1e+09
  %v1707 = vsel %vm1703, %v1196, 1e+09
  %v1708 = vsel %vm1704, %v1197, 1e+09
  %v1709 = vsel %vm1705, %v1198, 1e+09
  %v1710 = vmin.f32 %v1706, %v1707
  %v1711 = vmin.f32 %v1708, %v1709
  %v1712 = vmin.f32 %v1710, %v1711
  %v1713 = vrot.slane %v1712, 4
  %v1714 = vmin.f32 %v1712, %v1713
  %v1715 = vrot.slane %v1714, 2
  %v1716 = vmin.f32 %v1714, %v1715
  %v1717 = vrot.slane %v1716, 1
  %v1718 = vmin.f32 %v1716, %v1717
  %v1719 = vcvt.f32.s32.to.zero.pseudo %v1718
  %v1720 = vadd.f32 %v1701, %v1171
  %v1722 = vrot.slane %v1672, 2
  %v1725 = vrot.slane %v1720, 2
  %v1727 = vsel %vm1308, %v1722, %v1725
  %1728 = vst [vmem:[%s7 + $0xa] sm:$0x3] %v1727
  %v1729 = vsel %vm1308, %v1671, %v1719
  %1730 = vst [vmem:[%s8 + $0xa] sm:$0x3] %v1729
  %v1731 = vlaneseq
  %v1732 = vshrl.u32 %v1731, 7
  %v1733 = vsub.s32 0, %v1732
  %v1734 = vrot.slane %v1727, %v1733
  %v1735 = vmul.f32 %v1191, %v1734
  %v1736 = vmul.f32 %v1192, %v1734
  %v1737 = vmul.f32 %v1193, %v1734
  %v1738 = vmul.f32 %v1194, %v1734
  %1739 = vadd.xlane.f32.xlu0 %v1735
  %v1740 = vpop.xlane.xlu0 %1739
  %1741 = vadd.xlane.f32.xlu0 %v1736
  %v1742 = vpop.xlane.xlu0 %1741
  %1743 = vadd.xlane.f32.xlu0 %v1737
  %v1744 = vpop.xlane.xlu0 %1743
  %1745 = vadd.xlane.f32.xlu0 %v1738
  %v1746 = vpop.xlane.xlu0 %1745
  %v1747 = vadd.f32 %v1740, %v1174
  %v1748 = vadd.f32 %v1742, %v1175
  %v1749 = vadd.f32 %v1744, %v1176
  %v1750 = vadd.f32 %v1746, %v1177
  %v1751 = vmax.f32 %v1747, %v1748
  %v1752 = vmax.f32 %v1749, %v1750
  %v1753 = vmax.f32 %v1751, %v1752
  %v1754 = vrot.slane %v1753, 4
  %v1755 = vmax.f32 %v1753, %v1754
  %v1756 = vrot.slane %v1755, 2
  %v1757 = vmax.f32 %v1755, %v1756
  %v1758 = vrot.slane %v1757, 1
  %v1759 = vmax.f32 %v1757, %v1758
  %vm1760 = vcmp.eq.f32.partialorder %v1747, %v1759
  %vm1761 = vcmp.eq.f32.partialorder %v1748, %v1759
  %vm1762 = vcmp.eq.f32.partialorder %v1749, %v1759
  %vm1763 = vcmp.eq.f32.partialorder %v1750, %v1759
  %v1764 = vsel %vm1760, %v1195, 1e+09
  %v1765 = vsel %vm1761, %v1196, 1e+09
  %v1766 = vsel %vm1762, %v1197, 1e+09
  %v1767 = vsel %vm1763, %v1198, 1e+09
  %v1768 = vmin.f32 %v1764, %v1765
  %v1769 = vmin.f32 %v1766, %v1767
  %v1770 = vmin.f32 %v1768, %v1769
  %v1771 = vrot.slane %v1770, 4
  %v1772 = vmin.f32 %v1770, %v1771
  %v1773 = vrot.slane %v1772, 2
  %v1774 = vmin.f32 %v1772, %v1773
  %v1775 = vrot.slane %v1774, 1
  %v1776 = vmin.f32 %v1774, %v1775
  %v1777 = vcvt.f32.s32.to.zero.pseudo %v1776
  %v1778 = vadd.f32 %v1759, %v1171
  %v1779 = vlaneseq
  %v1780 = vshrl.u32 %v1779, 7
  %v1781 = vsub.s32 1, %v1780
  %v1782 = vrot.slane %v1727, %v1781
  %v1783 = vmul.f32 %v1191, %v1782
  %v1784 = vmul.f32 %v1192, %v1782
  %v1785 = vmul.f32 %v1193, %v1782
  %v1786 = vmul.f32 %v1194, %v1782
  %1787 = vadd.xlane.f32.xlu0 %v1783
  %v1788 = vpop.xlane.xlu0 %1787
  %1789 = vadd.xlane.f32.xlu0 %v1784
  %v1790 = vpop.xlane.xlu0 %1789
  %1791 = vadd.xlane.f32.xlu0 %v1785
  %v1792 = vpop.xlane.xlu0 %1791
  %1793 = vadd.xlane.f32.xlu0 %v1786
  %v1794 = vpop.xlane.xlu0 %1793
  %v1795 = vadd.f32 %v1788, %v1174
  %v1796 = vadd.f32 %v1790, %v1175
  %v1797 = vadd.f32 %v1792, %v1176
  %v1798 = vadd.f32 %v1794, %v1177
  %v1799 = vmax.f32 %v1795, %v1796
  %v1800 = vmax.f32 %v1797, %v1798
  %v1801 = vmax.f32 %v1799, %v1800
  %v1802 = vrot.slane %v1801, 4
  %v1803 = vmax.f32 %v1801, %v1802
  %v1804 = vrot.slane %v1803, 2
  %v1805 = vmax.f32 %v1803, %v1804
  %v1806 = vrot.slane %v1805, 1
  %v1807 = vmax.f32 %v1805, %v1806
  %vm1808 = vcmp.eq.f32.partialorder %v1795, %v1807
  %vm1809 = vcmp.eq.f32.partialorder %v1796, %v1807
  %vm1810 = vcmp.eq.f32.partialorder %v1797, %v1807
  %vm1811 = vcmp.eq.f32.partialorder %v1798, %v1807
  %v1812 = vsel %vm1808, %v1195, 1e+09
  %v1813 = vsel %vm1809, %v1196, 1e+09
  %v1814 = vsel %vm1810, %v1197, 1e+09
  %v1815 = vsel %vm1811, %v1198, 1e+09
  %v1816 = vmin.f32 %v1812, %v1813
  %v1817 = vmin.f32 %v1814, %v1815
  %v1818 = vmin.f32 %v1816, %v1817
  %v1819 = vrot.slane %v1818, 4
  %v1820 = vmin.f32 %v1818, %v1819
  %v1821 = vrot.slane %v1820, 2
  %v1822 = vmin.f32 %v1820, %v1821
  %v1823 = vrot.slane %v1822, 1
  %v1824 = vmin.f32 %v1822, %v1823
  %v1825 = vcvt.f32.s32.to.zero.pseudo %v1824
  %v1826 = vadd.f32 %v1807, %v1171
  %v1828 = vrot.slane %v1778, 4
  %v1831 = vrot.slane %v1826, 4
  %v1833 = vsel %vm1308, %v1828, %v1831
  %1834 = vst [vmem:[%s7 + $0xc] sm:$0x3] %v1833
  %v1835 = vsel %vm1308, %v1777, %v1825
  %1836 = vst [vmem:[%s8 + $0xc] sm:$0x3] %v1835
  %v1837 = vlaneseq
  %v1838 = vshrl.u32 %v1837, 7
  %v1839 = vsub.s32 0, %v1838
  %v1840 = vrot.slane %v1833, %v1839
  %v1841 = vmul.f32 %v1191, %v1840
  %v1842 = vmul.f32 %v1192, %v1840
  %v1843 = vmul.f32 %v1193, %v1840
  %v1844 = vmul.f32 %v1194, %v1840
  %1845 = vadd.xlane.f32.xlu0 %v1841
  %v1846 = vpop.xlane.xlu0 %1845
  %1847 = vadd.xlane.f32.xlu0 %v1842
  %v1848 = vpop.xlane.xlu0 %1847
  %1849 = vadd.xlane.f32.xlu0 %v1843
  %v1850 = vpop.xlane.xlu0 %1849
  %1851 = vadd.xlane.f32.xlu0 %v1844
  %v1852 = vpop.xlane.xlu0 %1851
  %v1853 = vadd.f32 %v1846, %v1174
  %v1854 = vadd.f32 %v1848, %v1175
  %v1855 = vadd.f32 %v1850, %v1176
  %v1856 = vadd.f32 %v1852, %v1177
  %v1857 = vmax.f32 %v1853, %v1854
  %v1858 = vmax.f32 %v1855, %v1856
  %v1859 = vmax.f32 %v1857, %v1858
  %v1860 = vrot.slane %v1859, 4
  %v1861 = vmax.f32 %v1859, %v1860
  %v1862 = vrot.slane %v1861, 2
  %v1863 = vmax.f32 %v1861, %v1862
  %v1864 = vrot.slane %v1863, 1
  %v1865 = vmax.f32 %v1863, %v1864
  %vm1866 = vcmp.eq.f32.partialorder %v1853, %v1865
  %vm1867 = vcmp.eq.f32.partialorder %v1854, %v1865
  %vm1868 = vcmp.eq.f32.partialorder %v1855, %v1865
  %vm1869 = vcmp.eq.f32.partialorder %v1856, %v1865
  %v1870 = vsel %vm1866, %v1195, 1e+09
  %v1871 = vsel %vm1867, %v1196, 1e+09
  %v1872 = vsel %vm1868, %v1197, 1e+09
  %v1873 = vsel %vm1869, %v1198, 1e+09
  %v1874 = vmin.f32 %v1870, %v1871
  %v1875 = vmin.f32 %v1872, %v1873
  %v1876 = vmin.f32 %v1874, %v1875
  %v1877 = vrot.slane %v1876, 4
  %v1878 = vmin.f32 %v1876, %v1877
  %v1879 = vrot.slane %v1878, 2
  %v1880 = vmin.f32 %v1878, %v1879
  %v1881 = vrot.slane %v1880, 1
  %v1882 = vmin.f32 %v1880, %v1881
  %v1883 = vcvt.f32.s32.to.zero.pseudo %v1882
  %v1884 = vadd.f32 %v1865, %v1171
  %v1885 = vlaneseq
  %v1886 = vshrl.u32 %v1885, 7
  %v1887 = vsub.s32 1, %v1886
  %v1888 = vrot.slane %v1833, %v1887
  %v1889 = vmul.f32 %v1191, %v1888
  %v1890 = vmul.f32 %v1192, %v1888
  %v1891 = vmul.f32 %v1193, %v1888
  %v1892 = vmul.f32 %v1194, %v1888
  %1893 = vadd.xlane.f32.xlu0 %v1889
  %v1894 = vpop.xlane.xlu0 %1893
  %1895 = vadd.xlane.f32.xlu0 %v1890
  %v1896 = vpop.xlane.xlu0 %1895
  %1897 = vadd.xlane.f32.xlu0 %v1891
  %v1898 = vpop.xlane.xlu0 %1897
  %1899 = vadd.xlane.f32.xlu0 %v1892
  %v1900 = vpop.xlane.xlu0 %1899
  %v1901 = vadd.f32 %v1894, %v1174
  %v1902 = vadd.f32 %v1896, %v1175
  %v1903 = vadd.f32 %v1898, %v1176
  %v1904 = vadd.f32 %v1900, %v1177
  %v1905 = vmax.f32 %v1901, %v1902
  %v1906 = vmax.f32 %v1903, %v1904
  %v1907 = vmax.f32 %v1905, %v1906
  %v1908 = vrot.slane %v1907, 4
  %v1909 = vmax.f32 %v1907, %v1908
  %v1910 = vrot.slane %v1909, 2
  %v1911 = vmax.f32 %v1909, %v1910
  %v1912 = vrot.slane %v1911, 1
  %v1913 = vmax.f32 %v1911, %v1912
  %vm1914 = vcmp.eq.f32.partialorder %v1901, %v1913
  %vm1915 = vcmp.eq.f32.partialorder %v1902, %v1913
  %vm1916 = vcmp.eq.f32.partialorder %v1903, %v1913
  %vm1917 = vcmp.eq.f32.partialorder %v1904, %v1913
  %v1918 = vsel %vm1914, %v1195, 1e+09
  %v1919 = vsel %vm1915, %v1196, 1e+09
  %v1920 = vsel %vm1916, %v1197, 1e+09
  %v1921 = vsel %vm1917, %v1198, 1e+09
  %v1922 = vmin.f32 %v1918, %v1919
  %v1923 = vmin.f32 %v1920, %v1921
  %v1924 = vmin.f32 %v1922, %v1923
  %v1925 = vrot.slane %v1924, 4
  %v1926 = vmin.f32 %v1924, %v1925
  %v1927 = vrot.slane %v1926, 2
  %v1928 = vmin.f32 %v1926, %v1927
  %v1929 = vrot.slane %v1928, 1
  %v1930 = vmin.f32 %v1928, %v1929
  %v1931 = vcvt.f32.s32.to.zero.pseudo %v1930
  %v1932 = vadd.f32 %v1913, %v1171
  %v1934 = vrot.slane %v1884, 6
  %v1937 = vrot.slane %v1932, 6
  %v1939 = vsel %vm1308, %v1934, %v1937
  %1940 = vst [vmem:[%s7 + $0xe] sm:$0x3] %v1939
  %v1941 = vsel %vm1308, %v1883, %v1931
  %1942 = vst [vmem:[%s8 + $0xe] sm:$0x3] %v1941
  // Predicated region
  $region30: #{gazlstm_forward.3} parent=0 // pred_check
    _
  $region31: #{gazlstm_forward.3} parent=0 // pred_check_branch
    %1944 = sbr.rel (0) target = $region33
  $region32: #{gazlstm_forward.3} parent=0 // pred_region
    _
  $region33: #{gazlstm_forward.3} parent=0 // pred_fallthru
    _
  // Predicated region
  $region34: #{gazlstm_forward.3} parent=0 // pred_check
    _
  $region35: #{gazlstm_forward.3} parent=0 // pred_check_branch
    %1946 = sbr.rel (0) target = $region37
  $region36: #{gazlstm_forward.3} parent=0 // pred_region
    _
  $region37: #{gazlstm_forward.3} parent=0 // pred_fallthru
    _
  // Predicated region
  $region38: #{gazlstm_forward.3} parent=0 // pred_check
    _
  $region39: #{gazlstm_forward.3} parent=0 // pred_check_branch
    %1948 = sbr.rel (0) target = $region41
  $region40: #{gazlstm_forward.3} parent=0 // pred_region
    _
  $region41: #{gazlstm_forward.3} parent=0 // pred_fallthru
    _
  // Predicated region
  $region42: #{gazlstm_forward.3} parent=0 // pred_check
    _
  $region43: #{gazlstm_forward.3} parent=0 // pred_check_branch
    %1950 = sbr.rel (0) target = $region45
  $region44: #{gazlstm_forward.3} parent=0 // pred_region
    _
  $region45: #{gazlstm_forward.3} parent=0 // pred_fallthru
    _

</llo_original>
